<compile_context>
chip_gen: v7x
topology: tpu7x:2x2x1
jax: 0.10.0
libtpu: 0.0.40
codegen_flags: <defaults>
</compile_context>

<pallas_src>
import functools

import jax
import jax.numpy as jnp
from jax import lax
from jax.experimental import pallas as pl
from jax.experimental.pallas import tpu as pltpu


# --------------------------------------------------------------------------- #
# Shared math: the complete first-order inner loop (train SGD steps + test
# meta-gradient).  Written once; used verbatim inside the Pallas kernel body
# and as the mirrored pure-XLA reference.
# --------------------------------------------------------------------------- #
def _inner_loop_math(tr_x, tr_y, te_x, te_y, w1, b1, w2, b2, *,
                     n_logits_true, num_updates, step_size, meta_batch_size):
    bf16 = jnp.bfloat16
    f32 = jnp.float32
    batch = tr_x.shape[0]
    d_out_scale = 2.0 / float(batch * n_logits_true)   # d(mean MSE)/d(out)
    meta_scale = 1.0 / float(meta_batch_size)

    def fwd_bwd(x_b, xT_b, y, w1, b1, w2, b2):
        w1_b = w1.astype(bf16)
        w2_b = w2.astype(bf16)
        # ---- forward: Linear -> ReLU -> Linear (MXU) + fused f32 epilogues --
        h_pre = jnp.dot(x_b, w1_b, preferred_element_type=f32) + b1
        h = jnp.maximum(h_pre, 0.0)
        out = jnp.dot(h.astype(bf16), w2_b, preferred_element_type=f32) + b2
        # ---- hand-written backward of mean((out - y)**2) --------------------
        d_out = (out - y) * d_out_scale
        d_out_b = d_out.astype(bf16)
        # dw2 = h^T @ d_out   (transpose on f32 values, then bf16 MXU dot)
        d_w2 = jnp.dot(h.T.astype(bf16), d_out_b, preferred_element_type=f32)
        d_b2 = jnp.sum(d_out, axis=0, keepdims=True)
        # dh = d_out @ w2^T   (transposed contraction via dimension_numbers,
        #                      no transpose materialized)
        d_h = lax.dot_general(d_out_b, w2_b, (((1,), (1,)), ((), ())),
                              preferred_element_type=f32)
        d_h_pre = jnp.where(h_pre > 0.0, d_h, 0.0)
        # dw1 = x^T @ d_h_pre
        d_w1 = jnp.dot(xT_b, d_h_pre.astype(bf16), preferred_element_type=f32)
        d_b1 = jnp.sum(d_h_pre, axis=0, keepdims=True)
        return d_w1, d_b1, d_w2, d_b2

    # Loop-invariant operand prep hoisted out of the update loop.
    tr_x_b, tr_xT_b = tr_x.astype(bf16), tr_x.T.astype(bf16)
    te_x_b, te_xT_b = te_x.astype(bf16), te_x.T.astype(bf16)

    # Inner SGD on the train task.  num_updates is a small static constant, so
    # this unrolls at trace time; the fast weights never leave VMEM / vregs.
    fw1, fb1, fw2, fb2 = w1, b1, w2, b2
    for _ in range(num_updates):
        d_w1, d_b1, d_w2, d_b2 = fwd_bwd(tr_x_b, tr_xT_b, tr_y,
                                         fw1, fb1, fw2, fb2)
        fw1 = fw1 - step_size * d_w1
        fb1 = fb1 - step_size * d_b1
        fw2 = fw2 - step_size * d_w2
        fb2 = fb2 - step_size * d_b2

    # First-order meta-gradient = d(test_loss / meta_batch_size) / d(fast w).
    d_w1, d_b1, d_w2, d_b2 = fwd_bwd(te_x_b, te_xT_b, te_y,
                                     fw1, fb1, fw2, fb2)
    return (d_w1 * meta_scale, d_b1 * meta_scale,
            d_w2 * meta_scale, d_b2 * meta_scale)


# --------------------------------------------------------------------------- #
# Pallas kernel + wrapper
# --------------------------------------------------------------------------- #
def _make_kernel(cfg):
    def kernel(tr_x_ref, tr_y_ref, te_x_ref, te_y_ref,
               w1_ref, b1_ref, w2_ref, b2_ref,
               gw1_ref, gb1_ref, gw2_ref, gb2_ref):
        gw1, gb1, gw2, gb2 = _inner_loop_math(
            tr_x_ref[...], tr_y_ref[...], te_x_ref[...], te_y_ref[...],
            w1_ref[...], b1_ref[...], w2_ref[...], b2_ref[...], **cfg)
        gw1_ref[...] = gw1
        gb1_ref[...] = gb1
        gw2_ref[...] = gw2
        gb2_ref[...] = gb2
    return kernel


def inner_loop_meta_grads(params, tr_images, te_images, tr_logits, te_logits,
                          *, num_updates, step_size, meta_batch_size,
                          use_pallas=True, logits_pad=128):
    """InnerLoop.forward: returns {name: meta_grad}, like the PyTorch module."""
    batch = tr_images.shape[0]
    feat = int(tr_images.size) // batch
    hidden = params["w1"].shape[1]
    n_logits = params["w2"].shape[1]
    n_pad = max(logits_pad, n_logits)      # lane-dense logits dimension

    def pad_last(a):
        return jnp.pad(a, ((0, 0), (0, n_pad - a.shape[-1])))

    # NCHW -> (N, C*H*W), row-major, same as torch .view(N, -1).
    tr_x = tr_images.reshape(batch, feat).astype(jnp.float32)
    te_x = te_images.reshape(batch, feat).astype(jnp.float32)
    # Zero-padded columns of y / w2 / b2 contribute nothing to loss or grads
    # (the MSE denominator uses the true n_logits inside the kernel).
    tr_y = pad_last(tr_logits.astype(jnp.float32))
    te_y = pad_last(te_logits.astype(jnp.float32))
    w1 = params["w1"].astype(jnp.float32)
    b1 = params["b1"].astype(jnp.float32).reshape(1, hidden)
    w2 = pad_last(params["w2"].astype(jnp.float32))
    b2 = pad_last(params["b2"].astype(jnp.float32).reshape(1, n_logits))

    cfg = dict(n_logits_true=n_logits, num_updates=num_updates,
               step_size=step_size, meta_batch_size=meta_batch_size)
    args = (tr_x, tr_y, te_x, te_y, w1, b1, w2, b2)

    if use_pallas:
        vmem = pl.BlockSpec(memory_space=pltpu.MemorySpace.VMEM)
        gw1, gb1, gw2, gb2 = pl.pallas_call(
            _make_kernel(cfg),
            out_shape=(
                jax.ShapeDtypeStruct((feat, hidden), jnp.float32),
                jax.ShapeDtypeStruct((1, hidden), jnp.float32),
                jax.ShapeDtypeStruct((hidden, n_pad), jnp.float32),
                jax.ShapeDtypeStruct((1, n_pad), jnp.float32),
            ),
            in_specs=[vmem] * len(args),
            out_specs=(vmem, vmem, vmem, vmem),
        )(*args)
    else:
        gw1, gb1, gw2, gb2 = _inner_loop_math(*args, **cfg)

    return {"w1": gw1, "b1": gb1[0],
            "w2": gw2[:, :n_logits], "b2": gb2[0, :n_logits]}


# --------------------------------------------------------------------------- #
# Independent jax.grad reference (validates the hand-written backward).
# --------------------------------------------------------------------------- #
def autodiff_reference(params, tr_images, te_images, tr_logits, te_logits,
                       *, num_updates, step_size, meta_batch_size):
    def matmul(a, b):
        return jnp.dot(a.astype(jnp.bfloat16), b.astype(jnp.bfloat16),
                       preferred_element_type=jnp.float32)

    def loss_fn(w, x, y):
        xf = x.reshape(x.shape[0], -1)
        h = jnp.maximum(matmul(xf, w["w1"]) + w["b1"][None, :], 0.0)
        out = matmul(h, w["w2"]) + w["b2"][None, :]
        return jnp.mean((out - y) ** 2)

    # create_graph=False semantics: inner grads are detached, so the meta-grad
    # is exactly the test-loss gradient at the final fast weights.
    fast = dict(params)
    for _ in range(num_updates):
        g = jax.grad(loss_fn)(fast, tr_images, tr_logits)
        fast = {k: fast[k] - step_size * g[k] for k in fast}
    return jax.grad(
        lambda w: loss_fn(w, te_images, te_logits) / meta_batch_size)(fast)


# --------------------------------------------------------------------------- #
if __name__ == "__main__":
    key = jax.random.PRNGKey(0)
    k_w1, k_w2, k_trx, k_tex, k_try, k_tey = jax.random.split(key, 6)

    B, C, H, W = 8, 4, 8, 8
    FEAT = C * H * W          # 256
    HID = 128
    NLOG = 16

    NUM_UPDATES = 3
    STEP_SIZE = 0.01
    META_BATCH_SIZE = 4.0

    params = {
        "w1": 0.1 * jax.random.normal(k_w1, (FEAT, HID), jnp.float32),
        "b1": jnp.zeros((HID,), jnp.float32),
        "w2": 0.1 * jax.random.normal(k_w2, (HID, NLOG), jnp.float32),
        "b2": jnp.zeros((NLOG,), jnp.float32),
    }
    task_meta_train_images = jax.random.normal(k_trx, (B, C, H, W), jnp.float32)
    task_meta_test_images = jax.random.normal(k_tex, (B, C, H, W), jnp.float32)
    task_meta_train_gt_logits = jax.random.normal(k_try, (B, NLOG), jnp.float32)
    task_meta_test_gt_logits = jax.random.normal(k_tey, (B, NLOG), jnp.float32)

    run_pallas = jax.jit(functools.partial(
        inner_loop_meta_grads, num_updates=NUM_UPDATES, step_size=STEP_SIZE,
        meta_batch_size=META_BATCH_SIZE, use_pallas=True))
    run_xla = jax.jit(functools.partial(
        inner_loop_meta_grads, num_updates=NUM_UPDATES, step_size=STEP_SIZE,
        meta_batch_size=META_BATCH_SIZE, use_pallas=False))
    run_autodiff = jax.jit(functools.partial(
        autodiff_reference, num_updates=NUM_UPDATES, step_size=STEP_SIZE,
        meta_batch_size=META_BATCH_SIZE))

    inputs = (params, task_meta_train_images, task_meta_test_images,
              task_meta_train_gt_logits, task_meta_test_gt_logits)

    meta_grads = jax.block_until_ready(run_pallas(*inputs))
    xla_grads = jax.block_until_ready(run_xla(*inputs))
    ad_grads = jax.block_until_ready(run_autodiff(*inputs))

    for name in params:
        assert meta_grads[name].shape == params[name].shape, name
        # Kernel vs identical-math XLA reference (same bf16/f32 regime).
        assert jnp.allclose(meta_grads[name], xla_grads[name],
                            rtol=2e-2, atol=1e-3), f"kernel mismatch: {name}"
        # Kernel vs independent jax.grad reference (validates the hand-written
        # backward / first-order MAML semantics); looser due to autodiff's own
        # bf16 cotangent rounding.
        assert jnp.allclose(meta_grads[name], ad_grads[name],
                            rtol=5e-2, atol=1e-2), f"autodiff mismatch: {name}"

    # TODO(synk): `.cuda()` device transfers and copy.deepcopy/copy_weights of
    # an arbitrary nn.Module have no kernel equivalent; a fixed deterministic
    # 2-layer MLP stands in for `network`.
    print("KERNEL_OK")
</pallas_src>

<mosaic_0001>
module attributes {stable_mosaic.version = 11 : i64} {
  func.func @kernel(%arg0: memref<8x256xf32, #tpu.memory_space<vmem>>, %arg1: memref<8x128xf32, #tpu.memory_space<vmem>>, %arg2: memref<8x256xf32, #tpu.memory_space<vmem>>, %arg3: memref<8x128xf32, #tpu.memory_space<vmem>>, %arg4: memref<256x128xf32, #tpu.memory_space<vmem>>, %arg5: memref<1x128xf32, #tpu.memory_space<vmem>>, %arg6: memref<128x128xf32, #tpu.memory_space<vmem>>, %arg7: memref<1x128xf32, #tpu.memory_space<vmem>>, %arg8: memref<256x128xf32, #tpu.memory_space<vmem>>, %arg9: memref<1x128xf32, #tpu.memory_space<vmem>>, %arg10: memref<128x128xf32, #tpu.memory_space<vmem>>, %arg11: memref<1x128xf32, #tpu.memory_space<vmem>>) attributes {dimension_semantics = [], scalar_prefetch = 0 : i64, scratch_operands = 0 : i64, tpu.core_type = #tpu.core_type<tc>} {
    %c0 = arith.constant 0 : index
    %c0_0 = arith.constant 0 : index
    %0 = vector.load %arg0[%c0, %c0_0] : memref<8x256xf32, #tpu.memory_space<vmem>>, vector<8x256xf32>
    %c0_1 = arith.constant 0 : index
    %c0_2 = arith.constant 0 : index
    %1 = vector.load %arg1[%c0_1, %c0_2] : memref<8x128xf32, #tpu.memory_space<vmem>>, vector<8x128xf32>
    %c0_3 = arith.constant 0 : index
    %c0_4 = arith.constant 0 : index
    %2 = vector.load %arg2[%c0_3, %c0_4] : memref<8x256xf32, #tpu.memory_space<vmem>>, vector<8x256xf32>
    %c0_5 = arith.constant 0 : index
    %c0_6 = arith.constant 0 : index
    %3 = vector.load %arg3[%c0_5, %c0_6] : memref<8x128xf32, #tpu.memory_space<vmem>>, vector<8x128xf32>
    %c0_7 = arith.constant 0 : index
    %c0_8 = arith.constant 0 : index
    %4 = vector.load %arg4[%c0_7, %c0_8] : memref<256x128xf32, #tpu.memory_space<vmem>>, vector<256x128xf32>
    %c0_9 = arith.constant 0 : index
    %c0_10 = arith.constant 0 : index
    %5 = vector.load %arg5[%c0_9, %c0_10] : memref<1x128xf32, #tpu.memory_space<vmem>>, vector<1x128xf32>
    %c0_11 = arith.constant 0 : index
    %c0_12 = arith.constant 0 : index
    %6 = vector.load %arg6[%c0_11, %c0_12] : memref<128x128xf32, #tpu.memory_space<vmem>>, vector<128x128xf32>
    %c0_13 = arith.constant 0 : index
    %c0_14 = arith.constant 0 : index
    %7 = vector.load %arg7[%c0_13, %c0_14] : memref<1x128xf32, #tpu.memory_space<vmem>>, vector<1x128xf32>
    %8 = arith.truncf %0 : vector<8x256xf32> to vector<8x256xbf16>
    %9 = tpu.transpose %0, [1, 0] : vector<8x256xf32> -> vector<256x8xf32>
    %10 = arith.truncf %9 : vector<256x8xf32> to vector<256x8xbf16>
    %11 = arith.truncf %2 : vector<8x256xf32> to vector<8x256xbf16>
    %12 = tpu.transpose %2, [1, 0] : vector<8x256xf32> -> vector<256x8xf32>
    %13 = arith.truncf %12 : vector<256x8xf32> to vector<256x8xbf16>
    %14 = arith.truncf %4 : vector<256x128xf32> to vector<256x128xbf16>
    %15 = arith.truncf %6 : vector<128x128xf32> to vector<128x128xbf16>
    %cst = arith.constant dense<0.000000e+00> : vector<8x128xf32>
    %16 = tpu.matmul %8, %14, %cst {dimension_numbers = #tpu.dot_dimension_numbers<[1], [0], [0], [1], [0, 0, 1, 1], [], []>} : vector<8x256xbf16>, vector<256x128xbf16>, vector<8x128xf32> -> vector<8x128xf32>
    %17 = vector.broadcast %5 : vector<1x128xf32> to vector<8x128xf32>
    %18 = arith.addf %16, %17 : vector<8x128xf32>
    %cst_15 = arith.constant 0.000000e+00 : f32
    %19 = vector.broadcast %cst_15 : f32 to vector<8x128xf32>
    %20 = arith.maximumf %18, %19 : vector<8x128xf32>
    %21 = arith.truncf %20 : vector<8x128xf32> to vector<8x128xbf16>
    %cst_16 = arith.constant dense<0.000000e+00> : vector<8x128xf32>
    %22 = tpu.matmul %21, %15, %cst_16 {dimension_numbers = #tpu.dot_dimension_numbers<[1], [0], [0], [1], [0, 0, 1, 1], [], []>} : vector<8x128xbf16>, vector<128x128xbf16>, vector<8x128xf32> -> vector<8x128xf32>
    %23 = vector.broadcast %7 : vector<1x128xf32> to vector<8x128xf32>
    %24 = arith.addf %22, %23 : vector<8x128xf32>
    %25 = arith.subf %24, %1 : vector<8x128xf32>
    %cst_17 = arith.constant 1.562500e-02 : f32
    %26 = vector.broadcast %cst_17 : f32 to vector<8x128xf32>
    %27 = arith.mulf %25, %26 : vector<8x128xf32>
    %28 = arith.truncf %27 : vector<8x128xf32> to vector<8x128xbf16>
    %29 = tpu.transpose %20, [1, 0] : vector<8x128xf32> -> vector<128x8xf32>
    %30 = arith.truncf %29 : vector<128x8xf32> to vector<128x8xbf16>
    %cst_18 = arith.constant dense<0.000000e+00> : vector<128x128xf32>
    %31 = tpu.matmul %30, %28, %cst_18 {dimension_numbers = #tpu.dot_dimension_numbers<[1], [0], [0], [1], [0, 0, 1, 1], [], []>} : vector<128x8xbf16>, vector<8x128xbf16>, vector<128x128xf32> -> vector<128x128xf32>
    %cst_19 = arith.constant dense<0.000000e+00> : vector<128xf32>
    %32 = vector.multi_reduction <add>, %27, %cst_19 [0] : vector<8x128xf32> to vector<128xf32>
    %33 = vector.shape_cast %32 : vector<128xf32> to vector<1x128xf32>
    %cst_20 = arith.constant dense<0.000000e+00> : vector<8x128xf32>
    %34 = tpu.matmul %28, %15, %cst_20 {dimension_numbers = #tpu.dot_dimension_numbers<[1], [1], [0], [0], [0, 0, 1, 0], [], []>} : vector<8x128xbf16>, vector<128x128xbf16>, vector<8x128xf32> -> vector<8x128xf32>
    %cst_21 = arith.constant 0.000000e+00 : f32
    %35 = vector.broadcast %cst_21 : f32 to vector<8x128xf32>
    %36 = arith.cmpf ogt, %18, %35 : vector<8x128xf32>
    %cst_22 = arith.constant 0.000000e+00 : f32
    %37 = vector.broadcast %cst_22 : f32 to vector<8x128xf32>
    %38 = arith.select %36, %34, %37 : vector<8x128xi1>, vector<8x128xf32>
    %39 = arith.truncf %38 : vector<8x128xf32> to vector<8x128xbf16>
    %cst_23 = arith.constant dense<0.000000e+00> : vector<256x128xf32>
    %40 = tpu.matmul %10, %39, %cst_23 {dimension_numbers = #tpu.dot_dimension_numbers<[1], [0], [0], [1], [0, 0, 1, 1], [], []>} : vector<256x8xbf16>, vector<8x128xbf16>, vector<256x128xf32> -> vector<256x128xf32>
    %cst_24 = arith.constant dense<0.000000e+00> : vector<128xf32>
    %41 = vector.multi_reduction <add>, %38, %cst_24 [0] : vector<8x128xf32> to vector<128xf32>
    %42 = vector.shape_cast %41 : vector<128xf32> to vector<1x128xf32>
    %cst_25 = arith.constant 0.00999999977 : f32
    %43 = vector.broadcast %cst_25 : f32 to vector<256x128xf32>
    %44 = arith.mulf %43, %40 : vector<256x128xf32>
    %45 = arith.subf %4, %44 : vector<256x128xf32>
    %cst_26 = arith.constant 0.00999999977 : f32
    %46 = vector.broadcast %cst_26 : f32 to vector<1x128xf32>
    %47 = arith.mulf %46, %42 : vector<1x128xf32>
    %48 = arith.subf %5, %47 : vector<1x128xf32>
    %cst_27 = arith.constant 0.00999999977 : f32
    %49 = vector.broadcast %cst_27 : f32 to vector<128x128xf32>
    %50 = arith.mulf %49, %31 : vector<128x128xf32>
    %51 = arith.subf %6, %50 : vector<128x128xf32>
    %cst_28 = arith.constant 0.00999999977 : f32
    %52 = vector.broadcast %cst_28 : f32 to vector<1x128xf32>
    %53 = arith.mulf %52, %33 : vector<1x128xf32>
    %54 = arith.subf %7, %53 : vector<1x128xf32>
    %55 = arith.truncf %45 : vector<256x128xf32> to vector<256x128xbf16>
    %56 = arith.truncf %51 : vector<128x128xf32> to vector<128x128xbf16>
    %cst_29 = arith.constant dense<0.000000e+00> : vector<8x128xf32>
    %57 = tpu.matmul %8, %55, %cst_29 {dimension_numbers = #tpu.dot_dimension_numbers<[1], [0], [0], [1], [0, 0, 1, 1], [], []>} : vector<8x256xbf16>, vector<256x128xbf16>, vector<8x128xf32> -> vector<8x128xf32>
    %58 = vector.broadcast %48 : vector<1x128xf32> to vector<8x128xf32>
    %59 = arith.addf %57, %58 : vector<8x128xf32>
    %cst_30 = arith.constant 0.000000e+00 : f32
    %60 = vector.broadcast %cst_30 : f32 to vector<8x128xf32>
    %61 = arith.maximumf %59, %60 : vector<8x128xf32>
    %62 = arith.truncf %61 : vector<8x128xf32> to vector<8x128xbf16>
    %cst_31 = arith.constant dense<0.000000e+00> : vector<8x128xf32>
    %63 = tpu.matmul %62, %56, %cst_31 {dimension_numbers = #tpu.dot_dimension_numbers<[1], [0], [0], [1], [0, 0, 1, 1], [], []>} : vector<8x128xbf16>, vector<128x128xbf16>, vector<8x128xf32> -> vector<8x128xf32>
    %64 = vector.broadcast %54 : vector<1x128xf32> to vector<8x128xf32>
    %65 = arith.addf %63, %64 : vector<8x128xf32>
    %66 = arith.subf %65, %1 : vector<8x128xf32>
    %cst_32 = arith.constant 1.562500e-02 : f32
    %67 = vector.broadcast %cst_32 : f32 to vector<8x128xf32>
    %68 = arith.mulf %66, %67 : vector<8x128xf32>
    %69 = arith.truncf %68 : vector<8x128xf32> to vector<8x128xbf16>
    %70 = tpu.transpose %61, [1, 0] : vector<8x128xf32> -> vector<128x8xf32>
    %71 = arith.truncf %70 : vector<128x8xf32> to vector<128x8xbf16>
    %cst_33 = arith.constant dense<0.000000e+00> : vector<128x128xf32>
    %72 = tpu.matmul %71, %69, %cst_33 {dimension_numbers = #tpu.dot_dimension_numbers<[1], [0], [0], [1], [0, 0, 1, 1], [], []>} : vector<128x8xbf16>, vector<8x128xbf16>, vector<128x128xf32> -> vector<128x128xf32>
    %cst_34 = arith.constant dense<0.000000e+00> : vector<128xf32>
    %73 = vector.multi_reduction <add>, %68, %cst_34 [0] : vector<8x128xf32> to vector<128xf32>
    %74 = vector.shape_cast %73 : vector<128xf32> to vector<1x128xf32>
    %cst_35 = arith.constant dense<0.000000e+00> : vector<8x128xf32>
    %75 = tpu.matmul %69, %56, %cst_35 {dimension_numbers = #tpu.dot_dimension_numbers<[1], [1], [0], [0], [0, 0, 1, 0], [], []>} : vector<8x128xbf16>, vector<128x128xbf16>, vector<8x128xf32> -> vector<8x128xf32>
    %cst_36 = arith.constant 0.000000e+00 : f32
    %76 = vector.broadcast %cst_36 : f32 to vector<8x128xf32>
    %77 = arith.cmpf ogt, %59, %76 : vector<8x128xf32>
    %cst_37 = arith.constant 0.000000e+00 : f32
    %78 = vector.broadcast %cst_37 : f32 to vector<8x128xf32>
    %79 = arith.select %77, %75, %78 : vector<8x128xi1>, vector<8x128xf32>
    %80 = arith.truncf %79 : vector<8x128xf32> to vector<8x128xbf16>
    %cst_38 = arith.constant dense<0.000000e+00> : vector<256x128xf32>
    %81 = tpu.matmul %10, %80, %cst_38 {dimension_numbers = #tpu.dot_dimension_numbers<[1], [0], [0], [1], [0, 0, 1, 1], [], []>} : vector<256x8xbf16>, vector<8x128xbf16>, vector<256x128xf32> -> vector<256x128xf32>
    %cst_39 = arith.constant dense<0.000000e+00> : vector<128xf32>
    %82 = vector.multi_reduction <add>, %79, %cst_39 [0] : vector<8x128xf32> to vector<128xf32>
    %83 = vector.shape_cast %82 : vector<128xf32> to vector<1x128xf32>
    %cst_40 = arith.constant 0.00999999977 : f32
    %84 = vector.broadcast %cst_40 : f32 to vector<256x128xf32>
    %85 = arith.mulf %84, %81 : vector<256x128xf32>
    %86 = arith.subf %45, %85 : vector<256x128xf32>
    %cst_41 = arith.constant 0.00999999977 : f32
    %87 = vector.broadcast %cst_41 : f32 to vector<1x128xf32>
    %88 = arith.mulf %87, %83 : vector<1x128xf32>
    %89 = arith.subf %48, %88 : vector<1x128xf32>
    %cst_42 = arith.constant 0.00999999977 : f32
    %90 = vector.broadcast %cst_42 : f32 to vector<128x128xf32>
    %91 = arith.mulf %90, %72 : vector<128x128xf32>
    %92 = arith.subf %51, %91 : vector<128x128xf32>
    %cst_43 = arith.constant 0.00999999977 : f32
    %93 = vector.broadcast %cst_43 : f32 to vector<1x128xf32>
    %94 = arith.mulf %93, %74 : vector<1x128xf32>
    %95 = arith.subf %54, %94 : vector<1x128xf32>
    %96 = arith.truncf %86 : vector<256x128xf32> to vector<256x128xbf16>
    %97 = arith.truncf %92 : vector<128x128xf32> to vector<128x128xbf16>
    %cst_44 = arith.constant dense<0.000000e+00> : vector<8x128xf32>
    %98 = tpu.matmul %8, %96, %cst_44 {dimension_numbers = #tpu.dot_dimension_numbers<[1], [0], [0], [1], [0, 0, 1, 1], [], []>} : vector<8x256xbf16>, vector<256x128xbf16>, vector<8x128xf32> -> vector<8x128xf32>
    %99 = vector.broadcast %89 : vector<1x128xf32> to vector<8x128xf32>
    %100 = arith.addf %98, %99 : vector<8x128xf32>
    %cst_45 = arith.constant 0.000000e+00 : f32
    %101 = vector.broadcast %cst_45 : f32 to vector<8x128xf32>
    %102 = arith.maximumf %100, %101 : vector<8x128xf32>
    %103 = arith.truncf %102 : vector<8x128xf32> to vector<8x128xbf16>
    %cst_46 = arith.constant dense<0.000000e+00> : vector<8x128xf32>
    %104 = tpu.matmul %103, %97, %cst_46 {dimension_numbers = #tpu.dot_dimension_numbers<[1], [0], [0], [1], [0, 0, 1, 1], [], []>} : vector<8x128xbf16>, vector<128x128xbf16>, vector<8x128xf32> -> vector<8x128xf32>
    %105 = vector.broadcast %95 : vector<1x128xf32> to vector<8x128xf32>
    %106 = arith.addf %104, %105 : vector<8x128xf32>
    %107 = arith.subf %106, %1 : vector<8x128xf32>
    %cst_47 = arith.constant 1.562500e-02 : f32
    %108 = vector.broadcast %cst_47 : f32 to vector<8x128xf32>
    %109 = arith.mulf %107, %108 : vector<8x128xf32>
    %110 = arith.truncf %109 : vector<8x128xf32> to vector<8x128xbf16>
    %111 = tpu.transpose %102, [1, 0] : vector<8x128xf32> -> vector<128x8xf32>
    %112 = arith.truncf %111 : vector<128x8xf32> to vector<128x8xbf16>
    %cst_48 = arith.constant dense<0.000000e+00> : vector<128x128xf32>
    %113 = tpu.matmul %112, %110, %cst_48 {dimension_numbers = #tpu.dot_dimension_numbers<[1], [0], [0], [1], [0, 0, 1, 1], [], []>} : vector<128x8xbf16>, vector<8x128xbf16>, vector<128x128xf32> -> vector<128x128xf32>
    %cst_49 = arith.constant dense<0.000000e+00> : vector<128xf32>
    %114 = vector.multi_reduction <add>, %109, %cst_49 [0] : vector<8x128xf32> to vector<128xf32>
    %115 = vector.shape_cast %114 : vector<128xf32> to vector<1x128xf32>
    %cst_50 = arith.constant dense<0.000000e+00> : vector<8x128xf32>
    %116 = tpu.matmul %110, %97, %cst_50 {dimension_numbers = #tpu.dot_dimension_numbers<[1], [1], [0], [0], [0, 0, 1, 0], [], []>} : vector<8x128xbf16>, vector<128x128xbf16>, vector<8x128xf32> -> vector<8x128xf32>
    %cst_51 = arith.constant 0.000000e+00 : f32
    %117 = vector.broadcast %cst_51 : f32 to vector<8x128xf32>
    %118 = arith.cmpf ogt, %100, %117 : vector<8x128xf32>
    %cst_52 = arith.constant 0.000000e+00 : f32
    %119 = vector.broadcast %cst_52 : f32 to vector<8x128xf32>
    %120 = arith.select %118, %116, %119 : vector<8x128xi1>, vector<8x128xf32>
    %121 = arith.truncf %120 : vector<8x128xf32> to vector<8x128xbf16>
    %cst_53 = arith.constant dense<0.000000e+00> : vector<256x128xf32>
    %122 = tpu.matmul %10, %121, %cst_53 {dimension_numbers = #tpu.dot_dimension_numbers<[1], [0], [0], [1], [0, 0, 1, 1], [], []>} : vector<256x8xbf16>, vector<8x128xbf16>, vector<256x128xf32> -> vector<256x128xf32>
    %cst_54 = arith.constant dense<0.000000e+00> : vector<128xf32>
    %123 = vector.multi_reduction <add>, %120, %cst_54 [0] : vector<8x128xf32> to vector<128xf32>
    %124 = vector.shape_cast %123 : vector<128xf32> to vector<1x128xf32>
    %cst_55 = arith.constant 0.00999999977 : f32
    %125 = vector.broadcast %cst_55 : f32 to vector<256x128xf32>
    %126 = arith.mulf %125, %122 : vector<256x128xf32>
    %127 = arith.subf %86, %126 : vector<256x128xf32>
    %cst_56 = arith.constant 0.00999999977 : f32
    %128 = vector.broadcast %cst_56 : f32 to vector<1x128xf32>
    %129 = arith.mulf %128, %124 : vector<1x128xf32>
    %130 = arith.subf %89, %129 : vector<1x128xf32>
    %cst_57 = arith.constant 0.00999999977 : f32
    %131 = vector.broadcast %cst_57 : f32 to vector<128x128xf32>
    %132 = arith.mulf %131, %113 : vector<128x128xf32>
    %133 = arith.subf %92, %132 : vector<128x128xf32>
    %cst_58 = arith.constant 0.00999999977 : f32
    %134 = vector.broadcast %cst_58 : f32 to vector<1x128xf32>
    %135 = arith.mulf %134, %115 : vector<1x128xf32>
    %136 = arith.subf %95, %135 : vector<1x128xf32>
    %137 = arith.truncf %127 : vector<256x128xf32> to vector<256x128xbf16>
    %138 = arith.truncf %133 : vector<128x128xf32> to vector<128x128xbf16>
    %cst_59 = arith.constant dense<0.000000e+00> : vector<8x128xf32>
    %139 = tpu.matmul %11, %137, %cst_59 {dimension_numbers = #tpu.dot_dimension_numbers<[1], [0], [0], [1], [0, 0, 1, 1], [], []>} : vector<8x256xbf16>, vector<256x128xbf16>, vector<8x128xf32> -> vector<8x128xf32>
    %140 = vector.broadcast %130 : vector<1x128xf32> to vector<8x128xf32>
    %141 = arith.addf %139, %140 : vector<8x128xf32>
    %cst_60 = arith.constant 0.000000e+00 : f32
    %142 = vector.broadcast %cst_60 : f32 to vector<8x128xf32>
    %143 = arith.maximumf %141, %142 : vector<8x128xf32>
    %144 = arith.truncf %143 : vector<8x128xf32> to vector<8x128xbf16>
    %cst_61 = arith.constant dense<0.000000e+00> : vector<8x128xf32>
    %145 = tpu.matmul %144, %138, %cst_61 {dimension_numbers = #tpu.dot_dimension_numbers<[1], [0], [0], [1], [0, 0, 1, 1], [], []>} : vector<8x128xbf16>, vector<128x128xbf16>, vector<8x128xf32> -> vector<8x128xf32>
    %146 = vector.broadcast %136 : vector<1x128xf32> to vector<8x128xf32>
    %147 = arith.addf %145, %146 : vector<8x128xf32>
    %148 = arith.subf %147, %3 : vector<8x128xf32>
    %cst_62 = arith.constant 1.562500e-02 : f32
    %149 = vector.broadcast %cst_62 : f32 to vector<8x128xf32>
    %150 = arith.mulf %148, %149 : vector<8x128xf32>
    %151 = arith.truncf %150 : vector<8x128xf32> to vector<8x128xbf16>
    %152 = tpu.transpose %143, [1, 0] : vector<8x128xf32> -> vector<128x8xf32>
    %153 = arith.truncf %152 : vector<128x8xf32> to vector<128x8xbf16>
    %cst_63 = arith.constant dense<0.000000e+00> : vector<128x128xf32>
    %154 = tpu.matmul %153, %151, %cst_63 {dimension_numbers = #tpu.dot_dimension_numbers<[1], [0], [0], [1], [0, 0, 1, 1], [], []>} : vector<128x8xbf16>, vector<8x128xbf16>, vector<128x128xf32> -> vector<128x128xf32>
    %cst_64 = arith.constant dense<0.000000e+00> : vector<128xf32>
    %155 = vector.multi_reduction <add>, %150, %cst_64 [0] : vector<8x128xf32> to vector<128xf32>
    %156 = vector.shape_cast %155 : vector<128xf32> to vector<1x128xf32>
    %cst_65 = arith.constant dense<0.000000e+00> : vector<8x128xf32>
    %157 = tpu.matmul %151, %138, %cst_65 {dimension_numbers = #tpu.dot_dimension_numbers<[1], [1], [0], [0], [0, 0, 1, 0], [], []>} : vector<8x128xbf16>, vector<128x128xbf16>, vector<8x128xf32> -> vector<8x128xf32>
    %cst_66 = arith.constant 0.000000e+00 : f32
    %158 = vector.broadcast %cst_66 : f32 to vector<8x128xf32>
    %159 = arith.cmpf ogt, %141, %158 : vector<8x128xf32>
    %cst_67 = arith.constant 0.000000e+00 : f32
    %160 = vector.broadcast %cst_67 : f32 to vector<8x128xf32>
    %161 = arith.select %159, %157, %160 : vector<8x128xi1>, vector<8x128xf32>
    %162 = arith.truncf %161 : vector<8x128xf32> to vector<8x128xbf16>
    %cst_68 = arith.constant dense<0.000000e+00> : vector<256x128xf32>
    %163 = tpu.matmul %13, %162, %cst_68 {dimension_numbers = #tpu.dot_dimension_numbers<[1], [0], [0], [1], [0, 0, 1, 1], [], []>} : vector<256x8xbf16>, vector<8x128xbf16>, vector<256x128xf32> -> vector<256x128xf32>
    %cst_69 = arith.constant dense<0.000000e+00> : vector<128xf32>
    %164 = vector.multi_reduction <add>, %161, %cst_69 [0] : vector<8x128xf32> to vector<128xf32>
    %165 = vector.shape_cast %164 : vector<128xf32> to vector<1x128xf32>
    %cst_70 = arith.constant 2.500000e-01 : f32
    %166 = vector.broadcast %cst_70 : f32 to vector<256x128xf32>
    %167 = arith.mulf %163, %166 : vector<256x128xf32>
    %cst_71 = arith.constant 2.500000e-01 : f32
    %168 = vector.broadcast %cst_71 : f32 to vector<1x128xf32>
    %169 = arith.mulf %165, %168 : vector<1x128xf32>
    %cst_72 = arith.constant 2.500000e-01 : f32
    %170 = vector.broadcast %cst_72 : f32 to vector<128x128xf32>
    %171 = arith.mulf %154, %170 : vector<128x128xf32>
    %cst_73 = arith.constant 2.500000e-01 : f32
    %172 = vector.broadcast %cst_73 : f32 to vector<1x128xf32>
    %173 = arith.mulf %156, %172 : vector<1x128xf32>
    %c0_74 = arith.constant 0 : index
    %c0_75 = arith.constant 0 : index
    %174 = vector.load %arg8[%c0_74, %c0_75] : memref<256x128xf32, #tpu.memory_space<vmem>>, vector<256x128xf32>
    tpu.vector_store %arg8[%c0_74, %c0_75], %167 {strides = array<i32>} : memref<256x128xf32, #tpu.memory_space<vmem>>, vector<256x128xf32>,
    %c0_76 = arith.constant 0 : index
    %c0_77 = arith.constant 0 : index
    %175 = vector.load %arg9[%c0_76, %c0_77] : memref<1x128xf32, #tpu.memory_space<vmem>>, vector<1x128xf32>
    tpu.vector_store %arg9[%c0_76, %c0_77], %169 {strides = array<i32>} : memref<1x128xf32, #tpu.memory_space<vmem>>, vector<1x128xf32>,
    %c0_78 = arith.constant 0 : index
    %c0_79 = arith.constant 0 : index
    %176 = vector.load %arg10[%c0_78, %c0_79] : memref<128x128xf32, #tpu.memory_space<vmem>>, vector<128x128xf32>
    tpu.vector_store %arg10[%c0_78, %c0_79], %171 {strides = array<i32>} : memref<128x128xf32, #tpu.memory_space<vmem>>, vector<128x128xf32>,
    %c0_80 = arith.constant 0 : index
    %c0_81 = arith.constant 0 : index
    %177 = vector.load %arg11[%c0_80, %c0_81] : memref<1x128xf32, #tpu.memory_space<vmem>>, vector<1x128xf32>
    tpu.vector_store %arg11[%c0_80, %c0_81], %173 {strides = array<i32>} : memref<1x128xf32, #tpu.memory_space<vmem>>, vector<1x128xf32>,
    return
  }
}

</mosaic_0001>

<llo_original>
// kernel: inner_loop_meta_grads.1
$region0: #{inner_loop_meta_grads.1}
  #allocation0 [shape = 'u32[]', space=smem, size = 0x4, offset = 0x4, fixed_abs, tag = 'smem constant byte address 0x4 - core index']
  #allocation1 [shape = 'u32[144,128]{1,0:T(1,128)}', space=vmem, size = 0x12000, scoped, tag = 'internal scratch']
  %s0 = inlined_call_operand.vmem [shape: f32[8,256], index: 0, kind: input, shape index: {}]
  %s1 = inlined_call_operand.vmem [shape: f32[8,128], index: 1, kind: input, shape index: {}]
  %s2 = inlined_call_operand.vmem [shape: f32[8,256], index: 2, kind: input, shape index: {}]
  %s3 = inlined_call_operand.vmem [shape: f32[8,128], index: 3, kind: input, shape index: {}]
  %s4 = inlined_call_operand.vmem [shape: f32[256,128], index: 4, kind: input, shape index: {}]
  %s5 = inlined_call_operand.vmem [shape: f32[1,128], index: 5, kind: input, shape index: {}]
  %s6 = inlined_call_operand.vmem [shape: f32[128,128], index: 6, kind: input, shape index: {}]
  %s7 = inlined_call_operand.vmem [shape: f32[1,128], index: 7, kind: input, shape index: {}]
  %s8 = inlined_call_operand.hbm [shape: f32[256,128], index: 8, kind: output, shape index: {0}]
  %s9 = inlined_call_operand.hbm [shape: f32[1,128], index: 9, kind: output, shape index: {1}]
  %s10 = inlined_call_operand.vmem [shape: f32[128,128], index: 10, kind: output, shape index: {2}]
  %s11 = inlined_call_operand.vmem [shape: f32[1,128], index: 11, kind: output, shape index: {3}]
  %12 = xla_tuple %s8, %s9, %s10, %s11
  %s13 = sld [smem:[#allocation0]]
  $region66: #{inner_loop_meta_grads.1} parent=0
    _
  %s15 = ssub.s32 1, %s13
  %s16 = scalar_select 0, %s15, %s13
  $region1: #{inner_loop_meta_grads.1} parent=0
    #allocation2 [shape = 'u8[131072]{0}', space=vmem, size = 0x20000, scoped, tag = 'output window, operand 0, single buffered']
    #allocation3 [shape = 's32[1]{0}', space=sflag, size = 0x4, scoped, tag = 'scoped memory for inner_loop_meta_grads.1']
    #allocation4 [shape = 'u8[512]{0}', space=vmem, size = 0x400, scoped, tag = 'output window, operand 1, single buffered']
    #allocation5 [shape = 's32[1]{0}', space=sflag, size = 0x4, scoped, tag = 'scoped memory for inner_loop_meta_grads.1']
    %17 = vsyncpa [#allocation3], 0
    %18 = vsyncpa [#allocation5], 0
    // Predicated region
    $region2: #{inner_loop_meta_grads.1} parent=1 // pred_check
      _
    $region3: #{inner_loop_meta_grads.1} parent=1 // pred_check_branch
      %20 = sbr.rel (0) target = $region5
    $region4: #{inner_loop_meta_grads.1} parent=1 // pred_region
      _
    $region5: #{inner_loop_meta_grads.1} parent=1 // pred_fallthru
      _
    // Predicated region
    $region6: #{inner_loop_meta_grads.1} parent=1 // pred_check
      _
    $region7: #{inner_loop_meta_grads.1} parent=1 // pred_check_branch
      %22 = sbr.rel (0) target = $region9
    $region8: #{inner_loop_meta_grads.1} parent=1 // pred_region
      _
    $region9: #{inner_loop_meta_grads.1} parent=1 // pred_fallthru
      _
    // Predicated region
    $region10: #{inner_loop_meta_grads.1} parent=1 // pred_check
      _
    $region11: #{inner_loop_meta_grads.1} parent=1 // pred_check_branch
      %24 = sbr.rel (0) target = $region13
    $region12: #{inner_loop_meta_grads.1} parent=1 // pred_region
      _
    $region13: #{inner_loop_meta_grads.1} parent=1 // pred_fallthru
      _
    // Predicated region
    $region14: #{inner_loop_meta_grads.1} parent=1 // pred_check
      _
    $region15: #{inner_loop_meta_grads.1} parent=1 // pred_check_branch
      %26 = sbr.rel (0) target = $region17
    $region16: #{inner_loop_meta_grads.1} parent=1 // pred_region
      _
    $region17: #{inner_loop_meta_grads.1} parent=1 // pred_fallthru
      _
    // Predicated region
    $region18: #{inner_loop_meta_grads.1} parent=1 // pred_check
      _
    $region19: #{inner_loop_meta_grads.1} parent=1 // pred_check_branch
      %28 = sbr.rel (0) target = $region21
    $region20: #{inner_loop_meta_grads.1} parent=1 // pred_region
      _
    $region21: #{inner_loop_meta_grads.1} parent=1 // pred_fallthru
      _
    // Predicated region
    $region22: #{inner_loop_meta_grads.1} parent=1 // pred_check
      _
    $region23: #{inner_loop_meta_grads.1} parent=1 // pred_check_branch
      %30 = sbr.rel (0) target = $region25
    $region24: #{inner_loop_meta_grads.1} parent=1 // pred_region
      _
    $region25: #{inner_loop_meta_grads.1} parent=1 // pred_fallthru
      _
    // Predicated region
    $region26: #{inner_loop_meta_grads.1} parent=1 // pred_check
      _
    $region27: #{inner_loop_meta_grads.1} parent=1 // pred_check_branch
      %32 = sbr.rel (0) target = $region29
    $region28: #{inner_loop_meta_grads.1} parent=1 // pred_region
      _
    $region29: #{inner_loop_meta_grads.1} parent=1 // pred_fallthru
      _
    // Predicated region
    $region30: #{inner_loop_meta_grads.1} parent=1 // pred_check
      _
    $region31: #{inner_loop_meta_grads.1} parent=1 // pred_check_branch
      %34 = sbr.rel (0) target = $region33
    $region32: #{inner_loop_meta_grads.1} parent=1 // pred_region
      _
    $region33: #{inner_loop_meta_grads.1} parent=1 // pred_fallthru
      _
    %v36 = vld [vmem:[%s0] sm:$0xff]
    %v37 = vld [vmem:[%s0 + $0x8] sm:$0xff]
    %v38 = vld [vmem:[%s1] sm:$0xff]
    %v39 = vld [vmem:[%s2] sm:$0xff]
    %v40 = vld [vmem:[%s2 + $0x8] sm:$0xff]
    %v41 = vld [vmem:[%s3] sm:$0xff]
    %v42 = vld [vmem:[%s4] sm:$0xff]
    %v43 = vld [vmem:[%s4 + $0x8] sm:$0xff]
    %v44 = vld [vmem:[%s4 + $0x10] sm:$0xff]
    %v45 = vld [vmem:[%s4 + $0x18] sm:$0xff]
    %v46 = vld [vmem:[%s4 + $0x20] sm:$0xff]
    %v47 = vld [vmem:[%s4 + $0x28] sm:$0xff]
    %v48 = vld [vmem:[%s4 + $0x30] sm:$0xff]
    %v49 = vld [vmem:[%s4 + $0x38] sm:$0xff]
    %v50 = vld [vmem:[%s4 + $0x40] sm:$0xff]
    %v51 = vld [vmem:[%s4 + $0x48] sm:$0xff]
    %v52 = vld [vmem:[%s4 + $0x50] sm:$0xff]
    %v53 = vld [vmem:[%s4 + $0x58] sm:$0xff]
    %v54 = vld [vmem:[%s4 + $0x60] sm:$0xff]
    %v55 = vld [vmem:[%s4 + $0x68] sm:$0xff]
    %v56 = vld [vmem:[%s4 + $0x70] sm:$0xff]
    %v57 = vld [vmem:[%s4 + $0x78] sm:$0xff]
    %v58 = vld [vmem:[%s4 + $0x80] sm:$0xff]
    %v59 = vld [vmem:[%s4 + $0x88] sm:$0xff]
    %v60 = vld [vmem:[%s4 + $0x90] sm:$0xff]
    %v61 = vld [vmem:[%s4 + $0x98] sm:$0xff]
    %v62 = vld [vmem:[%s4 + $0xa0] sm:$0xff]
    %v63 = vld [vmem:[%s4 + $0xa8] sm:$0xff]
    %v64 = vld [vmem:[%s4 + $0xb0] sm:$0xff]
    %v65 = vld [vmem:[%s4 + $0xb8] sm:$0xff]
    %v66 = vld [vmem:[%s4 + $0xc0] sm:$0xff]
    %v67 = vld [vmem:[%s4 + $0xc8] sm:$0xff]
    %v68 = vld [vmem:[%s4 + $0xd0] sm:$0xff]
    %v69 = vld [vmem:[%s4 + $0xd8] sm:$0xff]
    %v70 = vld [vmem:[%s4 + $0xe0] sm:$0xff]
    %v71 = vld [vmem:[%s4 + $0xe8] sm:$0xff]
    %v72 = vld [vmem:[%s4 + $0xf0] sm:$0xff]
    %v73 = vld [vmem:[%s4 + $0xf8] sm:$0xff]
    %v74 = vld [vmem:[%s5] sm:$0x1]
    %v75 = vld [vmem:[%s6] sm:$0xff]
    %v76 = vld [vmem:[%s6 + $0x8] sm:$0xff]
    %v77 = vld [vmem:[%s6 + $0x10] sm:$0xff]
    %v78 = vld [vmem:[%s6 + $0x18] sm:$0xff]
    %v79 = vld [vmem:[%s6 + $0x20] sm:$0xff]
    %v80 = vld [vmem:[%s6 + $0x28] sm:$0xff]
    %v81 = vld [vmem:[%s6 + $0x30] sm:$0xff]
    %v82 = vld [vmem:[%s6 + $0x38] sm:$0xff]
    %v83 = vld [vmem:[%s6 + $0x40] sm:$0xff]
    %v84 = vld [vmem:[%s6 + $0x48] sm:$0xff]
    %v85 = vld [vmem:[%s6 + $0x50] sm:$0xff]
    %v86 = vld [vmem:[%s6 + $0x58] sm:$0xff]
    %v87 = vld [vmem:[%s6 + $0x60] sm:$0xff]
    %v88 = vld [vmem:[%s6 + $0x68] sm:$0xff]
    %v89 = vld [vmem:[%s6 + $0x70] sm:$0xff]
    %v90 = vld [vmem:[%s6 + $0x78] sm:$0xff]
    %v91 = vld [vmem:[%s7] sm:$0x1]
    %v92 = vpack.c.bf16 %v36, %v36
    %v93 = vpack.c.bf16 %v37, %v37
    %94 = vxpose.xlu0.b32.start [1/16] %v36, 128
    %95 = vxpose.xlu0.b32.cont [2/16] 0.0, 128
    %96 = vxpose.xlu0.b32.cont [3/16] 0.0, 128
    %97 = vxpose.xlu0.b32.cont [4/16] 0.0, 128
    %98 = vxpose.xlu0.b32.cont [5/16] 0.0, 128
    %99 = vxpose.xlu0.b32.cont [6/16] 0.0, 128
    %100 = vxpose.xlu0.b32.cont [7/16] 0.0, 128
    %101 = vxpose.xlu0.b32.cont [8/16] 0.0, 128
    %102 = vxpose.xlu0.b32.cont [9/16] 0.0, 128
    %103 = vxpose.xlu0.b32.cont [10/16] 0.0, 128
    %104 = vxpose.xlu0.b32.cont [11/16] 0.0, 128
    %105 = vxpose.xlu0.b32.cont [12/16] 0.0, 128
    %106 = vxpose.xlu0.b32.cont [13/16] 0.0, 128
    %107 = vxpose.xlu0.b32.cont [14/16] 0.0, 128
    %108 = vxpose.xlu0.b32.cont [15/16] 0.0, 128
    %109 = vxpose.xlu0.b32.end [16/16] 0.0, 128
    %v110 = vpop.trf.xlu0
    %v111 = vpop.trf.xlu0
    %v112 = vpop.trf.xlu0
    %v113 = vpop.trf.xlu0
    %v114 = vpop.trf.xlu0
    %v115 = vpop.trf.xlu0
    %v116 = vpop.trf.xlu0
    %v117 = vpop.trf.xlu0
    %v118 = vpop.trf.xlu0
    %v119 = vpop.trf.xlu0
    %v120 = vpop.trf.xlu0
    %v121 = vpop.trf.xlu0
    %v122 = vpop.trf.xlu0
    %v123 = vpop.trf.xlu0
    %v124 = vpop.trf.xlu0
    %v125 = vpop.trf.xlu0
    %126 = vxpose.xlu0.b32.start [1/16] %v37, 128
    %127 = vxpose.xlu0.b32.cont [2/16] 0.0, 128
    %128 = vxpose.xlu0.b32.cont [3/16] 0.0, 128
    %129 = vxpose.xlu0.b32.cont [4/16] 0.0, 128
    %130 = vxpose.xlu0.b32.cont [5/16] 0.0, 128
    %131 = vxpose.xlu0.b32.cont [6/16] 0.0, 128
    %132 = vxpose.xlu0.b32.cont [7/16] 0.0, 128
    %133 = vxpose.xlu0.b32.cont [8/16] 0.0, 128
    %134 = vxpose.xlu0.b32.cont [9/16] 0.0, 128
    %135 = vxpose.xlu0.b32.cont [10/16] 0.0, 128
    %136 = vxpose.xlu0.b32.cont [11/16] 0.0, 128
    %137 = vxpose.xlu0.b32.cont [12/16] 0.0, 128
    %138 = vxpose.xlu0.b32.cont [13/16] 0.0, 128
    %139 = vxpose.xlu0.b32.cont [14/16] 0.0, 128
    %140 = vxpose.xlu0.b32.cont [15/16] 0.0, 128
    %141 = vxpose.xlu0.b32.end [16/16] 0.0, 128
    %v142 = vpop.trf.xlu0
    %v143 = vpop.trf.xlu0
    %v144 = vpop.trf.xlu0
    %v145 = vpop.trf.xlu0
    %v146 = vpop.trf.xlu0
    %v147 = vpop.trf.xlu0
    %v148 = vpop.trf.xlu0
    %v149 = vpop.trf.xlu0
    %v150 = vpop.trf.xlu0
    %v151 = vpop.trf.xlu0
    %v152 = vpop.trf.xlu0
    %v153 = vpop.trf.xlu0
    %v154 = vpop.trf.xlu0
    %v155 = vpop.trf.xlu0
    %v156 = vpop.trf.xlu0
    %v157 = vpop.trf.xlu0
    %v158 = vpack.c.bf16 %v111, %v110
    %v159 = vpack.c.bf16 %v113, %v112
    %v160 = vpack.c.bf16 %v115, %v114
    %v161 = vpack.c.bf16 %v117, %v116
    %v162 = vpack.c.bf16 %v119, %v118
    %v163 = vpack.c.bf16 %v121, %v120
    %v164 = vpack.c.bf16 %v123, %v122
    %v165 = vpack.c.bf16 %v125, %v124
    %v166 = vpack.c.bf16 %v143, %v142
    %v167 = vpack.c.bf16 %v145, %v144
    %v168 = vpack.c.bf16 %v147, %v146
    %v169 = vpack.c.bf16 %v149, %v148
    %v170 = vpack.c.bf16 %v151, %v150
    %v171 = vpack.c.bf16 %v153, %v152
    %v172 = vpack.c.bf16 %v155, %v154
    %v173 = vpack.c.bf16 %v157, %v156
    %v174 = vpack.c.bf16 %v39, %v39
    %v175 = vpack.c.bf16 %v40, %v40
    %176 = vxpose.xlu0.b32.start [1/16] %v39, 128
    %177 = vxpose.xlu0.b32.cont [2/16] 0.0, 128
    %178 = vxpose.xlu0.b32.cont [3/16] 0.0, 128
    %179 = vxpose.xlu0.b32.cont [4/16] 0.0, 128
    %180 = vxpose.xlu0.b32.cont [5/16] 0.0, 128
    %181 = vxpose.xlu0.b32.cont [6/16] 0.0, 128
    %182 = vxpose.xlu0.b32.cont [7/16] 0.0, 128
    %183 = vxpose.xlu0.b32.cont [8/16] 0.0, 128
    %184 = vxpose.xlu0.b32.cont [9/16] 0.0, 128
    %185 = vxpose.xlu0.b32.cont [10/16] 0.0, 128
    %186 = vxpose.xlu0.b32.cont [11/16] 0.0, 128
    %187 = vxpose.xlu0.b32.cont [12/16] 0.0, 128
    %188 = vxpose.xlu0.b32.cont [13/16] 0.0, 128
    %189 = vxpose.xlu0.b32.cont [14/16] 0.0, 128
    %190 = vxpose.xlu0.b32.cont [15/16] 0.0, 128
    %191 = vxpose.xlu0.b32.end [16/16] 0.0, 128
    %v192 = vpop.trf.xlu0
    %v193 = vpop.trf.xlu0
    %v194 = vpop.trf.xlu0
    %v195 = vpop.trf.xlu0
    %v196 = vpop.trf.xlu0
    %v197 = vpop.trf.xlu0
    %v198 = vpop.trf.xlu0
    %v199 = vpop.trf.xlu0
    %v200 = vpop.trf.xlu0
    %v201 = vpop.trf.xlu0
    %v202 = vpop.trf.xlu0
    %v203 = vpop.trf.xlu0
    %v204 = vpop.trf.xlu0
    %v205 = vpop.trf.xlu0
    %v206 = vpop.trf.xlu0
    %v207 = vpop.trf.xlu0
    %208 = vxpose.xlu0.b32.start [1/16] %v40, 128
    %209 = vxpose.xlu0.b32.cont [2/16] 0.0, 128
    %210 = vxpose.xlu0.b32.cont [3/16] 0.0, 128
    %211 = vxpose.xlu0.b32.cont [4/16] 0.0, 128
    %212 = vxpose.xlu0.b32.cont [5/16] 0.0, 128
    %213 = vxpose.xlu0.b32.cont [6/16] 0.0, 128
    %214 = vxpose.xlu0.b32.cont [7/16] 0.0, 128
    %215 = vxpose.xlu0.b32.cont [8/16] 0.0, 128
    %216 = vxpose.xlu0.b32.cont [9/16] 0.0, 128
    %217 = vxpose.xlu0.b32.cont [10/16] 0.0, 128
    %218 = vxpose.xlu0.b32.cont [11/16] 0.0, 128
    %219 = vxpose.xlu0.b32.cont [12/16] 0.0, 128
    %220 = vxpose.xlu0.b32.cont [13/16] 0.0, 128
    %221 = vxpose.xlu0.b32.cont [14/16] 0.0, 128
    %222 = vxpose.xlu0.b32.cont [15/16] 0.0, 128
    %223 = vxpose.xlu0.b32.end [16/16] 0.0, 128
    %v224 = vpop.trf.xlu0
    %v225 = vpop.trf.xlu0
    %v226 = vpop.trf.xlu0
    %v227 = vpop.trf.xlu0
    %v228 = vpop.trf.xlu0
    %v229 = vpop.trf.xlu0
    %v230 = vpop.trf.xlu0
    %v231 = vpop.trf.xlu0
    %v232 = vpop.trf.xlu0
    %v233 = vpop.trf.xlu0
    %v234 = vpop.trf.xlu0
    %v235 = vpop.trf.xlu0
    %v236 = vpop.trf.xlu0
    %v237 = vpop.trf.xlu0
    %v238 = vpop.trf.xlu0
    %v239 = vpop.trf.xlu0
    %v240 = vpack.c.bf16 %v193, %v192
    %v241 = vpack.c.bf16 %v195, %v194
    %v242 = vpack.c.bf16 %v197, %v196
    %v243 = vpack.c.bf16 %v199, %v198
    %v244 = vpack.c.bf16 %v201, %v200
    %v245 = vpack.c.bf16 %v203, %v202
    %v246 = vpack.c.bf16 %v205, %v204
    %v247 = vpack.c.bf16 %v207, %v206
    %v248 = vpack.c.bf16 %v225, %v224
    %v249 = vpack.c.bf16 %v227, %v226
    %v250 = vpack.c.bf16 %v229, %v228
    %v251 = vpack.c.bf16 %v231, %v230
    %v252 = vpack.c.bf16 %v233, %v232
    %v253 = vpack.c.bf16 %v235, %v234
    %v254 = vpack.c.bf16 %v237, %v236
    %v255 = vpack.c.bf16 %v239, %v238
    %v256 = vpack.c.bf16 %v43, %v42
    %v257 = vpack.c.bf16 %v45, %v44
    %v258 = vpack.c.bf16 %v47, %v46
    %v259 = vpack.c.bf16 %v49, %v48
    %v260 = vpack.c.bf16 %v51, %v50
    %v261 = vpack.c.bf16 %v53, %v52
    %v262 = vpack.c.bf16 %v55, %v54
    %v263 = vpack.c.bf16 %v57, %v56
    %v264 = vpack.c.bf16 %v59, %v58
    %v265 = vpack.c.bf16 %v61, %v60
    %v266 = vpack.c.bf16 %v63, %v62
    %v267 = vpack.c.bf16 %v65, %v64
    %v268 = vpack.c.bf16 %v67, %v66
    %v269 = vpack.c.bf16 %v69, %v68
    %v270 = vpack.c.bf16 %v71, %v70
    %v271 = vpack.c.bf16 %v73, %v72
    %v272 = vpack.c.bf16 %v76, %v75
    %v273 = vpack.c.bf16 %v78, %v77
    %v274 = vpack.c.bf16 %v80, %v79
    %v275 = vpack.c.bf16 %v82, %v81
    %v276 = vpack.c.bf16 %v84, %v83
    %v277 = vpack.c.bf16 %v86, %v85
    %v278 = vpack.c.bf16 %v88, %v87
    %v279 = vpack.c.bf16 %v90, %v89
    %v281 = vlaneseq
    %v282 = vshrl.u32 %v281, 7
    %v283 = vsub.s32 0, %v282
    %v284 = vrot.slane %v74, %v283
    %286 = vmatprep.subr.bf16.mxu0 0
    %287 = vmatpush1.bf16.msra.mxu0 %v256
    %288 = vmatprep.subr.bf16.mxu0 0
    %289 = vmatpush1.bf16.msra.mxu0 %v257
    %290 = vmatprep.subr.bf16.mxu0 0
    %291 = vmatpush1.bf16.msra.mxu0 %v258
    %292 = vmatprep.subr.bf16.mxu0 0
    %293 = vmatpush1.bf16.msra.mxu0 %v259
    %294 = vmatprep.subr.bf16.mxu0 0
    %295 = vmatpush1.bf16.msra.mxu0 %v260
    %296 = vmatprep.subr.bf16.mxu0 0
    %297 = vmatpush1.bf16.msra.mxu0 %v261
    %298 = vmatprep.subr.bf16.mxu0 0
    %299 = vmatpush1.bf16.msra.mxu0 %v262
    %300 = vmatprep.subr.bf16.mxu0 0
    %301 = vmatpush1.bf16.msra.mxu0 %v263
    %302 = vmatprep.subr.bf16.mxu0 0
    %303 = vmatpush1.bf16.msra.mxu0 %v264
    %304 = vmatprep.subr.bf16.mxu0 0
    %305 = vmatpush1.bf16.msra.mxu0 %v265
    %306 = vmatprep.subr.bf16.mxu0 0
    %307 = vmatpush1.bf16.msra.mxu0 %v266
    %308 = vmatprep.subr.bf16.mxu0 0
    %309 = vmatpush1.bf16.msra.mxu0 %v267
    %310 = vmatprep.subr.bf16.mxu0 0
    %311 = vmatpush1.bf16.msra.mxu0 %v268
    %312 = vmatprep.subr.bf16.mxu0 0
    %313 = vmatpush1.bf16.msra.mxu0 %v269
    %314 = vmatprep.subr.bf16.mxu0 0
    %315 = vmatpush1.bf16.msra.mxu0 %v270
    %316 = vmatprep.subr.bf16.mxu0 0
    %317 = vmatpush1.bf16.msra.mxu0 %v271
    %318 = vmatprep.mubr.bf16.mxu0 %v93
    %319 = vmatmul.mubr.bf16.gmra.mrb[0].mxu0 %v92
    %v320 = vpop.f32.mrb[0].mxu0
    %v321 = vadd.f32 %v284, %v320
    %v322 = vpop.f32.mrb[0].mxu0
    %v323 = vpop.f32.mrb[0].mxu0
    %v324 = vpop.f32.mrb[0].mxu0
    %325 = vdwg.mxu0
    %v326 = vmax.f32 %v321, 0.0
    %v327 = vpack.c.bf16 %v326, %v326
    %v329 = vlaneseq
    %v330 = vshrl.u32 %v329, 7
    %v331 = vsub.s32 0, %v330
    %v332 = vrot.slane %v91, %v331
    %334 = vmatprep.subr.bf16.mxu0 0
    %335 = vmatpush1.bf16.msra.mxu0 %v272
    %336 = vmatprep.subr.bf16.mxu0 0
    %337 = vmatpush1.bf16.msra.mxu0 %v273
    %338 = vmatprep.subr.bf16.mxu0 0
    %339 = vmatpush1.bf16.msra.mxu0 %v274
    %340 = vmatprep.subr.bf16.mxu0 0
    %341 = vmatpush1.bf16.msra.mxu0 %v275
    %342 = vmatprep.subr.bf16.mxu0 0
    %343 = vmatpush1.bf16.msra.mxu0 %v276
    %344 = vmatprep.subr.bf16.mxu0 0
    %345 = vmatpush1.bf16.msra.mxu0 %v277
    %346 = vmatprep.subr.bf16.mxu0 0
    %347 = vmatpush1.bf16.msra.mxu0 %v278
    %348 = vmatprep.subr.bf16.mxu0 0
    %349 = vmatpush1.bf16.msra.mxu0 %v279
    %350 = vmatprep.subr.bf16.mxu0 0
    %351 = vmatpush1.bf16.msra.mxu0 0
    %352 = vmatprep.subr.bf16.mxu0 0
    %353 = vmatpush1.bf16.msra.mxu0 0
    %354 = vmatprep.subr.bf16.mxu0 0
    %355 = vmatpush1.bf16.msra.mxu0 0
    %356 = vmatprep.subr.bf16.mxu0 0
    %357 = vmatpush1.bf16.msra.mxu0 0
    %358 = vmatprep.subr.bf16.mxu0 0
    %359 = vmatpush1.bf16.msra.mxu0 0
    %360 = vmatprep.subr.bf16.mxu0 0
    %361 = vmatpush1.bf16.msra.mxu0 0
    %362 = vmatprep.subr.bf16.mxu0 0
    %363 = vmatpush1.bf16.msra.mxu0 0
    %364 = vmatprep.subr.bf16.mxu0 0
    %365 = vmatpush1.bf16.msra.mxu0 0
    %366 = vmatprep.mubr.bf16.mxu0 0
    %367 = vmatmul.mubr.bf16.gmra.mrb[0].mxu0 %v327
    %v368 = vpop.f32.mrb[0].mxu0
    %v369 = vadd.f32 %v332, %v368
    %v370 = vpop.f32.mrb[0].mxu0
    %v371 = vpop.f32.mrb[0].mxu0
    %v372 = vpop.f32.mrb[0].mxu0
    %373 = vdwg.mxu0
    %v374 = vsub.f32 %v369, %v38
    %v375 = vmul.f32 %v374, 0.015625
    %v376 = vpack.c.bf16 %v375, %v375
    %377 = vxpose.xlu0.b32.start [1/16] %v326, 128
    %378 = vxpose.xlu0.b32.cont [2/16] 0.0, 128
    %379 = vxpose.xlu0.b32.cont [3/16] 0.0, 128
    %380 = vxpose.xlu0.b32.cont [4/16] 0.0, 128
    %381 = vxpose.xlu0.b32.cont [5/16] 0.0, 128
    %382 = vxpose.xlu0.b32.cont [6/16] 0.0, 128
    %383 = vxpose.xlu0.b32.cont [7/16] 0.0, 128
    %384 = vxpose.xlu0.b32.cont [8/16] 0.0, 128
    %385 = vxpose.xlu0.b32.cont [9/16] 0.0, 128
    %386 = vxpose.xlu0.b32.cont [10/16] 0.0, 128
    %387 = vxpose.xlu0.b32.cont [11/16] 0.0, 128
    %388 = vxpose.xlu0.b32.cont [12/16] 0.0, 128
    %389 = vxpose.xlu0.b32.cont [13/16] 0.0, 128
    %390 = vxpose.xlu0.b32.cont [14/16] 0.0, 128
    %391 = vxpose.xlu0.b32.cont [15/16] 0.0, 128
    %392 = vxpose.xlu0.b32.end [16/16] 0.0, 128
    %v393 = vpop.trf.xlu0
    %v394 = vpop.trf.xlu0
    %v395 = vpop.trf.xlu0
    %v396 = vpop.trf.xlu0
    %v397 = vpop.trf.xlu0
    %v398 = vpop.trf.xlu0
    %v399 = vpop.trf.xlu0
    %v400 = vpop.trf.xlu0
    %v401 = vpop.trf.xlu0
    %v402 = vpop.trf.xlu0
    %v403 = vpop.trf.xlu0
    %v404 = vpop.trf.xlu0
    %v405 = vpop.trf.xlu0
    %v406 = vpop.trf.xlu0
    %v407 = vpop.trf.xlu0
    %v408 = vpop.trf.xlu0
    %v409 = vpack.c.bf16 %v394, %v393
    %v410 = vpack.c.bf16 %v396, %v395
    %v411 = vpack.c.bf16 %v398, %v397
    %v412 = vpack.c.bf16 %v400, %v399
    %v413 = vpack.c.bf16 %v402, %v401
    %v414 = vpack.c.bf16 %v404, %v403
    %v415 = vpack.c.bf16 %v406, %v405
    %v416 = vpack.c.bf16 %v408, %v407
    %vm417 = vcmask 64512
    %v419 = vsel %vm417, %v409, 0
    %v422 = vsel %vm417, %v410, 0
    %v425 = vsel %vm417, %v411, 0
    %v428 = vsel %vm417, %v412, 0
    %v431 = vsel %vm417, %v413, 0
    %v434 = vsel %vm417, %v414, 0
    %v437 = vsel %vm417, %v415, 0
    %v440 = vsel %vm417, %v416, 0
    %vm442 = vcmask 1043456
    %v444 = vsel %vm442, %v376, 0
    %446 = vmatprep.subr.bf16.mxu0 0
    %447 = vmatpush1.bf16.msra.mxu0 %v444
    %448 = vmatprep.subr.bf16.mxu0 0
    %449 = vmatpush1.bf16.msra.mxu0 0
    %450 = vmatprep.subr.bf16.mxu0 0
    %451 = vmatpush1.bf16.msra.mxu0 0
    %452 = vmatprep.subr.bf16.mxu0 0
    %453 = vmatpush1.bf16.msra.mxu0 0
    %454 = vmatprep.subr.bf16.mxu0 0
    %455 = vmatpush1.bf16.msra.mxu0 0
    %456 = vmatprep.subr.bf16.mxu0 0
    %457 = vmatpush1.bf16.msra.mxu0 0
    %458 = vmatprep.subr.bf16.mxu0 0
    %459 = vmatpush1.bf16.msra.mxu0 0
    %460 = vmatprep.subr.bf16.mxu0 0
    %461 = vmatpush1.bf16.msra.mxu0 0
    %462 = vmatprep.subr.bf16.mxu0 0
    %463 = vmatpush1.bf16.msra.mxu0 0
    %464 = vmatprep.subr.bf16.mxu0 0
    %465 = vmatpush1.bf16.msra.mxu0 0
    %466 = vmatprep.subr.bf16.mxu0 0
    %467 = vmatpush1.bf16.msra.mxu0 0
    %468 = vmatprep.subr.bf16.mxu0 0
    %469 = vmatpush1.bf16.msra.mxu0 0
    %470 = vmatprep.subr.bf16.mxu0 0
    %471 = vmatpush1.bf16.msra.mxu0 0
    %472 = vmatprep.subr.bf16.mxu0 0
    %473 = vmatpush1.bf16.msra.mxu0 0
    %474 = vmatprep.subr.bf16.mxu0 0
    %475 = vmatpush1.bf16.msra.mxu0 0
    %476 = vmatprep.subr.bf16.mxu0 0
    %477 = vmatpush1.bf16.msra.mxu0 0
    %478 = vmatprep.mubr.bf16.mxu0 0
    %479 = vmatmul.mubr.bf16.gmra.mrb[0].mxu0 %v419
    %v480 = vpop.f32.mrb[0].mxu0
    %v481 = vadd.f32 0.0, %v480
    %v482 = vpop.f32.mrb[0].mxu0
    %v483 = vpop.f32.mrb[0].mxu0
    %v484 = vadd.f32 0.0, %v483
    %v485 = vpop.f32.mrb[0].mxu0
    %486 = vmatprep.mubr.bf16.mxu0 0
    %487 = vmatmul.mubr.bf16.gmra.mrb[0].mxu0 %v422
    %v488 = vpop.f32.mrb[0].mxu0
    %v489 = vadd.f32 0.0, %v488
    %v490 = vpop.f32.mrb[0].mxu0
    %v491 = vpop.f32.mrb[0].mxu0
    %v492 = vadd.f32 0.0, %v491
    %v493 = vpop.f32.mrb[0].mxu0
    %494 = vmatprep.mubr.bf16.mxu0 0
    %495 = vmatmul.mubr.bf16.gmra.mrb[0].mxu0 %v425
    %v496 = vpop.f32.mrb[0].mxu0
    %v497 = vadd.f32 0.0, %v496
    %v498 = vpop.f32.mrb[0].mxu0
    %v499 = vpop.f32.mrb[0].mxu0
    %v500 = vadd.f32 0.0, %v499
    %v501 = vpop.f32.mrb[0].mxu0
    %502 = vmatprep.mubr.bf16.mxu0 0
    %503 = vmatmul.mubr.bf16.gmra.mrb[0].mxu0 %v428
    %v504 = vpop.f32.mrb[0].mxu0
    %v505 = vadd.f32 0.0, %v504
    %v506 = vpop.f32.mrb[0].mxu0
    %v507 = vpop.f32.mrb[0].mxu0
    %v508 = vadd.f32 0.0, %v507
    %v509 = vpop.f32.mrb[0].mxu0
    %510 = vmatprep.mubr.bf16.mxu0 0
    %511 = vmatmul.mubr.bf16.gmra.mrb[0].mxu0 %v431
    %v512 = vpop.f32.mrb[0].mxu0
    %v513 = vadd.f32 0.0, %v512
    %v514 = vpop.f32.mrb[0].mxu0
    %v515 = vpop.f32.mrb[0].mxu0
    %v516 = vadd.f32 0.0, %v515
    %v517 = vpop.f32.mrb[0].mxu0
    %518 = vmatprep.mubr.bf16.mxu0 0
    %519 = vmatmul.mubr.bf16.gmra.mrb[0].mxu0 %v434
    %v520 = vpop.f32.mrb[0].mxu0
    %v521 = vadd.f32 0.0, %v520
    %v522 = vpop.f32.mrb[0].mxu0
    %v523 = vpop.f32.mrb[0].mxu0
    %v524 = vadd.f32 0.0, %v523
    %v525 = vpop.f32.mrb[0].mxu0
    %526 = vmatprep.mubr.bf16.mxu0 0
    %527 = vmatmul.mubr.bf16.gmra.mrb[0].mxu0 %v437
    %v528 = vpop.f32.mrb[0].mxu0
    %v529 = vadd.f32 0.0, %v528
    %v530 = vpop.f32.mrb[0].mxu0
    %v531 = vpop.f32.mrb[0].mxu0
    %v532 = vadd.f32 0.0, %v531
    %v533 = vpop.f32.mrb[0].mxu0
    %534 = vmatprep.mubr.bf16.mxu0 0
    %535 = vmatmul.mubr.bf16.gmra.mrb[0].mxu0 %v440
    %v536 = vpop.f32.mrb[0].mxu0
    %v537 = vadd.f32 0.0, %v536
    %v538 = vpop.f32.mrb[0].mxu0
    %v539 = vpop.f32.mrb[0].mxu0
    %v540 = vadd.f32 0.0, %v539
    %v541 = vpop.f32.mrb[0].mxu0
    %542 = vdwg.mxu0
    %v543 = vrot.slane %v375, 4
    %v544 = vadd.f32 %v375, %v543
    %v545 = vrot.slane %v544, 2
    %v546 = vadd.f32 %v544, %v545
    %v547 = vrot.slane %v546, 1
    %v548 = vadd.f32 %v546, %v547
    %549 = vmatprep.subr.bf16.mxu0 0
    %550 = vmatpush1.bf16.xpose.msra.mxu0 %v272
    %551 = vmatprep.subr.bf16.mxu0 0
    %552 = vmatpush1.bf16.xpose.msra.mxu0 %v273
    %553 = vmatprep.subr.bf16.mxu0 0
    %554 = vmatpush1.bf16.xpose.msra.mxu0 %v274
    %555 = vmatprep.subr.bf16.mxu0 0
    %556 = vmatpush1.bf16.xpose.msra.mxu0 %v275
    %557 = vmatprep.subr.bf16.mxu0 0
    %558 = vmatpush1.bf16.xpose.msra.mxu0 %v276
    %559 = vmatprep.subr.bf16.mxu0 0
    %560 = vmatpush1.bf16.xpose.msra.mxu0 %v277
    %561 = vmatprep.subr.bf16.mxu0 0
    %562 = vmatpush1.bf16.xpose.msra.mxu0 %v278
    %563 = vmatprep.subr.bf16.mxu0 0
    %564 = vmatpush1.bf16.xpose.msra.mxu0 %v279
    %565 = vmatprep.subr.bf16.mxu0 0
    %566 = vmatpush1.bf16.xpose.msra.mxu0 0
    %567 = vmatprep.subr.bf16.mxu0 0
    %568 = vmatpush1.bf16.xpose.msra.mxu0 0
    %569 = vmatprep.subr.bf16.mxu0 0
    %570 = vmatpush1.bf16.xpose.msra.mxu0 0
    %571 = vmatprep.subr.bf16.mxu0 0
    %572 = vmatpush1.bf16.xpose.msra.mxu0 0
    %573 = vmatprep.subr.bf16.mxu0 0
    %574 = vmatpush1.bf16.xpose.msra.mxu0 0
    %575 = vmatprep.subr.bf16.mxu0 0
    %576 = vmatpush1.bf16.xpose.msra.mxu0 0
    %577 = vmatprep.subr.bf16.mxu0 0
    %578 = vmatpush1.bf16.xpose.msra.mxu0 0
    %579 = vmatprep.subr.bf16.mxu0 0
    %580 = vmatpush1.bf16.xpose.msra.mxu0 0
    %581 = vmatprep.mubr.bf16.mxu0 0
    %582 = vmatmul.mubr.bf16.gmra.mrb[0].mxu0 %v376
    %v583 = vpop.f32.mrb[0].mxu0
    %v584 = vadd.f32 0.0, %v583
    %v585 = vpop.f32.mrb[0].mxu0
    %v586 = vpop.f32.mrb[0].mxu0
    %v587 = vpop.f32.mrb[0].mxu0
    %588 = vdwg.mxu0
    %vm589 = vcmp.gt.f32.partialorder %v321, 0.0
    %v590 = vsel %vm589, %v584, 0.0
    %v591 = vpack.c.bf16 %v590, %v590
    %v593 = vsel %vm417, %v158, 0
    %v596 = vsel %vm417, %v159, 0
    %v599 = vsel %vm417, %v160, 0
    %v602 = vsel %vm417, %v161, 0
    %v605 = vsel %vm417, %v162, 0
    %v608 = vsel %vm417, %v163, 0
    %v611 = vsel %vm417, %v164, 0
    %v614 = vsel %vm417, %v165, 0
    %v617 = vsel %vm417, %v166, 0
    %v620 = vsel %vm417, %v167, 0
    %v623 = vsel %vm417, %v168, 0
    %v626 = vsel %vm417, %v169, 0
    %v629 = vsel %vm417, %v170, 0
    %v632 = vsel %vm417, %v171, 0
    %v635 = vsel %vm417, %v172, 0
    %v638 = vsel %vm417, %v173, 0
    %v641 = vsel %vm442, %v591, 0
    %643 = vmatprep.subr.bf16.mxu0 0
    %644 = vmatpush1.bf16.msra.mxu0 %v641
    %645 = vmatprep.subr.bf16.mxu0 0
    %646 = vmatpush1.bf16.msra.mxu0 0
    %647 = vmatprep.subr.bf16.mxu0 0
    %648 = vmatpush1.bf16.msra.mxu0 0
    %649 = vmatprep.subr.bf16.mxu0 0
    %650 = vmatpush1.bf16.msra.mxu0 0
    %651 = vmatprep.subr.bf16.mxu0 0
    %652 = vmatpush1.bf16.msra.mxu0 0
    %653 = vmatprep.subr.bf16.mxu0 0
    %654 = vmatpush1.bf16.msra.mxu0 0
    %655 = vmatprep.subr.bf16.mxu0 0
    %656 = vmatpush1.bf16.msra.mxu0 0
    %657 = vmatprep.subr.bf16.mxu0 0
    %658 = vmatpush1.bf16.msra.mxu0 0
    %659 = vmatprep.subr.bf16.mxu0 0
    %660 = vmatpush1.bf16.msra.mxu0 0
    %661 = vmatprep.subr.bf16.mxu0 0
    %662 = vmatpush1.bf16.msra.mxu0 0
    %663 = vmatprep.subr.bf16.mxu0 0
    %664 = vmatpush1.bf16.msra.mxu0 0
    %665 = vmatprep.subr.bf16.mxu0 0
    %666 = vmatpush1.bf16.msra.mxu0 0
    %667 = vmatprep.subr.bf16.mxu0 0
    %668 = vmatpush1.bf16.msra.mxu0 0
    %669 = vmatprep.subr.bf16.mxu0 0
    %670 = vmatpush1.bf16.msra.mxu0 0
    %671 = vmatprep.subr.bf16.mxu0 0
    %672 = vmatpush1.bf16.msra.mxu0 0
    %673 = vmatprep.subr.bf16.mxu0 0
    %674 = vmatpush1.bf16.msra.mxu0 0
    %675 = vmatprep.mubr.bf16.mxu0 0
    %676 = vmatmul.mubr.bf16.gmra.mrb[0].mxu0 %v593
    %v677 = vpop.f32.mrb[0].mxu0
    %v678 = vadd.f32 0.0, %v677
    %v679 = vpop.f32.mrb[0].mxu0
    %v680 = vpop.f32.mrb[0].mxu0
    %v681 = vadd.f32 0.0, %v680
    %v682 = vpop.f32.mrb[0].mxu0
    %683 = vmatprep.mubr.bf16.mxu0 0
    %684 = vmatmul.mubr.bf16.gmra.mrb[0].mxu0 %v596
    %v685 = vpop.f32.mrb[0].mxu0
    %v686 = vadd.f32 0.0, %v685
    %v687 = vpop.f32.mrb[0].mxu0
    %v688 = vpop.f32.mrb[0].mxu0
    %v689 = vadd.f32 0.0, %v688
    %v690 = vpop.f32.mrb[0].mxu0
    %691 = vmatprep.mubr.bf16.mxu0 0
    %692 = vmatmul.mubr.bf16.gmra.mrb[0].mxu0 %v599
    %v693 = vpop.f32.mrb[0].mxu0
    %v694 = vadd.f32 0.0, %v693
    %v695 = vpop.f32.mrb[0].mxu0
    %v696 = vpop.f32.mrb[0].mxu0
    %v697 = vadd.f32 0.0, %v696
    %v698 = vpop.f32.mrb[0].mxu0
    %699 = vmatprep.mubr.bf16.mxu0 0
    %700 = vmatmul.mubr.bf16.gmra.mrb[0].mxu0 %v602
    %v701 = vpop.f32.mrb[0].mxu0
    %v702 = vadd.f32 0.0, %v701
    %v703 = vpop.f32.mrb[0].mxu0
    %v704 = vpop.f32.mrb[0].mxu0
    %v705 = vadd.f32 0.0, %v704
    %v706 = vpop.f32.mrb[0].mxu0
    %707 = vmatprep.mubr.bf16.mxu0 0
    %708 = vmatmul.mubr.bf16.gmra.mrb[0].mxu0 %v605
    %v709 = vpop.f32.mrb[0].mxu0
    %v710 = vadd.f32 0.0, %v709
    %v711 = vpop.f32.mrb[0].mxu0
    %v712 = vpop.f32.mrb[0].mxu0
    %v713 = vadd.f32 0.0, %v712
    %v714 = vpop.f32.mrb[0].mxu0
    %715 = vmatprep.mubr.bf16.mxu0 0
    %716 = vmatmul.mubr.bf16.gmra.mrb[0].mxu0 %v608
    %v717 = vpop.f32.mrb[0].mxu0
    %v718 = vadd.f32 0.0, %v717
    %v719 = vpop.f32.mrb[0].mxu0
    %v720 = vpop.f32.mrb[0].mxu0
    %v721 = vadd.f32 0.0, %v720
    %v722 = vpop.f32.mrb[0].mxu0
    %723 = vmatprep.mubr.bf16.mxu0 0
    %724 = vmatmul.mubr.bf16.gmra.mrb[0].mxu0 %v611
    %v725 = vpop.f32.mrb[0].mxu0
    %v726 = vadd.f32 0.0, %v725
    %v727 = vpop.f32.mrb[0].mxu0
    %v728 = vpop.f32.mrb[0].mxu0
    %v729 = vadd.f32 0.0, %v728
    %v730 = vpop.f32.mrb[0].mxu0
    %731 = vmatprep.mubr.bf16.mxu0 0
    %732 = vmatmul.mubr.bf16.gmra.mrb[0].mxu0 %v614
    %v733 = vpop.f32.mrb[0].mxu0
    %v734 = vadd.f32 0.0, %v733
    %v735 = vpop.f32.mrb[0].mxu0
    %v736 = vpop.f32.mrb[0].mxu0
    %v737 = vadd.f32 0.0, %v736
    %v738 = vpop.f32.mrb[0].mxu0
    %739 = vmatprep.mubr.bf16.mxu0 0
    %740 = vmatmul.mubr.bf16.gmra.mrb[0].mxu0 %v617
    %v741 = vpop.f32.mrb[0].mxu0
    %v742 = vadd.f32 0.0, %v741
    %v743 = vpop.f32.mrb[0].mxu0
    %v744 = vpop.f32.mrb[0].mxu0
    %v745 = vadd.f32 0.0, %v744
    %v746 = vpop.f32.mrb[0].mxu0
    %747 = vmatprep.mubr.bf16.mxu0 0
    %748 = vmatmul.mubr.bf16.gmra.mrb[0].mxu0 %v620
    %v749 = vpop.f32.mrb[0].mxu0
    %v750 = vadd.f32 0.0, %v749
    %v751 = vpop.f32.mrb[0].mxu0
    %v752 = vpop.f32.mrb[0].mxu0
    %v753 = vadd.f32 0.0, %v752
    %v754 = vpop.f32.mrb[0].mxu0
    %755 = vmatprep.mubr.bf16.mxu0 0
    %756 = vmatmul.mubr.bf16.gmra.mrb[0].mxu0 %v623
    %v757 = vpop.f32.mrb[0].mxu0
    %v758 = vadd.f32 0.0, %v757
    %v759 = vpop.f32.mrb[0].mxu0
    %v760 = vpop.f32.mrb[0].mxu0
    %v761 = vadd.f32 0.0, %v760
    %v762 = vpop.f32.mrb[0].mxu0
    %763 = vmatprep.mubr.bf16.mxu0 0
    %764 = vmatmul.mubr.bf16.gmra.mrb[0].mxu0 %v626
    %v765 = vpop.f32.mrb[0].mxu0
    %v766 = vadd.f32 0.0, %v765
    %v767 = vpop.f32.mrb[0].mxu0
    %v768 = vpop.f32.mrb[0].mxu0
    %v769 = vadd.f32 0.0, %v768
    %v770 = vpop.f32.mrb[0].mxu0
    %771 = vmatprep.mubr.bf16.mxu0 0
    %772 = vmatmul.mubr.bf16.gmra.mrb[0].mxu0 %v629
    %v773 = vpop.f32.mrb[0].mxu0
    %v774 = vadd.f32 0.0, %v773
    %v775 = vpop.f32.mrb[0].mxu0
    %v776 = vpop.f32.mrb[0].mxu0
    %v777 = vadd.f32 0.0, %v776
    %v778 = vpop.f32.mrb[0].mxu0
    %779 = vmatprep.mubr.bf16.mxu0 0
    %780 = vmatmul.mubr.bf16.gmra.mrb[0].mxu0 %v632
    %v781 = vpop.f32.mrb[0].mxu0
    %v782 = vadd.f32 0.0, %v781
    %v783 = vpop.f32.mrb[0].mxu0
    %v784 = vpop.f32.mrb[0].mxu0
    %v785 = vadd.f32 0.0, %v784
    %v786 = vpop.f32.mrb[0].mxu0
    %787 = vmatprep.mubr.bf16.mxu0 0
    %788 = vmatmul.mubr.bf16.gmra.mrb[0].mxu0 %v635
    %v789 = vpop.f32.mrb[0].mxu0
    %v790 = vadd.f32 0.0, %v789
    %v791 = vpop.f32.mrb[0].mxu0
    %v792 = vpop.f32.mrb[0].mxu0
    %v793 = vadd.f32 0.0, %v792
    %v794 = vpop.f32.mrb[0].mxu0
    %795 = vmatprep.mubr.bf16.mxu0 0
    %796 = vmatmul.mubr.bf16.gmra.mrb[0].mxu0 %v638
    %v797 = vpop.f32.mrb[0].mxu0
    %v798 = vadd.f32 0.0, %v797
    %v799 = vpop.f32.mrb[0].mxu0
    %v800 = vpop.f32.mrb[0].mxu0
    %v801 = vadd.f32 0.0, %v800
    %v802 = vpop.f32.mrb[0].mxu0
    %803 = vdwg.mxu0
    %v804 = vrot.slane %v590, 4
    %v805 = vadd.f32 %v590, %v804
    %v806 = vrot.slane %v805, 2
    %v807 = vadd.f32 %v805, %v806
    %v808 = vrot.slane %v807, 1
    %v809 = vadd.f32 %v807, %v808
    %v810 = vmul.f32 %v678, 0.01
    %v811 = vmul.f32 %v681, 0.01
    %v812 = vmul.f32 %v686, 0.01
    %v813 = vmul.f32 %v689, 0.01
    %v814 = vmul.f32 %v694, 0.01
    %v815 = vmul.f32 %v697, 0.01
    %v816 = vmul.f32 %v702, 0.01
    %v817 = vmul.f32 %v705, 0.01
    %v818 = vmul.f32 %v710, 0.01
    %v819 = vmul.f32 %v713, 0.01
    %v820 = vmul.f32 %v718, 0.01
    %v821 = vmul.f32 %v721, 0.01
    %v822 = vmul.f32 %v726, 0.01
    %v823 = vmul.f32 %v729, 0.01
    %v824 = vmul.f32 %v734, 0.01
    %v825 = vmul.f32 %v737, 0.01
    %v826 = vmul.f32 %v742, 0.01
    %v827 = vmul.f32 %v745, 0.01
    %v828 = vmul.f32 %v750, 0.01
    %v829 = vmul.f32 %v753, 0.01
    %v830 = vmul.f32 %v758, 0.01
    %v831 = vmul.f32 %v761, 0.01
    %v832 = vmul.f32 %v766, 0.01
    %v833 = vmul.f32 %v769, 0.01
    %v834 = vmul.f32 %v774, 0.01
    %v835 = vmul.f32 %v777, 0.01
    %v836 = vmul.f32 %v782, 0.01
    %v837 = vmul.f32 %v785, 0.01
    %v838 = vmul.f32 %v790, 0.01
    %v839 = vmul.f32 %v793, 0.01
    %v840 = vmul.f32 %v798, 0.01
    %v841 = vmul.f32 %v801, 0.01
    %v842 = vsub.f32 %v42, %v810
    %v843 = vsub.f32 %v43, %v811
    %v844 = vsub.f32 %v44, %v812
    %v845 = vsub.f32 %v45, %v813
    %v846 = vsub.f32 %v46, %v814
    %v847 = vsub.f32 %v47, %v815
    %v848 = vsub.f32 %v48, %v816
    %v849 = vsub.f32 %v49, %v817
    %v850 = vsub.f32 %v50, %v818
    %v851 = vsub.f32 %v51, %v819
    %v852 = vsub.f32 %v52, %v820
    %v853 = vsub.f32 %v53, %v821
    %v854 = vsub.f32 %v54, %v822
    %v855 = vsub.f32 %v55, %v823
    %v856 = vsub.f32 %v56, %v824
    %v857 = vsub.f32 %v57, %v825
    %v858 = vsub.f32 %v58, %v826
    %v859 = vsub.f32 %v59, %v827
    %v860 = vsub.f32 %v60, %v828
    %v861 = vsub.f32 %v61, %v829
    %v862 = vsub.f32 %v62, %v830
    %v863 = vsub.f32 %v63, %v831
    %v864 = vsub.f32 %v64, %v832
    %v865 = vsub.f32 %v65, %v833
    %v866 = vsub.f32 %v66, %v834
    %v867 = vsub.f32 %v67, %v835
    %v868 = vsub.f32 %v68, %v836
    %v869 = vsub.f32 %v69, %v837
    %v870 = vsub.f32 %v70, %v838
    %v871 = vsub.f32 %v71, %v839
    %v872 = vsub.f32 %v72, %v840
    %v873 = vsub.f32 %v73, %v841
    %v874 = vmul.f32 %v809, 0.01
    %v875 = vsub.f32 %v74, %v874
    %v876 = vmul.f32 %v481, 0.01
    %v877 = vmul.f32 %v484, 0.01
    %v878 = vmul.f32 %v489, 0.01
    %v879 = vmul.f32 %v492, 0.01
    %v880 = vmul.f32 %v497, 0.01
    %v881 = vmul.f32 %v500, 0.01
    %v882 = vmul.f32 %v505, 0.01
    %v883 = vmul.f32 %v508, 0.01
    %v884 = vmul.f32 %v513, 0.01
    %v885 = vmul.f32 %v516, 0.01
    %v886 = vmul.f32 %v521, 0.01
    %v887 = vmul.f32 %v524, 0.01
    %v888 = vmul.f32 %v529, 0.01
    %v889 = vmul.f32 %v532, 0.01
    %v890 = vmul.f32 %v537, 0.01
    %v891 = vmul.f32 %v540, 0.01
    %v892 = vsub.f32 %v75, %v876
    %v893 = vsub.f32 %v76, %v877
    %v894 = vsub.f32 %v77, %v878
    %v895 = vsub.f32 %v78, %v879
    %v896 = vsub.f32 %v79, %v880
    %v897 = vsub.f32 %v80, %v881
    %v898 = vsub.f32 %v81, %v882
    %v899 = vsub.f32 %v82, %v883
    %v900 = vsub.f32 %v83, %v884
    %v901 = vsub.f32 %v84, %v885
    %v902 = vsub.f32 %v85, %v886
    %v903 = vsub.f32 %v86, %v887
    %v904 = vsub.f32 %v87, %v888
    %v905 = vsub.f32 %v88, %v889
    %v906 = vsub.f32 %v89, %v890
    %v907 = vsub.f32 %v90, %v891
    %v908 = vmul.f32 %v548, 0.01
    %v909 = vsub.f32 %v91, %v908
    %v910 = vpack.c.bf16 %v843, %v842
    %v911 = vpack.c.bf16 %v845, %v844
    %v912 = vpack.c.bf16 %v847, %v846
    %v913 = vpack.c.bf16 %v849, %v848
    %v914 = vpack.c.bf16 %v851, %v850
    %v915 = vpack.c.bf16 %v853, %v852
    %v916 = vpack.c.bf16 %v855, %v854
    %v917 = vpack.c.bf16 %v857, %v856
    %v918 = vpack.c.bf16 %v859, %v858
    %v919 = vpack.c.bf16 %v861, %v860
    %v920 = vpack.c.bf16 %v863, %v862
    %v921 = vpack.c.bf16 %v865, %v864
    %v922 = vpack.c.bf16 %v867, %v866
    %v923 = vpack.c.bf16 %v869, %v868
    %v924 = vpack.c.bf16 %v871, %v870
    %v925 = vpack.c.bf16 %v873, %v872
    %v926 = vpack.c.bf16 %v893, %v892
    %v927 = vpack.c.bf16 %v895, %v894
    %v928 = vpack.c.bf16 %v897, %v896
    %v929 = vpack.c.bf16 %v899, %v898
    %v930 = vpack.c.bf16 %v901, %v900
    %v931 = vpack.c.bf16 %v903, %v902
    %v932 = vpack.c.bf16 %v905, %v904
    %v933 = vpack.c.bf16 %v907, %v906
    %v935 = vlaneseq
    %v936 = vshrl.u32 %v935, 7
    %v937 = vsub.s32 0, %v936
    %v938 = vrot.slane %v875, %v937
    %940 = vmatprep.subr.bf16.mxu0 0
    %941 = vmatpush1.bf16.msra.mxu0 %v910
    %942 = vmatprep.subr.bf16.mxu0 0
    %943 = vmatpush1.bf16.msra.mxu0 %v911
    %944 = vmatprep.subr.bf16.mxu0 0
    %945 = vmatpush1.bf16.msra.mxu0 %v912
    %946 = vmatprep.subr.bf16.mxu0 0
    %947 = vmatpush1.bf16.msra.mxu0 %v913
    %948 = vmatprep.subr.bf16.mxu0 0
    %949 = vmatpush1.bf16.msra.mxu0 %v914
    %950 = vmatprep.subr.bf16.mxu0 0
    %951 = vmatpush1.bf16.msra.mxu0 %v915
    %952 = vmatprep.subr.bf16.mxu0 0
    %953 = vmatpush1.bf16.msra.mxu0 %v916
    %954 = vmatprep.subr.bf16.mxu0 0
    %955 = vmatpush1.bf16.msra.mxu0 %v917
    %956 = vmatprep.subr.bf16.mxu0 0
    %957 = vmatpush1.bf16.msra.mxu0 %v918
    %958 = vmatprep.subr.bf16.mxu0 0
    %959 = vmatpush1.bf16.msra.mxu0 %v919
    %960 = vmatprep.subr.bf16.mxu0 0
    %961 = vmatpush1.bf16.msra.mxu0 %v920
    %962 = vmatprep.subr.bf16.mxu0 0
    %963 = vmatpush1.bf16.msra.mxu0 %v921
    %964 = vmatprep.subr.bf16.mxu0 0
    %965 = vmatpush1.bf16.msra.mxu0 %v922
    %966 = vmatprep.subr.bf16.mxu0 0
    %967 = vmatpush1.bf16.msra.mxu0 %v923
    %968 = vmatprep.subr.bf16.mxu0 0
    %969 = vmatpush1.bf16.msra.mxu0 %v924
    %970 = vmatprep.subr.bf16.mxu0 0
    %971 = vmatpush1.bf16.msra.mxu0 %v925
    %972 = vmatprep.mubr.bf16.mxu0 %v93
    %973 = vmatmul.mubr.bf16.gmra.mrb[0].mxu0 %v92
    %v974 = vpop.f32.mrb[0].mxu0
    %v975 = vadd.f32 %v938, %v974
    %v976 = vpop.f32.mrb[0].mxu0
    %v977 = vpop.f32.mrb[0].mxu0
    %v978 = vpop.f32.mrb[0].mxu0
    %979 = vdwg.mxu0
    %v980 = vmax.f32 %v975, 0.0
    %v981 = vpack.c.bf16 %v980, %v980
    %v983 = vlaneseq
    %v984 = vshrl.u32 %v983, 7
    %v985 = vsub.s32 0, %v984
    %v986 = vrot.slane %v909, %v985
    %988 = vmatprep.subr.bf16.mxu0 0
    %989 = vmatpush1.bf16.msra.mxu0 %v926
    %990 = vmatprep.subr.bf16.mxu0 0
    %991 = vmatpush1.bf16.msra.mxu0 %v927
    %992 = vmatprep.subr.bf16.mxu0 0
    %993 = vmatpush1.bf16.msra.mxu0 %v928
    %994 = vmatprep.subr.bf16.mxu0 0
    %995 = vmatpush1.bf16.msra.mxu0 %v929
    %996 = vmatprep.subr.bf16.mxu0 0
    %997 = vmatpush1.bf16.msra.mxu0 %v930
    %998 = vmatprep.subr.bf16.mxu0 0
    %999 = vmatpush1.bf16.msra.mxu0 %v931
    %1000 = vmatprep.subr.bf16.mxu0 0
    %1001 = vmatpush1.bf16.msra.mxu0 %v932
    %1002 = vmatprep.subr.bf16.mxu0 0
    %1003 = vmatpush1.bf16.msra.mxu0 %v933
    %1004 = vmatprep.subr.bf16.mxu0 0
    %1005 = vmatpush1.bf16.msra.mxu0 0
    %1006 = vmatprep.subr.bf16.mxu0 0
    %1007 = vmatpush1.bf16.msra.mxu0 0
    %1008 = vmatprep.subr.bf16.mxu0 0
    %1009 = vmatpush1.bf16.msra.mxu0 0
    %1010 = vmatprep.subr.bf16.mxu0 0
    %1011 = vmatpush1.bf16.msra.mxu0 0
    %1012 = vmatprep.subr.bf16.mxu0 0
    %1013 = vmatpush1.bf16.msra.mxu0 0
    %1014 = vmatprep.subr.bf16.mxu0 0
    %1015 = vmatpush1.bf16.msra.mxu0 0
    %1016 = vmatprep.subr.bf16.mxu0 0
    %1017 = vmatpush1.bf16.msra.mxu0 0
    %1018 = vmatprep.subr.bf16.mxu0 0
    %1019 = vmatpush1.bf16.msra.mxu0 0
    %1020 = vmatprep.mubr.bf16.mxu0 0
    %1021 = vmatmul.mubr.bf16.gmra.mrb[0].mxu0 %v981
    %v1022 = vpop.f32.mrb[0].mxu0
    %v1023 = vadd.f32 %v986, %v1022
    %v1024 = vpop.f32.mrb[0].mxu0
    %v1025 = vpop.f32.mrb[0].mxu0
    %v1026 = vpop.f32.mrb[0].mxu0
    %1027 = vdwg.mxu0
    %v1028 = vsub.f32 %v1023, %v38
    %v1029 = vmul.f32 %v1028, 0.015625
    %v1030 = vpack.c.bf16 %v1029, %v1029
    %1031 = vxpose.xlu0.b32.start [1/16] %v980, 128
    %1032 = vxpose.xlu0.b32.cont [2/16] 0.0, 128
    %1033 = vxpose.xlu0.b32.cont [3/16] 0.0, 128
    %1034 = vxpose.xlu0.b32.cont [4/16] 0.0, 128
    %1035 = vxpose.xlu0.b32.cont [5/16] 0.0, 128
    %1036 = vxpose.xlu0.b32.cont [6/16] 0.0, 128
    %1037 = vxpose.xlu0.b32.cont [7/16] 0.0, 128
    %1038 = vxpose.xlu0.b32.cont [8/16] 0.0, 128
    %1039 = vxpose.xlu0.b32.cont [9/16] 0.0, 128
    %1040 = vxpose.xlu0.b32.cont [10/16] 0.0, 128
    %1041 = vxpose.xlu0.b32.cont [11/16] 0.0, 128
    %1042 = vxpose.xlu0.b32.cont [12/16] 0.0, 128
    %1043 = vxpose.xlu0.b32.cont [13/16] 0.0, 128
    %1044 = vxpose.xlu0.b32.cont [14/16] 0.0, 128
    %1045 = vxpose.xlu0.b32.cont [15/16] 0.0, 128
    %1046 = vxpose.xlu0.b32.end [16/16] 0.0, 128
    %v1047 = vpop.trf.xlu0
    %v1048 = vpop.trf.xlu0
    %v1049 = vpop.trf.xlu0
    %v1050 = vpop.trf.xlu0
    %v1051 = vpop.trf.xlu0
    %v1052 = vpop.trf.xlu0
    %v1053 = vpop.trf.xlu0
    %v1054 = vpop.trf.xlu0
    %v1055 = vpop.trf.xlu0
    %v1056 = vpop.trf.xlu0
    %v1057 = vpop.trf.xlu0
    %v1058 = vpop.trf.xlu0
    %v1059 = vpop.trf.xlu0
    %v1060 = vpop.trf.xlu0
    %v1061 = vpop.trf.xlu0
    %v1062 = vpop.trf.xlu0
    %v1063 = vpack.c.bf16 %v1048, %v1047
    %v1064 = vpack.c.bf16 %v1050, %v1049
    %v1065 = vpack.c.bf16 %v1052, %v1051
    %v1066 = vpack.c.bf16 %v1054, %v1053
    %v1067 = vpack.c.bf16 %v1056, %v1055
    %v1068 = vpack.c.bf16 %v1058, %v1057
    %v1069 = vpack.c.bf16 %v1060, %v1059
    %v1070 = vpack.c.bf16 %v1062, %v1061
    %v1072 = vsel %vm417, %v1063, 0
    %v1075 = vsel %vm417, %v1064, 0
    %v1078 = vsel %vm417, %v1065, 0
    %v1081 = vsel %vm417, %v1066, 0
    %v1084 = vsel %vm417, %v1067, 0
    %v1087 = vsel %vm417, %v1068, 0
    %v1090 = vsel %vm417, %v1069, 0
    %v1093 = vsel %vm417, %v1070, 0
    %v1096 = vsel %vm442, %v1030, 0
    %1098 = vmatprep.subr.bf16.mxu0 0
    %1099 = vmatpush1.bf16.msra.mxu0 %v1096
    %1100 = vmatprep.subr.bf16.mxu0 0
    %1101 = vmatpush1.bf16.msra.mxu0 0
    %1102 = vmatprep.subr.bf16.mxu0 0
    %1103 = vmatpush1.bf16.msra.mxu0 0
    %1104 = vmatprep.subr.bf16.mxu0 0
    %1105 = vmatpush1.bf16.msra.mxu0 0
    %1106 = vmatprep.subr.bf16.mxu0 0
    %1107 = vmatpush1.bf16.msra.mxu0 0
    %1108 = vmatprep.subr.bf16.mxu0 0
    %1109 = vmatpush1.bf16.msra.mxu0 0
    %1110 = vmatprep.subr.bf16.mxu0 0
    %1111 = vmatpush1.bf16.msra.mxu0 0
    %1112 = vmatprep.subr.bf16.mxu0 0
    %1113 = vmatpush1.bf16.msra.mxu0 0
    %1114 = vmatprep.subr.bf16.mxu0 0
    %1115 = vmatpush1.bf16.msra.mxu0 0
    %1116 = vmatprep.subr.bf16.mxu0 0
    %1117 = vmatpush1.bf16.msra.mxu0 0
    %1118 = vmatprep.subr.bf16.mxu0 0
    %1119 = vmatpush1.bf16.msra.mxu0 0
    %1120 = vmatprep.subr.bf16.mxu0 0
    %1121 = vmatpush1.bf16.msra.mxu0 0
    %1122 = vmatprep.subr.bf16.mxu0 0
    %1123 = vmatpush1.bf16.msra.mxu0 0
    %1124 = vmatprep.subr.bf16.mxu0 0
    %1125 = vmatpush1.bf16.msra.mxu0 0
    %1126 = vmatprep.subr.bf16.mxu0 0
    %1127 = vmatpush1.bf16.msra.mxu0 0
    %1128 = vmatprep.subr.bf16.mxu0 0
    %1129 = vmatpush1.bf16.msra.mxu0 0
    %1130 = vmatprep.mubr.bf16.mxu0 0
    %1131 = vmatmul.mubr.bf16.gmra.mrb[0].mxu0 %v1072
    %v1132 = vpop.f32.mrb[0].mxu0
    %v1133 = vadd.f32 0.0, %v1132
    %v1134 = vpop.f32.mrb[0].mxu0
    %v1135 = vpop.f32.mrb[0].mxu0
    %v1136 = vadd.f32 0.0, %v1135
    %v1137 = vpop.f32.mrb[0].mxu0
    %1138 = vmatprep.mubr.bf16.mxu0 0
    %1139 = vmatmul.mubr.bf16.gmra.mrb[0].mxu0 %v1075
    %v1140 = vpop.f32.mrb[0].mxu0
    %v1141 = vadd.f32 0.0, %v1140
    %v1142 = vpop.f32.mrb[0].mxu0
    %v1143 = vpop.f32.mrb[0].mxu0
    %v1144 = vadd.f32 0.0, %v1143
    %v1145 = vpop.f32.mrb[0].mxu0
    %1146 = vmatprep.mubr.bf16.mxu0 0
    %1147 = vmatmul.mubr.bf16.gmra.mrb[0].mxu0 %v1078
    %v1148 = vpop.f32.mrb[0].mxu0
    %v1149 = vadd.f32 0.0, %v1148
    %v1150 = vpop.f32.mrb[0].mxu0
    %v1151 = vpop.f32.mrb[0].mxu0
    %v1152 = vadd.f32 0.0, %v1151
    %v1153 = vpop.f32.mrb[0].mxu0
    %1154 = vmatprep.mubr.bf16.mxu0 0
    %1155 = vmatmul.mubr.bf16.gmra.mrb[0].mxu0 %v1081
    %v1156 = vpop.f32.mrb[0].mxu0
    %v1157 = vadd.f32 0.0, %v1156
    %v1158 = vpop.f32.mrb[0].mxu0
    %v1159 = vpop.f32.mrb[0].mxu0
    %v1160 = vadd.f32 0.0, %v1159
    %v1161 = vpop.f32.mrb[0].mxu0
    %1162 = vmatprep.mubr.bf16.mxu0 0
    %1163 = vmatmul.mubr.bf16.gmra.mrb[0].mxu0 %v1084
    %v1164 = vpop.f32.mrb[0].mxu0
    %v1165 = vadd.f32 0.0, %v1164
    %v1166 = vpop.f32.mrb[0].mxu0
    %v1167 = vpop.f32.mrb[0].mxu0
    %v1168 = vadd.f32 0.0, %v1167
    %v1169 = vpop.f32.mrb[0].mxu0
    %1170 = vmatprep.mubr.bf16.mxu0 0
    %1171 = vmatmul.mubr.bf16.gmra.mrb[0].mxu0 %v1087
    %v1172 = vpop.f32.mrb[0].mxu0
    %v1173 = vadd.f32 0.0, %v1172
    %v1174 = vpop.f32.mrb[0].mxu0
    %v1175 = vpop.f32.mrb[0].mxu0
    %v1176 = vadd.f32 0.0, %v1175
    %v1177 = vpop.f32.mrb[0].mxu0
    %1178 = vmatprep.mubr.bf16.mxu0 0
    %1179 = vmatmul.mubr.bf16.gmra.mrb[0].mxu0 %v1090
    %v1180 = vpop.f32.mrb[0].mxu0
    %v1181 = vadd.f32 0.0, %v1180
    %v1182 = vpop.f32.mrb[0].mxu0
    %v1183 = vpop.f32.mrb[0].mxu0
    %v1184 = vadd.f32 0.0, %v1183
    %v1185 = vpop.f32.mrb[0].mxu0
    %1186 = vmatprep.mubr.bf16.mxu0 0
    %1187 = vmatmul.mubr.bf16.gmra.mrb[0].mxu0 %v1093
    %v1188 = vpop.f32.mrb[0].mxu0
    %v1189 = vadd.f32 0.0, %v1188
    %v1190 = vpop.f32.mrb[0].mxu0
    %v1191 = vpop.f32.mrb[0].mxu0
    %v1192 = vadd.f32 0.0, %v1191
    %v1193 = vpop.f32.mrb[0].mxu0
    %1194 = vdwg.mxu0
    %v1195 = vrot.slane %v1029, 4
    %v1196 = vadd.f32 %v1029, %v1195
    %v1197 = vrot.slane %v1196, 2
    %v1198 = vadd.f32 %v1196, %v1197
    %v1199 = vrot.slane %v1198, 1
    %v1200 = vadd.f32 %v1198, %v1199
    %1201 = vmatprep.subr.bf16.mxu0 0
    %1202 = vmatpush1.bf16.xpose.msra.mxu0 %v926
    %1203 = vmatprep.subr.bf16.mxu0 0
    %1204 = vmatpush1.bf16.xpose.msra.mxu0 %v927
    %1205 = vmatprep.subr.bf16.mxu0 0
    %1206 = vmatpush1.bf16.xpose.msra.mxu0 %v928
    %1207 = vmatprep.subr.bf16.mxu0 0
    %1208 = vmatpush1.bf16.xpose.msra.mxu0 %v929
    %1209 = vmatprep.subr.bf16.mxu0 0
    %1210 = vmatpush1.bf16.xpose.msra.mxu0 %v930
    %1211 = vmatprep.subr.bf16.mxu0 0
    %1212 = vmatpush1.bf16.xpose.msra.mxu0 %v931
    %1213 = vmatprep.subr.bf16.mxu0 0
    %1214 = vmatpush1.bf16.xpose.msra.mxu0 %v932
    %1215 = vmatprep.subr.bf16.mxu0 0
    %1216 = vmatpush1.bf16.xpose.msra.mxu0 %v933
    %1217 = vmatprep.subr.bf16.mxu0 0
    %1218 = vmatpush1.bf16.xpose.msra.mxu0 0
    %1219 = vmatprep.subr.bf16.mxu0 0
    %1220 = vmatpush1.bf16.xpose.msra.mxu0 0
    %1221 = vmatprep.subr.bf16.mxu0 0
    %1222 = vmatpush1.bf16.xpose.msra.mxu0 0
    %1223 = vmatprep.subr.bf16.mxu0 0
    %1224 = vmatpush1.bf16.xpose.msra.mxu0 0
    %1225 = vmatprep.subr.bf16.mxu0 0
    %1226 = vmatpush1.bf16.xpose.msra.mxu0 0
    %1227 = vmatprep.subr.bf16.mxu0 0
    %1228 = vmatpush1.bf16.xpose.msra.mxu0 0
    %1229 = vmatprep.subr.bf16.mxu0 0
    %1230 = vmatpush1.bf16.xpose.msra.mxu0 0
    %1231 = vmatprep.subr.bf16.mxu0 0
    %1232 = vmatpush1.bf16.xpose.msra.mxu0 0
    %1233 = vmatprep.mubr.bf16.mxu0 0
    %1234 = vmatmul.mubr.bf16.gmra.mrb[0].mxu0 %v1030
    %v1235 = vpop.f32.mrb[0].mxu0
    %v1236 = vadd.f32 0.0, %v1235
    %v1237 = vpop.f32.mrb[0].mxu0
    %v1238 = vpop.f32.mrb[0].mxu0
    %v1239 = vpop.f32.mrb[0].mxu0
    %1240 = vdwg.mxu0
    %vm1241 = vcmp.gt.f32.partialorder %v975, 0.0
    %v1242 = vsel %vm1241, %v1236, 0.0
    %v1243 = vpack.c.bf16 %v1242, %v1242
    %v1245 = vsel %vm442, %v1243, 0
    %1247 = vmatprep.subr.bf16.mxu0 0
    %1248 = vmatpush1.bf16.msra.mxu0 %v1245
    %1249 = vmatprep.subr.bf16.mxu0 0
    %1250 = vmatpush1.bf16.msra.mxu0 0
    %1251 = vmatprep.subr.bf16.mxu0 0
    %1252 = vmatpush1.bf16.msra.mxu0 0
    %1253 = vmatprep.subr.bf16.mxu0 0
    %1254 = vmatpush1.bf16.msra.mxu0 0
    %1255 = vmatprep.subr.bf16.mxu0 0
    %1256 = vmatpush1.bf16.msra.mxu0 0
    %1257 = vmatprep.subr.bf16.mxu0 0
    %1258 = vmatpush1.bf16.msra.mxu0 0
    %1259 = vmatprep.subr.bf16.mxu0 0
    %1260 = vmatpush1.bf16.msra.mxu0 0
    %1261 = vmatprep.subr.bf16.mxu0 0
    %1262 = vmatpush1.bf16.msra.mxu0 0
    %1263 = vmatprep.subr.bf16.mxu0 0
    %1264 = vmatpush1.bf16.msra.mxu0 0
    %1265 = vmatprep.subr.bf16.mxu0 0
    %1266 = vmatpush1.bf16.msra.mxu0 0
    %1267 = vmatprep.subr.bf16.mxu0 0
    %1268 = vmatpush1.bf16.msra.mxu0 0
    %1269 = vmatprep.subr.bf16.mxu0 0
    %1270 = vmatpush1.bf16.msra.mxu0 0
    %1271 = vmatprep.subr.bf16.mxu0 0
    %1272 = vmatpush1.bf16.msra.mxu0 0
    %1273 = vmatprep.subr.bf16.mxu0 0
    %1274 = vmatpush1.bf16.msra.mxu0 0
    %1275 = vmatprep.subr.bf16.mxu0 0
    %1276 = vmatpush1.bf16.msra.mxu0 0
    %1277 = vmatprep.subr.bf16.mxu0 0
    %1278 = vmatpush1.bf16.msra.mxu0 0
    %1279 = vmatprep.mubr.bf16.mxu0 0
    %1280 = vmatmul.mubr.bf16.gmra.mrb[0].mxu0 %v593
    %v1281 = vpop.f32.mrb[0].mxu0
    %v1282 = vadd.f32 0.0, %v1281
    %v1283 = vpop.f32.mrb[0].mxu0
    %v1284 = vpop.f32.mrb[0].mxu0
    %v1285 = vadd.f32 0.0, %v1284
    %v1286 = vpop.f32.mrb[0].mxu0
    %1287 = vmatprep.mubr.bf16.mxu0 0
    %1288 = vmatmul.mubr.bf16.gmra.mrb[0].mxu0 %v596
    %v1289 = vpop.f32.mrb[0].mxu0
    %v1290 = vadd.f32 0.0, %v1289
    %v1291 = vpop.f32.mrb[0].mxu0
    %v1292 = vpop.f32.mrb[0].mxu0
    %v1293 = vadd.f32 0.0, %v1292
    %v1294 = vpop.f32.mrb[0].mxu0
    %1295 = vmatprep.mubr.bf16.mxu0 0
    %1296 = vmatmul.mubr.bf16.gmra.mrb[0].mxu0 %v599
    %v1297 = vpop.f32.mrb[0].mxu0
    %v1298 = vadd.f32 0.0, %v1297
    %v1299 = vpop.f32.mrb[0].mxu0
    %v1300 = vpop.f32.mrb[0].mxu0
    %v1301 = vadd.f32 0.0, %v1300
    %v1302 = vpop.f32.mrb[0].mxu0
    %1303 = vmatprep.mubr.bf16.mxu0 0
    %1304 = vmatmul.mubr.bf16.gmra.mrb[0].mxu0 %v602
    %v1305 = vpop.f32.mrb[0].mxu0
    %v1306 = vadd.f32 0.0, %v1305
    %v1307 = vpop.f32.mrb[0].mxu0
    %v1308 = vpop.f32.mrb[0].mxu0
    %v1309 = vadd.f32 0.0, %v1308
    %v1310 = vpop.f32.mrb[0].mxu0
    %1311 = vmatprep.mubr.bf16.mxu0 0
    %1312 = vmatmul.mubr.bf16.gmra.mrb[0].mxu0 %v605
    %v1313 = vpop.f32.mrb[0].mxu0
    %v1314 = vadd.f32 0.0, %v1313
    %v1315 = vpop.f32.mrb[0].mxu0
    %v1316 = vpop.f32.mrb[0].mxu0
    %v1317 = vadd.f32 0.0, %v1316
    %v1318 = vpop.f32.mrb[0].mxu0
    %1319 = vmatprep.mubr.bf16.mxu0 0
    %1320 = vmatmul.mubr.bf16.gmra.mrb[0].mxu0 %v608
    %v1321 = vpop.f32.mrb[0].mxu0
    %v1322 = vadd.f32 0.0, %v1321
    %v1323 = vpop.f32.mrb[0].mxu0
    %v1324 = vpop.f32.mrb[0].mxu0
    %v1325 = vadd.f32 0.0, %v1324
    %v1326 = vpop.f32.mrb[0].mxu0
    %1327 = vmatprep.mubr.bf16.mxu0 0
    %1328 = vmatmul.mubr.bf16.gmra.mrb[0].mxu0 %v611
    %v1329 = vpop.f32.mrb[0].mxu0
    %v1330 = vadd.f32 0.0, %v1329
    %v1331 = vpop.f32.mrb[0].mxu0
    %v1332 = vpop.f32.mrb[0].mxu0
    %v1333 = vadd.f32 0.0, %v1332
    %v1334 = vpop.f32.mrb[0].mxu0
    %1335 = vmatprep.mubr.bf16.mxu0 0
    %1336 = vmatmul.mubr.bf16.gmra.mrb[0].mxu0 %v614
    %v1337 = vpop.f32.mrb[0].mxu0
    %v1338 = vadd.f32 0.0, %v1337
    %v1339 = vpop.f32.mrb[0].mxu0
    %v1340 = vpop.f32.mrb[0].mxu0
    %v1341 = vadd.f32 0.0, %v1340
    %v1342 = vpop.f32.mrb[0].mxu0
    %1343 = vmatprep.mubr.bf16.mxu0 0
    %1344 = vmatmul.mubr.bf16.gmra.mrb[0].mxu0 %v617
    %v1345 = vpop.f32.mrb[0].mxu0
    %v1346 = vadd.f32 0.0, %v1345
    %v1347 = vpop.f32.mrb[0].mxu0
    %v1348 = vpop.f32.mrb[0].mxu0
    %v1349 = vadd.f32 0.0, %v1348
    %v1350 = vpop.f32.mrb[0].mxu0
    %1351 = vmatprep.mubr.bf16.mxu0 0
    %1352 = vmatmul.mubr.bf16.gmra.mrb[0].mxu0 %v620
    %v1353 = vpop.f32.mrb[0].mxu0
    %v1354 = vadd.f32 0.0, %v1353
    %v1355 = vpop.f32.mrb[0].mxu0
    %v1356 = vpop.f32.mrb[0].mxu0
    %v1357 = vadd.f32 0.0, %v1356
    %v1358 = vpop.f32.mrb[0].mxu0
    %1359 = vmatprep.mubr.bf16.mxu0 0
    %1360 = vmatmul.mubr.bf16.gmra.mrb[0].mxu0 %v623
    %v1361 = vpop.f32.mrb[0].mxu0
    %v1362 = vadd.f32 0.0, %v1361
    %v1363 = vpop.f32.mrb[0].mxu0
    %v1364 = vpop.f32.mrb[0].mxu0
    %v1365 = vadd.f32 0.0, %v1364
    %v1366 = vpop.f32.mrb[0].mxu0
    %1367 = vmatprep.mubr.bf16.mxu0 0
    %1368 = vmatmul.mubr.bf16.gmra.mrb[0].mxu0 %v626
    %v1369 = vpop.f32.mrb[0].mxu0
    %v1370 = vadd.f32 0.0, %v1369
    %v1371 = vpop.f32.mrb[0].mxu0
    %v1372 = vpop.f32.mrb[0].mxu0
    %v1373 = vadd.f32 0.0, %v1372
    %v1374 = vpop.f32.mrb[0].mxu0
    %1375 = vmatprep.mubr.bf16.mxu0 0
    %1376 = vmatmul.mubr.bf16.gmra.mrb[0].mxu0 %v629
    %v1377 = vpop.f32.mrb[0].mxu0
    %v1378 = vadd.f32 0.0, %v1377
    %v1379 = vpop.f32.mrb[0].mxu0
    %v1380 = vpop.f32.mrb[0].mxu0
    %v1381 = vadd.f32 0.0, %v1380
    %v1382 = vpop.f32.mrb[0].mxu0
    %1383 = vmatprep.mubr.bf16.mxu0 0
    %1384 = vmatmul.mubr.bf16.gmra.mrb[0].mxu0 %v632
    %v1385 = vpop.f32.mrb[0].mxu0
    %v1386 = vadd.f32 0.0, %v1385
    %v1387 = vpop.f32.mrb[0].mxu0
    %v1388 = vpop.f32.mrb[0].mxu0
    %v1389 = vadd.f32 0.0, %v1388
    %v1390 = vpop.f32.mrb[0].mxu0
    %1391 = vmatprep.mubr.bf16.mxu0 0
    %1392 = vmatmul.mubr.bf16.gmra.mrb[0].mxu0 %v635
    %v1393 = vpop.f32.mrb[0].mxu0
    %v1394 = vadd.f32 0.0, %v1393
    %v1395 = vpop.f32.mrb[0].mxu0
    %v1396 = vpop.f32.mrb[0].mxu0
    %v1397 = vadd.f32 0.0, %v1396
    %v1398 = vpop.f32.mrb[0].mxu0
    %1399 = vmatprep.mubr.bf16.mxu0 0
    %1400 = vmatmul.mubr.bf16.gmra.mrb[0].mxu0 %v638
    %v1401 = vpop.f32.mrb[0].mxu0
    %v1402 = vadd.f32 0.0, %v1401
    %v1403 = vpop.f32.mrb[0].mxu0
    %v1404 = vpop.f32.mrb[0].mxu0
    %v1405 = vadd.f32 0.0, %v1404
    %v1406 = vpop.f32.mrb[0].mxu0
    %1407 = vdwg.mxu0
    %v1408 = vrot.slane %v1242, 4
    %v1409 = vadd.f32 %v1242, %v1408
    %v1410 = vrot.slane %v1409, 2
    %v1411 = vadd.f32 %v1409, %v1410
    %v1412 = vrot.slane %v1411, 1
    %v1413 = vadd.f32 %v1411, %v1412
    %v1414 = vmul.f32 %v1282, 0.01
    %v1415 = vmul.f32 %v1285, 0.01
    %v1416 = vmul.f32 %v1290, 0.01
    %v1417 = vmul.f32 %v1293, 0.01
    %v1418 = vmul.f32 %v1298, 0.01
    %v1419 = vmul.f32 %v1301, 0.01
    %v1420 = vmul.f32 %v1306, 0.01
    %v1421 = vmul.f32 %v1309, 0.01
    %v1422 = vmul.f32 %v1314, 0.01
    %v1423 = vmul.f32 %v1317, 0.01
    %v1424 = vmul.f32 %v1322, 0.01
    %v1425 = vmul.f32 %v1325, 0.01
    %v1426 = vmul.f32 %v1330, 0.01
    %v1427 = vmul.f32 %v1333, 0.01
    %v1428 = vmul.f32 %v1338, 0.01
    %v1429 = vmul.f32 %v1341, 0.01
    %v1430 = vmul.f32 %v1346, 0.01
    %v1431 = vmul.f32 %v1349, 0.01
    %v1432 = vmul.f32 %v1354, 0.01
    %v1433 = vmul.f32 %v1357, 0.01
    %v1434 = vmul.f32 %v1362, 0.01
    %v1435 = vmul.f32 %v1365, 0.01
    %v1436 = vmul.f32 %v1370, 0.01
    %v1437 = vmul.f32 %v1373, 0.01
    %v1438 = vmul.f32 %v1378, 0.01
    %v1439 = vmul.f32 %v1381, 0.01
    %v1440 = vmul.f32 %v1386, 0.01
    %v1441 = vmul.f32 %v1389, 0.01
    %v1442 = vmul.f32 %v1394, 0.01
    %v1443 = vmul.f32 %v1397, 0.01
    %v1444 = vmul.f32 %v1402, 0.01
    %v1445 = vmul.f32 %v1405, 0.01
    %v1446 = vsub.f32 %v842, %v1414
    %v1447 = vsub.f32 %v843, %v1415
    %v1448 = vsub.f32 %v844, %v1416
    %v1449 = vsub.f32 %v845, %v1417
    %v1450 = vsub.f32 %v846, %v1418
    %v1451 = vsub.f32 %v847, %v1419
    %v1452 = vsub.f32 %v848, %v1420
    %v1453 = vsub.f32 %v849, %v1421
    %v1454 = vsub.f32 %v850, %v1422
    %v1455 = vsub.f32 %v851, %v1423
    %v1456 = vsub.f32 %v852, %v1424
    %v1457 = vsub.f32 %v853, %v1425
    %v1458 = vsub.f32 %v854, %v1426
    %v1459 = vsub.f32 %v855, %v1427
    %v1460 = vsub.f32 %v856, %v1428
    %v1461 = vsub.f32 %v857, %v1429
    %v1462 = vsub.f32 %v858, %v1430
    %v1463 = vsub.f32 %v859, %v1431
    %v1464 = vsub.f32 %v860, %v1432
    %v1465 = vsub.f32 %v861, %v1433
    %v1466 = vsub.f32 %v862, %v1434
    %v1467 = vsub.f32 %v863, %v1435
    %v1468 = vsub.f32 %v864, %v1436
    %v1469 = vsub.f32 %v865, %v1437
    %v1470 = vsub.f32 %v866, %v1438
    %v1471 = vsub.f32 %v867, %v1439
    %v1472 = vsub.f32 %v868, %v1440
    %v1473 = vsub.f32 %v869, %v1441
    %v1474 = vsub.f32 %v870, %v1442
    %v1475 = vsub.f32 %v871, %v1443
    %v1476 = vsub.f32 %v872, %v1444
    %v1477 = vsub.f32 %v873, %v1445
    %v1478 = vmul.f32 %v1413, 0.01
    %v1479 = vsub.f32 %v875, %v1478
    %v1480 = vmul.f32 %v1133, 0.01
    %v1481 = vmul.f32 %v1136, 0.01
    %v1482 = vmul.f32 %v1141, 0.01
    %v1483 = vmul.f32 %v1144, 0.01
    %v1484 = vmul.f32 %v1149, 0.01
    %v1485 = vmul.f32 %v1152, 0.01
    %v1486 = vmul.f32 %v1157, 0.01
    %v1487 = vmul.f32 %v1160, 0.01
    %v1488 = vmul.f32 %v1165, 0.01
    %v1489 = vmul.f32 %v1168, 0.01
    %v1490 = vmul.f32 %v1173, 0.01
    %v1491 = vmul.f32 %v1176, 0.01
    %v1492 = vmul.f32 %v1181, 0.01
    %v1493 = vmul.f32 %v1184, 0.01
    %v1494 = vmul.f32 %v1189, 0.01
    %v1495 = vmul.f32 %v1192, 0.01
    %v1496 = vsub.f32 %v892, %v1480
    %v1497 = vsub.f32 %v893, %v1481
    %v1498 = vsub.f32 %v894, %v1482
    %v1499 = vsub.f32 %v895, %v1483
    %v1500 = vsub.f32 %v896, %v1484
    %v1501 = vsub.f32 %v897, %v1485
    %v1502 = vsub.f32 %v898, %v1486
    %v1503 = vsub.f32 %v899, %v1487
    %v1504 = vsub.f32 %v900, %v1488
    %v1505 = vsub.f32 %v901, %v1489
    %v1506 = vsub.f32 %v902, %v1490
    %v1507 = vsub.f32 %v903, %v1491
    %v1508 = vsub.f32 %v904, %v1492
    %v1509 = vsub.f32 %v905, %v1493
    %v1510 = vsub.f32 %v906, %v1494
    %v1511 = vsub.f32 %v907, %v1495
    %v1512 = vmul.f32 %v1200, 0.01
    %v1513 = vsub.f32 %v909, %v1512
    %v1514 = vpack.c.bf16 %v1447, %v1446
    %v1515 = vpack.c.bf16 %v1449, %v1448
    %v1516 = vpack.c.bf16 %v1451, %v1450
    %v1517 = vpack.c.bf16 %v1453, %v1452
    %v1518 = vpack.c.bf16 %v1455, %v1454
    %v1519 = vpack.c.bf16 %v1457, %v1456
    %v1520 = vpack.c.bf16 %v1459, %v1458
    %v1521 = vpack.c.bf16 %v1461, %v1460
    %v1522 = vpack.c.bf16 %v1463, %v1462
    %v1523 = vpack.c.bf16 %v1465, %v1464
    %v1524 = vpack.c.bf16 %v1467, %v1466
    %v1525 = vpack.c.bf16 %v1469, %v1468
    %v1526 = vpack.c.bf16 %v1471, %v1470
    %v1527 = vpack.c.bf16 %v1473, %v1472
    %v1528 = vpack.c.bf16 %v1475, %v1474
    %v1529 = vpack.c.bf16 %v1477, %v1476
    %v1530 = vpack.c.bf16 %v1497, %v1496
    %v1531 = vpack.c.bf16 %v1499, %v1498
    %v1532 = vpack.c.bf16 %v1501, %v1500
    %v1533 = vpack.c.bf16 %v1503, %v1502
    %v1534 = vpack.c.bf16 %v1505, %v1504
    %v1535 = vpack.c.bf16 %v1507, %v1506
    %v1536 = vpack.c.bf16 %v1509, %v1508
    %v1537 = vpack.c.bf16 %v1511, %v1510
    %v1539 = vlaneseq
    %v1540 = vshrl.u32 %v1539, 7
    %v1541 = vsub.s32 0, %v1540
    %v1542 = vrot.slane %v1479, %v1541
    %1544 = vmatprep.subr.bf16.mxu0 0
    %1545 = vmatpush1.bf16.msra.mxu0 %v1514
    %1546 = vmatprep.subr.bf16.mxu0 0
    %1547 = vmatpush1.bf16.msra.mxu0 %v1515
    %1548 = vmatprep.subr.bf16.mxu0 0
    %1549 = vmatpush1.bf16.msra.mxu0 %v1516
    %1550 = vmatprep.subr.bf16.mxu0 0
    %1551 = vmatpush1.bf16.msra.mxu0 %v1517
    %1552 = vmatprep.subr.bf16.mxu0 0
    %1553 = vmatpush1.bf16.msra.mxu0 %v1518
    %1554 = vmatprep.subr.bf16.mxu0 0
    %1555 = vmatpush1.bf16.msra.mxu0 %v1519
    %1556 = vmatprep.subr.bf16.mxu0 0
    %1557 = vmatpush1.bf16.msra.mxu0 %v1520
    %1558 = vmatprep.subr.bf16.mxu0 0
    %1559 = vmatpush1.bf16.msra.mxu0 %v1521
    %1560 = vmatprep.subr.bf16.mxu0 0
    %1561 = vmatpush1.bf16.msra.mxu0 %v1522
    %1562 = vmatprep.subr.bf16.mxu0 0
    %1563 = vmatpush1.bf16.msra.mxu0 %v1523
    %1564 = vmatprep.subr.bf16.mxu0 0
    %1565 = vmatpush1.bf16.msra.mxu0 %v1524
    %1566 = vmatprep.subr.bf16.mxu0 0
    %1567 = vmatpush1.bf16.msra.mxu0 %v1525
    %1568 = vmatprep.subr.bf16.mxu0 0
    %1569 = vmatpush1.bf16.msra.mxu0 %v1526
    %1570 = vmatprep.subr.bf16.mxu0 0
    %1571 = vmatpush1.bf16.msra.mxu0 %v1527
    %1572 = vmatprep.subr.bf16.mxu0 0
    %1573 = vmatpush1.bf16.msra.mxu0 %v1528
    %1574 = vmatprep.subr.bf16.mxu0 0
    %1575 = vmatpush1.bf16.msra.mxu0 %v1529
    %1576 = vmatprep.mubr.bf16.mxu0 %v93
    %1577 = vmatmul.mubr.bf16.gmra.mrb[0].mxu0 %v92
    %v1578 = vpop.f32.mrb[0].mxu0
    %v1579 = vadd.f32 %v1542, %v1578
    %v1580 = vpop.f32.mrb[0].mxu0
    %v1581 = vpop.f32.mrb[0].mxu0
    %v1582 = vpop.f32.mrb[0].mxu0
    %1583 = vdwg.mxu0
    %v1584 = vmax.f32 %v1579, 0.0
    %v1585 = vpack.c.bf16 %v1584, %v1584
    %v1587 = vlaneseq
    %v1588 = vshrl.u32 %v1587, 7
    %v1589 = vsub.s32 0, %v1588
    %v1590 = vrot.slane %v1513, %v1589
    %1592 = vmatprep.subr.bf16.mxu0 0
    %1593 = vmatpush1.bf16.msra.mxu0 %v1530
    %1594 = vmatprep.subr.bf16.mxu0 0
    %1595 = vmatpush1.bf16.msra.mxu0 %v1531
    %1596 = vmatprep.subr.bf16.mxu0 0
    %1597 = vmatpush1.bf16.msra.mxu0 %v1532
    %1598 = vmatprep.subr.bf16.mxu0 0
    %1599 = vmatpush1.bf16.msra.mxu0 %v1533
    %1600 = vmatprep.subr.bf16.mxu0 0
    %1601 = vmatpush1.bf16.msra.mxu0 %v1534
    %1602 = vmatprep.subr.bf16.mxu0 0
    %1603 = vmatpush1.bf16.msra.mxu0 %v1535
    %1604 = vmatprep.subr.bf16.mxu0 0
    %1605 = vmatpush1.bf16.msra.mxu0 %v1536
    %1606 = vmatprep.subr.bf16.mxu0 0
    %1607 = vmatpush1.bf16.msra.mxu0 %v1537
    %1608 = vmatprep.subr.bf16.mxu0 0
    %1609 = vmatpush1.bf16.msra.mxu0 0
    %1610 = vmatprep.subr.bf16.mxu0 0
    %1611 = vmatpush1.bf16.msra.mxu0 0
    %1612 = vmatprep.subr.bf16.mxu0 0
    %1613 = vmatpush1.bf16.msra.mxu0 0
    %1614 = vmatprep.subr.bf16.mxu0 0
    %1615 = vmatpush1.bf16.msra.mxu0 0
    %1616 = vmatprep.subr.bf16.mxu0 0
    %1617 = vmatpush1.bf16.msra.mxu0 0
    %1618 = vmatprep.subr.bf16.mxu0 0
    %1619 = vmatpush1.bf16.msra.mxu0 0
    %1620 = vmatprep.subr.bf16.mxu0 0
    %1621 = vmatpush1.bf16.msra.mxu0 0
    %1622 = vmatprep.subr.bf16.mxu0 0
    %1623 = vmatpush1.bf16.msra.mxu0 0
    %1624 = vmatprep.mubr.bf16.mxu0 0
    %1625 = vmatmul.mubr.bf16.gmra.mrb[0].mxu0 %v1585
    %v1626 = vpop.f32.mrb[0].mxu0
    %v1627 = vadd.f32 %v1590, %v1626
    %v1628 = vpop.f32.mrb[0].mxu0
    %v1629 = vpop.f32.mrb[0].mxu0
    %v1630 = vpop.f32.mrb[0].mxu0
    %1631 = vdwg.mxu0
    %v1632 = vsub.f32 %v1627, %v38
    %v1633 = vmul.f32 %v1632, 0.015625
    %v1634 = vpack.c.bf16 %v1633, %v1633
    %1635 = vxpose.xlu0.b32.start [1/16] %v1584, 128
    %1636 = vxpose.xlu0.b32.cont [2/16] 0.0, 128
    %1637 = vxpose.xlu0.b32.cont [3/16] 0.0, 128
    %1638 = vxpose.xlu0.b32.cont [4/16] 0.0, 128
    %1639 = vxpose.xlu0.b32.cont [5/16] 0.0, 128
    %1640 = vxpose.xlu0.b32.cont [6/16] 0.0, 128
    %1641 = vxpose.xlu0.b32.cont [7/16] 0.0, 128
    %1642 = vxpose.xlu0.b32.cont [8/16] 0.0, 128
    %1643 = vxpose.xlu0.b32.cont [9/16] 0.0, 128
    %1644 = vxpose.xlu0.b32.cont [10/16] 0.0, 128
    %1645 = vxpose.xlu0.b32.cont [11/16] 0.0, 128
    %1646 = vxpose.xlu0.b32.cont [12/16] 0.0, 128
    %1647 = vxpose.xlu0.b32.cont [13/16] 0.0, 128
    %1648 = vxpose.xlu0.b32.cont [14/16] 0.0, 128
    %1649 = vxpose.xlu0.b32.cont [15/16] 0.0, 128
    %1650 = vxpose.xlu0.b32.end [16/16] 0.0, 128
    %v1651 = vpop.trf.xlu0
    %v1652 = vpop.trf.xlu0
    %v1653 = vpop.trf.xlu0
    %v1654 = vpop.trf.xlu0
    %v1655 = vpop.trf.xlu0
    %v1656 = vpop.trf.xlu0
    %v1657 = vpop.trf.xlu0
    %v1658 = vpop.trf.xlu0
    %v1659 = vpop.trf.xlu0
    %v1660 = vpop.trf.xlu0
    %v1661 = vpop.trf.xlu0
    %v1662 = vpop.trf.xlu0
    %v1663 = vpop.trf.xlu0
    %v1664 = vpop.trf.xlu0
    %v1665 = vpop.trf.xlu0
    %v1666 = vpop.trf.xlu0
    %v1667 = vpack.c.bf16 %v1652, %v1651
    %v1668 = vpack.c.bf16 %v1654, %v1653
    %v1669 = vpack.c.bf16 %v1656, %v1655
    %v1670 = vpack.c.bf16 %v1658, %v1657
    %v1671 = vpack.c.bf16 %v1660, %v1659
    %v1672 = vpack.c.bf16 %v1662, %v1661
    %v1673 = vpack.c.bf16 %v1664, %v1663
    %v1674 = vpack.c.bf16 %v1666, %v1665
    %v1676 = vsel %vm417, %v1667, 0
    %v1679 = vsel %vm417, %v1668, 0
    %v1682 = vsel %vm417, %v1669, 0
    %v1685 = vsel %vm417, %v1670, 0
    %v1688 = vsel %vm417, %v1671, 0
    %v1691 = vsel %vm417, %v1672, 0
    %v1694 = vsel %vm417, %v1673, 0
    %v1697 = vsel %vm417, %v1674, 0
    %v1700 = vsel %vm442, %v1634, 0
    %1702 = vmatprep.subr.bf16.mxu0 0
    %1703 = vmatpush1.bf16.msra.mxu0 %v1700
    %1704 = vmatprep.subr.bf16.mxu0 0
    %1705 = vmatpush1.bf16.msra.mxu0 0
    %1706 = vmatprep.subr.bf16.mxu0 0
    %1707 = vmatpush1.bf16.msra.mxu0 0
    %1708 = vmatprep.subr.bf16.mxu0 0
    %1709 = vmatpush1.bf16.msra.mxu0 0
    %1710 = vmatprep.subr.bf16.mxu0 0
    %1711 = vmatpush1.bf16.msra.mxu0 0
    %1712 = vmatprep.subr.bf16.mxu0 0
    %1713 = vmatpush1.bf16.msra.mxu0 0
    %1714 = vmatprep.subr.bf16.mxu0 0
    %1715 = vmatpush1.bf16.msra.mxu0 0
    %1716 = vmatprep.subr.bf16.mxu0 0
    %1717 = vmatpush1.bf16.msra.mxu0 0
    %1718 = vmatprep.subr.bf16.mxu0 0
    %1719 = vmatpush1.bf16.msra.mxu0 0
    %1720 = vmatprep.subr.bf16.mxu0 0
    %1721 = vmatpush1.bf16.msra.mxu0 0
    %1722 = vmatprep.subr.bf16.mxu0 0
    %1723 = vmatpush1.bf16.msra.mxu0 0
    %1724 = vmatprep.subr.bf16.mxu0 0
    %1725 = vmatpush1.bf16.msra.mxu0 0
    %1726 = vmatprep.subr.bf16.mxu0 0
    %1727 = vmatpush1.bf16.msra.mxu0 0
    %1728 = vmatprep.subr.bf16.mxu0 0
    %1729 = vmatpush1.bf16.msra.mxu0 0
    %1730 = vmatprep.subr.bf16.mxu0 0
    %1731 = vmatpush1.bf16.msra.mxu0 0
    %1732 = vmatprep.subr.bf16.mxu0 0
    %1733 = vmatpush1.bf16.msra.mxu0 0
    %1734 = vmatprep.mubr.bf16.mxu0 0
    %1735 = vmatmul.mubr.bf16.gmra.mrb[0].mxu0 %v1676
    %v1736 = vpop.f32.mrb[0].mxu0
    %v1737 = vadd.f32 0.0, %v1736
    %v1738 = vpop.f32.mrb[0].mxu0
    %v1739 = vpop.f32.mrb[0].mxu0
    %v1740 = vadd.f32 0.0, %v1739
    %v1741 = vpop.f32.mrb[0].mxu0
    %1742 = vmatprep.mubr.bf16.mxu0 0
    %1743 = vmatmul.mubr.bf16.gmra.mrb[0].mxu0 %v1679
    %v1744 = vpop.f32.mrb[0].mxu0
    %v1745 = vadd.f32 0.0, %v1744
    %v1746 = vpop.f32.mrb[0].mxu0
    %v1747 = vpop.f32.mrb[0].mxu0
    %v1748 = vadd.f32 0.0, %v1747
    %v1749 = vpop.f32.mrb[0].mxu0
    %1750 = vmatprep.mubr.bf16.mxu0 0
    %1751 = vmatmul.mubr.bf16.gmra.mrb[0].mxu0 %v1682
    %v1752 = vpop.f32.mrb[0].mxu0
    %v1753 = vadd.f32 0.0, %v1752
    %v1754 = vpop.f32.mrb[0].mxu0
    %v1755 = vpop.f32.mrb[0].mxu0
    %v1756 = vadd.f32 0.0, %v1755
    %v1757 = vpop.f32.mrb[0].mxu0
    %1758 = vmatprep.mubr.bf16.mxu0 0
    %1759 = vmatmul.mubr.bf16.gmra.mrb[0].mxu0 %v1685
    %v1760 = vpop.f32.mrb[0].mxu0
    %v1761 = vadd.f32 0.0, %v1760
    %v1762 = vpop.f32.mrb[0].mxu0
    %v1763 = vpop.f32.mrb[0].mxu0
    %v1764 = vadd.f32 0.0, %v1763
    %v1765 = vpop.f32.mrb[0].mxu0
    %1766 = vmatprep.mubr.bf16.mxu0 0
    %1767 = vmatmul.mubr.bf16.gmra.mrb[0].mxu0 %v1688
    %v1768 = vpop.f32.mrb[0].mxu0
    %v1769 = vadd.f32 0.0, %v1768
    %v1770 = vpop.f32.mrb[0].mxu0
    %v1771 = vpop.f32.mrb[0].mxu0
    %v1772 = vadd.f32 0.0, %v1771
    %v1773 = vpop.f32.mrb[0].mxu0
    %1774 = vmatprep.mubr.bf16.mxu0 0
    %1775 = vmatmul.mubr.bf16.gmra.mrb[0].mxu0 %v1691
    %v1776 = vpop.f32.mrb[0].mxu0
    %v1777 = vadd.f32 0.0, %v1776
    %v1778 = vpop.f32.mrb[0].mxu0
    %v1779 = vpop.f32.mrb[0].mxu0
    %v1780 = vadd.f32 0.0, %v1779
    %v1781 = vpop.f32.mrb[0].mxu0
    %1782 = vmatprep.mubr.bf16.mxu0 0
    %1783 = vmatmul.mubr.bf16.gmra.mrb[0].mxu0 %v1694
    %v1784 = vpop.f32.mrb[0].mxu0
    %v1785 = vadd.f32 0.0, %v1784
    %v1786 = vpop.f32.mrb[0].mxu0
    %v1787 = vpop.f32.mrb[0].mxu0
    %v1788 = vadd.f32 0.0, %v1787
    %v1789 = vpop.f32.mrb[0].mxu0
    %1790 = vmatprep.mubr.bf16.mxu0 0
    %1791 = vmatmul.mubr.bf16.gmra.mrb[0].mxu0 %v1697
    %v1792 = vpop.f32.mrb[0].mxu0
    %v1793 = vadd.f32 0.0, %v1792
    %v1794 = vpop.f32.mrb[0].mxu0
    %v1795 = vpop.f32.mrb[0].mxu0
    %v1796 = vadd.f32 0.0, %v1795
    %v1797 = vpop.f32.mrb[0].mxu0
    %1798 = vdwg.mxu0
    %v1799 = vrot.slane %v1633, 4
    %v1800 = vadd.f32 %v1633, %v1799
    %v1801 = vrot.slane %v1800, 2
    %v1802 = vadd.f32 %v1800, %v1801
    %v1803 = vrot.slane %v1802, 1
    %v1804 = vadd.f32 %v1802, %v1803
    %1805 = vmatprep.subr.bf16.mxu0 0
    %1806 = vmatpush1.bf16.xpose.msra.mxu0 %v1530
    %1807 = vmatprep.subr.bf16.mxu0 0
    %1808 = vmatpush1.bf16.xpose.msra.mxu0 %v1531
    %1809 = vmatprep.subr.bf16.mxu0 0
    %1810 = vmatpush1.bf16.xpose.msra.mxu0 %v1532
    %1811 = vmatprep.subr.bf16.mxu0 0
    %1812 = vmatpush1.bf16.xpose.msra.mxu0 %v1533
    %1813 = vmatprep.subr.bf16.mxu0 0
    %1814 = vmatpush1.bf16.xpose.msra.mxu0 %v1534
    %1815 = vmatprep.subr.bf16.mxu0 0
    %1816 = vmatpush1.bf16.xpose.msra.mxu0 %v1535
    %1817 = vmatprep.subr.bf16.mxu0 0
    %1818 = vmatpush1.bf16.xpose.msra.mxu0 %v1536
    %1819 = vmatprep.subr.bf16.mxu0 0
    %1820 = vmatpush1.bf16.xpose.msra.mxu0 %v1537
    %1821 = vmatprep.subr.bf16.mxu0 0
    %1822 = vmatpush1.bf16.xpose.msra.mxu0 0
    %1823 = vmatprep.subr.bf16.mxu0 0
    %1824 = vmatpush1.bf16.xpose.msra.mxu0 0
    %1825 = vmatprep.subr.bf16.mxu0 0
    %1826 = vmatpush1.bf16.xpose.msra.mxu0 0
    %1827 = vmatprep.subr.bf16.mxu0 0
    %1828 = vmatpush1.bf16.xpose.msra.mxu0 0
    %1829 = vmatprep.subr.bf16.mxu0 0
    %1830 = vmatpush1.bf16.xpose.msra.mxu0 0
    %1831 = vmatprep.subr.bf16.mxu0 0
    %1832 = vmatpush1.bf16.xpose.msra.mxu0 0
    %1833 = vmatprep.subr.bf16.mxu0 0
    %1834 = vmatpush1.bf16.xpose.msra.mxu0 0
    %1835 = vmatprep.subr.bf16.mxu0 0
    %1836 = vmatpush1.bf16.xpose.msra.mxu0 0
    %1837 = vmatprep.mubr.bf16.mxu0 0
    %1838 = vmatmul.mubr.bf16.gmra.mrb[0].mxu0 %v1634
    %v1839 = vpop.f32.mrb[0].mxu0
    %v1840 = vadd.f32 0.0, %v1839
    %v1841 = vpop.f32.mrb[0].mxu0
    %v1842 = vpop.f32.mrb[0].mxu0
    %v1843 = vpop.f32.mrb[0].mxu0
    %1844 = vdwg.mxu0
    %vm1845 = vcmp.gt.f32.partialorder %v1579, 0.0
    %v1846 = vsel %vm1845, %v1840, 0.0
    %v1847 = vpack.c.bf16 %v1846, %v1846
    %v1849 = vsel %vm442, %v1847, 0
    %1851 = vmatprep.subr.bf16.mxu0 0
    %1852 = vmatpush1.bf16.msra.mxu0 %v1849
    %1853 = vmatprep.subr.bf16.mxu0 0
    %1854 = vmatpush1.bf16.msra.mxu0 0
    %1855 = vmatprep.subr.bf16.mxu0 0
    %1856 = vmatpush1.bf16.msra.mxu0 0
    %1857 = vmatprep.subr.bf16.mxu0 0
    %1858 = vmatpush1.bf16.msra.mxu0 0
    %1859 = vmatprep.subr.bf16.mxu0 0
    %1860 = vmatpush1.bf16.msra.mxu0 0
    %1861 = vmatprep.subr.bf16.mxu0 0
    %1862 = vmatpush1.bf16.msra.mxu0 0
    %1863 = vmatprep.subr.bf16.mxu0 0
    %1864 = vmatpush1.bf16.msra.mxu0 0
    %1865 = vmatprep.subr.bf16.mxu0 0
    %1866 = vmatpush1.bf16.msra.mxu0 0
    %1867 = vmatprep.subr.bf16.mxu0 0
    %1868 = vmatpush1.bf16.msra.mxu0 0
    %1869 = vmatprep.subr.bf16.mxu0 0
    %1870 = vmatpush1.bf16.msra.mxu0 0
    %1871 = vmatprep.subr.bf16.mxu0 0
    %1872 = vmatpush1.bf16.msra.mxu0 0
    %1873 = vmatprep.subr.bf16.mxu0 0
    %1874 = vmatpush1.bf16.msra.mxu0 0
    %1875 = vmatprep.subr.bf16.mxu0 0
    %1876 = vmatpush1.bf16.msra.mxu0 0
    %1877 = vmatprep.subr.bf16.mxu0 0
    %1878 = vmatpush1.bf16.msra.mxu0 0
    %1879 = vmatprep.subr.bf16.mxu0 0
    %1880 = vmatpush1.bf16.msra.mxu0 0
    %1881 = vmatprep.subr.bf16.mxu0 0
    %1882 = vmatpush1.bf16.msra.mxu0 0
    %1883 = vmatprep.mubr.bf16.mxu0 0
    %1884 = vmatmul.mubr.bf16.gmra.mrb[0].mxu0 %v593
    %v1885 = vpop.f32.mrb[0].mxu0
    %v1886 = vadd.f32 0.0, %v1885
    %v1887 = vpop.f32.mrb[0].mxu0
    %v1888 = vpop.f32.mrb[0].mxu0
    %v1889 = vadd.f32 0.0, %v1888
    %v1890 = vpop.f32.mrb[0].mxu0
    %1891 = vmatprep.mubr.bf16.mxu0 0
    %1892 = vmatmul.mubr.bf16.gmra.mrb[0].mxu0 %v596
    %v1893 = vpop.f32.mrb[0].mxu0
    %v1894 = vadd.f32 0.0, %v1893
    %v1895 = vpop.f32.mrb[0].mxu0
    %v1896 = vpop.f32.mrb[0].mxu0
    %v1897 = vadd.f32 0.0, %v1896
    %v1898 = vpop.f32.mrb[0].mxu0
    %1899 = vmatprep.mubr.bf16.mxu0 0
    %1900 = vmatmul.mubr.bf16.gmra.mrb[0].mxu0 %v599
    %v1901 = vpop.f32.mrb[0].mxu0
    %v1902 = vadd.f32 0.0, %v1901
    %v1903 = vpop.f32.mrb[0].mxu0
    %v1904 = vpop.f32.mrb[0].mxu0
    %v1905 = vadd.f32 0.0, %v1904
    %v1906 = vpop.f32.mrb[0].mxu0
    %1907 = vmatprep.mubr.bf16.mxu0 0
    %1908 = vmatmul.mubr.bf16.gmra.mrb[0].mxu0 %v602
    %v1909 = vpop.f32.mrb[0].mxu0
    %v1910 = vadd.f32 0.0, %v1909
    %v1911 = vpop.f32.mrb[0].mxu0
    %v1912 = vpop.f32.mrb[0].mxu0
    %v1913 = vadd.f32 0.0, %v1912
    %v1914 = vpop.f32.mrb[0].mxu0
    %1915 = vmatprep.mubr.bf16.mxu0 0
    %1916 = vmatmul.mubr.bf16.gmra.mrb[0].mxu0 %v605
    %v1917 = vpop.f32.mrb[0].mxu0
    %v1918 = vadd.f32 0.0, %v1917
    %v1919 = vpop.f32.mrb[0].mxu0
    %v1920 = vpop.f32.mrb[0].mxu0
    %v1921 = vadd.f32 0.0, %v1920
    %v1922 = vpop.f32.mrb[0].mxu0
    %1923 = vmatprep.mubr.bf16.mxu0 0
    %1924 = vmatmul.mubr.bf16.gmra.mrb[0].mxu0 %v608
    %v1925 = vpop.f32.mrb[0].mxu0
    %v1926 = vadd.f32 0.0, %v1925
    %v1927 = vpop.f32.mrb[0].mxu0
    %v1928 = vpop.f32.mrb[0].mxu0
    %v1929 = vadd.f32 0.0, %v1928
    %v1930 = vpop.f32.mrb[0].mxu0
    %1931 = vmatprep.mubr.bf16.mxu0 0
    %1932 = vmatmul.mubr.bf16.gmra.mrb[0].mxu0 %v611
    %v1933 = vpop.f32.mrb[0].mxu0
    %v1934 = vadd.f32 0.0, %v1933
    %v1935 = vpop.f32.mrb[0].mxu0
    %v1936 = vpop.f32.mrb[0].mxu0
    %v1937 = vadd.f32 0.0, %v1936
    %v1938 = vpop.f32.mrb[0].mxu0
    %1939 = vmatprep.mubr.bf16.mxu0 0
    %1940 = vmatmul.mubr.bf16.gmra.mrb[0].mxu0 %v614
    %v1941 = vpop.f32.mrb[0].mxu0
    %v1942 = vadd.f32 0.0, %v1941
    %v1943 = vpop.f32.mrb[0].mxu0
    %v1944 = vpop.f32.mrb[0].mxu0
    %v1945 = vadd.f32 0.0, %v1944
    %v1946 = vpop.f32.mrb[0].mxu0
    %1947 = vmatprep.mubr.bf16.mxu0 0
    %1948 = vmatmul.mubr.bf16.gmra.mrb[0].mxu0 %v617
    %v1949 = vpop.f32.mrb[0].mxu0
    %v1950 = vadd.f32 0.0, %v1949
    %v1951 = vpop.f32.mrb[0].mxu0
    %v1952 = vpop.f32.mrb[0].mxu0
    %v1953 = vadd.f32 0.0, %v1952
    %v1954 = vpop.f32.mrb[0].mxu0
    %1955 = vmatprep.mubr.bf16.mxu0 0
    %1956 = vmatmul.mubr.bf16.gmra.mrb[0].mxu0 %v620
    %v1957 = vpop.f32.mrb[0].mxu0
    %v1958 = vadd.f32 0.0, %v1957
    %v1959 = vpop.f32.mrb[0].mxu0
    %v1960 = vpop.f32.mrb[0].mxu0
    %v1961 = vadd.f32 0.0, %v1960
    %v1962 = vpop.f32.mrb[0].mxu0
    %1963 = vmatprep.mubr.bf16.mxu0 0
    %1964 = vmatmul.mubr.bf16.gmra.mrb[0].mxu0 %v623
    %v1965 = vpop.f32.mrb[0].mxu0
    %v1966 = vadd.f32 0.0, %v1965
    %v1967 = vpop.f32.mrb[0].mxu0
    %v1968 = vpop.f32.mrb[0].mxu0
    %v1969 = vadd.f32 0.0, %v1968
    %v1970 = vpop.f32.mrb[0].mxu0
    %1971 = vmatprep.mubr.bf16.mxu0 0
    %1972 = vmatmul.mubr.bf16.gmra.mrb[0].mxu0 %v626
    %v1973 = vpop.f32.mrb[0].mxu0
    %v1974 = vadd.f32 0.0, %v1973
    %v1975 = vpop.f32.mrb[0].mxu0
    %v1976 = vpop.f32.mrb[0].mxu0
    %v1977 = vadd.f32 0.0, %v1976
    %v1978 = vpop.f32.mrb[0].mxu0
    %1979 = vmatprep.mubr.bf16.mxu0 0
    %1980 = vmatmul.mubr.bf16.gmra.mrb[0].mxu0 %v629
    %v1981 = vpop.f32.mrb[0].mxu0
    %v1982 = vadd.f32 0.0, %v1981
    %v1983 = vpop.f32.mrb[0].mxu0
    %v1984 = vpop.f32.mrb[0].mxu0
    %v1985 = vadd.f32 0.0, %v1984
    %v1986 = vpop.f32.mrb[0].mxu0
    %1987 = vmatprep.mubr.bf16.mxu0 0
    %1988 = vmatmul.mubr.bf16.gmra.mrb[0].mxu0 %v632
    %v1989 = vpop.f32.mrb[0].mxu0
    %v1990 = vadd.f32 0.0, %v1989
    %v1991 = vpop.f32.mrb[0].mxu0
    %v1992 = vpop.f32.mrb[0].mxu0
    %v1993 = vadd.f32 0.0, %v1992
    %v1994 = vpop.f32.mrb[0].mxu0
    %1995 = vmatprep.mubr.bf16.mxu0 0
    %1996 = vmatmul.mubr.bf16.gmra.mrb[0].mxu0 %v635
    %v1997 = vpop.f32.mrb[0].mxu0
    %v1998 = vadd.f32 0.0, %v1997
    %v1999 = vpop.f32.mrb[0].mxu0
    %v2000 = vpop.f32.mrb[0].mxu0
    %v2001 = vadd.f32 0.0, %v2000
    %v2002 = vpop.f32.mrb[0].mxu0
    %2003 = vmatprep.mubr.bf16.mxu0 0
    %2004 = vmatmul.mubr.bf16.gmra.mrb[0].mxu0 %v638
    %v2005 = vpop.f32.mrb[0].mxu0
    %v2006 = vadd.f32 0.0, %v2005
    %v2007 = vpop.f32.mrb[0].mxu0
    %v2008 = vpop.f32.mrb[0].mxu0
    %v2009 = vadd.f32 0.0, %v2008
    %v2010 = vpop.f32.mrb[0].mxu0
    %2011 = vdwg.mxu0
    %v2012 = vrot.slane %v1846, 4
    %v2013 = vadd.f32 %v1846, %v2012
    %v2014 = vrot.slane %v2013, 2
    %v2015 = vadd.f32 %v2013, %v2014
    %v2016 = vrot.slane %v2015, 1
    %v2017 = vadd.f32 %v2015, %v2016
    %v2018 = vmul.f32 %v1886, 0.01
    %v2019 = vmul.f32 %v1889, 0.01
    %v2020 = vmul.f32 %v1894, 0.01
    %v2021 = vmul.f32 %v1897, 0.01
    %v2022 = vmul.f32 %v1902, 0.01
    %v2023 = vmul.f32 %v1905, 0.01
    %v2024 = vmul.f32 %v1910, 0.01
    %v2025 = vmul.f32 %v1913, 0.01
    %v2026 = vmul.f32 %v1918, 0.01
    %v2027 = vmul.f32 %v1921, 0.01
    %v2028 = vmul.f32 %v1926, 0.01
    %v2029 = vmul.f32 %v1929, 0.01
    %v2030 = vmul.f32 %v1934, 0.01
    %v2031 = vmul.f32 %v1937, 0.01
    %v2032 = vmul.f32 %v1942, 0.01
    %v2033 = vmul.f32 %v1945, 0.01
    %v2034 = vmul.f32 %v1950, 0.01
    %v2035 = vmul.f32 %v1953, 0.01
    %v2036 = vmul.f32 %v1958, 0.01
    %v2037 = vmul.f32 %v1961, 0.01
    %v2038 = vmul.f32 %v1966, 0.01
    %v2039 = vmul.f32 %v1969, 0.01
    %v2040 = vmul.f32 %v1974, 0.01
    %v2041 = vmul.f32 %v1977, 0.01
    %v2042 = vmul.f32 %v1982, 0.01
    %v2043 = vmul.f32 %v1985, 0.01
    %v2044 = vmul.f32 %v1990, 0.01
    %v2045 = vmul.f32 %v1993, 0.01
    %v2046 = vmul.f32 %v1998, 0.01
    %v2047 = vmul.f32 %v2001, 0.01
    %v2048 = vmul.f32 %v2006, 0.01
    %v2049 = vmul.f32 %v2009, 0.01
    %v2050 = vsub.f32 %v1446, %v2018
    %v2051 = vsub.f32 %v1447, %v2019
    %v2052 = vsub.f32 %v1448, %v2020
    %v2053 = vsub.f32 %v1449, %v2021
    %v2054 = vsub.f32 %v1450, %v2022
    %v2055 = vsub.f32 %v1451, %v2023
    %v2056 = vsub.f32 %v1452, %v2024
    %v2057 = vsub.f32 %v1453, %v2025
    %v2058 = vsub.f32 %v1454, %v2026
    %v2059 = vsub.f32 %v1455, %v2027
    %v2060 = vsub.f32 %v1456, %v2028
    %v2061 = vsub.f32 %v1457, %v2029
    %v2062 = vsub.f32 %v1458, %v2030
    %v2063 = vsub.f32 %v1459, %v2031
    %v2064 = vsub.f32 %v1460, %v2032
    %v2065 = vsub.f32 %v1461, %v2033
    %v2066 = vsub.f32 %v1462, %v2034
    %v2067 = vsub.f32 %v1463, %v2035
    %v2068 = vsub.f32 %v1464, %v2036
    %v2069 = vsub.f32 %v1465, %v2037
    %v2070 = vsub.f32 %v1466, %v2038
    %v2071 = vsub.f32 %v1467, %v2039
    %v2072 = vsub.f32 %v1468, %v2040
    %v2073 = vsub.f32 %v1469, %v2041
    %v2074 = vsub.f32 %v1470, %v2042
    %v2075 = vsub.f32 %v1471, %v2043
    %v2076 = vsub.f32 %v1472, %v2044
    %v2077 = vsub.f32 %v1473, %v2045
    %v2078 = vsub.f32 %v1474, %v2046
    %v2079 = vsub.f32 %v1475, %v2047
    %v2080 = vsub.f32 %v1476, %v2048
    %v2081 = vsub.f32 %v1477, %v2049
    %v2082 = vmul.f32 %v2017, 0.01
    %v2083 = vsub.f32 %v1479, %v2082
    %v2084 = vmul.f32 %v1737, 0.01
    %v2085 = vmul.f32 %v1740, 0.01
    %v2086 = vmul.f32 %v1745, 0.01
    %v2087 = vmul.f32 %v1748, 0.01
    %v2088 = vmul.f32 %v1753, 0.01
    %v2089 = vmul.f32 %v1756, 0.01
    %v2090 = vmul.f32 %v1761, 0.01
    %v2091 = vmul.f32 %v1764, 0.01
    %v2092 = vmul.f32 %v1769, 0.01
    %v2093 = vmul.f32 %v1772, 0.01
    %v2094 = vmul.f32 %v1777, 0.01
    %v2095 = vmul.f32 %v1780, 0.01
    %v2096 = vmul.f32 %v1785, 0.01
    %v2097 = vmul.f32 %v1788, 0.01
    %v2098 = vmul.f32 %v1793, 0.01
    %v2099 = vmul.f32 %v1796, 0.01
    %v2100 = vsub.f32 %v1496, %v2084
    %v2101 = vsub.f32 %v1497, %v2085
    %v2102 = vsub.f32 %v1498, %v2086
    %v2103 = vsub.f32 %v1499, %v2087
    %v2104 = vsub.f32 %v1500, %v2088
    %v2105 = vsub.f32 %v1501, %v2089
    %v2106 = vsub.f32 %v1502, %v2090
    %v2107 = vsub.f32 %v1503, %v2091
    %v2108 = vsub.f32 %v1504, %v2092
    %v2109 = vsub.f32 %v1505, %v2093
    %v2110 = vsub.f32 %v1506, %v2094
    %v2111 = vsub.f32 %v1507, %v2095
    %v2112 = vsub.f32 %v1508, %v2096
    %v2113 = vsub.f32 %v1509, %v2097
    %v2114 = vsub.f32 %v1510, %v2098
    %v2115 = vsub.f32 %v1511, %v2099
    %v2116 = vmul.f32 %v1804, 0.01
    %v2117 = vsub.f32 %v1513, %v2116
    %v2118 = vpack.c.bf16 %v2051, %v2050
    %v2119 = vpack.c.bf16 %v2053, %v2052
    %v2120 = vpack.c.bf16 %v2055, %v2054
    %v2121 = vpack.c.bf16 %v2057, %v2056
    %v2122 = vpack.c.bf16 %v2059, %v2058
    %v2123 = vpack.c.bf16 %v2061, %v2060
    %v2124 = vpack.c.bf16 %v2063, %v2062
    %v2125 = vpack.c.bf16 %v2065, %v2064
    %v2126 = vpack.c.bf16 %v2067, %v2066
    %v2127 = vpack.c.bf16 %v2069, %v2068
    %v2128 = vpack.c.bf16 %v2071, %v2070
    %v2129 = vpack.c.bf16 %v2073, %v2072
    %v2130 = vpack.c.bf16 %v2075, %v2074
    %v2131 = vpack.c.bf16 %v2077, %v2076
    %v2132 = vpack.c.bf16 %v2079, %v2078
    %v2133 = vpack.c.bf16 %v2081, %v2080
    %v2134 = vpack.c.bf16 %v2101, %v2100
    %v2135 = vpack.c.bf16 %v2103, %v2102
    %v2136 = vpack.c.bf16 %v2105, %v2104
    %v2137 = vpack.c.bf16 %v2107, %v2106
    %v2138 = vpack.c.bf16 %v2109, %v2108
    %v2139 = vpack.c.bf16 %v2111, %v2110
    %v2140 = vpack.c.bf16 %v2113, %v2112
    %v2141 = vpack.c.bf16 %v2115, %v2114
    %v2143 = vlaneseq
    %v2144 = vshrl.u32 %v2143, 7
    %v2145 = vsub.s32 0, %v2144
    %v2146 = vrot.slane %v2083, %v2145
    %2148 = vmatprep.subr.bf16.mxu0 0
    %2149 = vmatpush1.bf16.msra.mxu0 %v2118
    %2150 = vmatprep.subr.bf16.mxu0 0
    %2151 = vmatpush1.bf16.msra.mxu0 %v2119
    %2152 = vmatprep.subr.bf16.mxu0 0
    %2153 = vmatpush1.bf16.msra.mxu0 %v2120
    %2154 = vmatprep.subr.bf16.mxu0 0
    %2155 = vmatpush1.bf16.msra.mxu0 %v2121
    %2156 = vmatprep.subr.bf16.mxu0 0
    %2157 = vmatpush1.bf16.msra.mxu0 %v2122
    %2158 = vmatprep.subr.bf16.mxu0 0
    %2159 = vmatpush1.bf16.msra.mxu0 %v2123
    %2160 = vmatprep.subr.bf16.mxu0 0
    %2161 = vmatpush1.bf16.msra.mxu0 %v2124
    %2162 = vmatprep.subr.bf16.mxu0 0
    %2163 = vmatpush1.bf16.msra.mxu0 %v2125
    %2164 = vmatprep.subr.bf16.mxu0 0
    %2165 = vmatpush1.bf16.msra.mxu0 %v2126
    %2166 = vmatprep.subr.bf16.mxu0 0
    %2167 = vmatpush1.bf16.msra.mxu0 %v2127
    %2168 = vmatprep.subr.bf16.mxu0 0
    %2169 = vmatpush1.bf16.msra.mxu0 %v2128
    %2170 = vmatprep.subr.bf16.mxu0 0
    %2171 = vmatpush1.bf16.msra.mxu0 %v2129
    %2172 = vmatprep.subr.bf16.mxu0 0
    %2173 = vmatpush1.bf16.msra.mxu0 %v2130
    %2174 = vmatprep.subr.bf16.mxu0 0
    %2175 = vmatpush1.bf16.msra.mxu0 %v2131
    %2176 = vmatprep.subr.bf16.mxu0 0
    %2177 = vmatpush1.bf16.msra.mxu0 %v2132
    %2178 = vmatprep.subr.bf16.mxu0 0
    %2179 = vmatpush1.bf16.msra.mxu0 %v2133
    %2180 = vmatprep.mubr.bf16.mxu0 %v175
    %2181 = vmatmul.mubr.bf16.gmra.mrb[0].mxu0 %v174
    %v2182 = vpop.f32.mrb[0].mxu0
    %v2183 = vadd.f32 %v2146, %v2182
    %v2184 = vpop.f32.mrb[0].mxu0
    %v2185 = vpop.f32.mrb[0].mxu0
    %v2186 = vpop.f32.mrb[0].mxu0
    %2187 = vdwg.mxu0
    %v2188 = vmax.f32 %v2183, 0.0
    %v2189 = vpack.c.bf16 %v2188, %v2188
    %v2191 = vlaneseq
    %v2192 = vshrl.u32 %v2191, 7
    %v2193 = vsub.s32 0, %v2192
    %v2194 = vrot.slane %v2117, %v2193
    %2196 = vmatprep.subr.bf16.mxu0 0
    %2197 = vmatpush1.bf16.msra.mxu0 %v2134
    %2198 = vmatprep.subr.bf16.mxu0 0
    %2199 = vmatpush1.bf16.msra.mxu0 %v2135
    %2200 = vmatprep.subr.bf16.mxu0 0
    %2201 = vmatpush1.bf16.msra.mxu0 %v2136
    %2202 = vmatprep.subr.bf16.mxu0 0
    %2203 = vmatpush1.bf16.msra.mxu0 %v2137
    %2204 = vmatprep.subr.bf16.mxu0 0
    %2205 = vmatpush1.bf16.msra.mxu0 %v2138
    %2206 = vmatprep.subr.bf16.mxu0 0
    %2207 = vmatpush1.bf16.msra.mxu0 %v2139
    %2208 = vmatprep.subr.bf16.mxu0 0
    %2209 = vmatpush1.bf16.msra.mxu0 %v2140
    %2210 = vmatprep.subr.bf16.mxu0 0
    %2211 = vmatpush1.bf16.msra.mxu0 %v2141
    %2212 = vmatprep.subr.bf16.mxu0 0
    %2213 = vmatpush1.bf16.msra.mxu0 0
    %2214 = vmatprep.subr.bf16.mxu0 0
    %2215 = vmatpush1.bf16.msra.mxu0 0
    %2216 = vmatprep.subr.bf16.mxu0 0
    %2217 = vmatpush1.bf16.msra.mxu0 0
    %2218 = vmatprep.subr.bf16.mxu0 0
    %2219 = vmatpush1.bf16.msra.mxu0 0
    %2220 = vmatprep.subr.bf16.mxu0 0
    %2221 = vmatpush1.bf16.msra.mxu0 0
    %2222 = vmatprep.subr.bf16.mxu0 0
    %2223 = vmatpush1.bf16.msra.mxu0 0
    %2224 = vmatprep.subr.bf16.mxu0 0
    %2225 = vmatpush1.bf16.msra.mxu0 0
    %2226 = vmatprep.subr.bf16.mxu0 0
    %2227 = vmatpush1.bf16.msra.mxu0 0
    %2228 = vmatprep.mubr.bf16.mxu0 0
    %2229 = vmatmul.mubr.bf16.gmra.mrb[0].mxu0 %v2189
    %v2230 = vpop.f32.mrb[0].mxu0
    %v2231 = vadd.f32 %v2194, %v2230
    %v2232 = vpop.f32.mrb[0].mxu0
    %v2233 = vpop.f32.mrb[0].mxu0
    %v2234 = vpop.f32.mrb[0].mxu0
    %2235 = vdwg.mxu0
    %v2236 = vsub.f32 %v2231, %v41
    %v2237 = vmul.f32 %v2236, 0.015625
    %v2238 = vpack.c.bf16 %v2237, %v2237
    %2239 = vxpose.xlu0.b32.start [1/16] %v2188, 128
    %2240 = vxpose.xlu0.b32.cont [2/16] 0.0, 128
    %2241 = vxpose.xlu0.b32.cont [3/16] 0.0, 128
    %2242 = vxpose.xlu0.b32.cont [4/16] 0.0, 128
    %2243 = vxpose.xlu0.b32.cont [5/16] 0.0, 128
    %2244 = vxpose.xlu0.b32.cont [6/16] 0.0, 128
    %2245 = vxpose.xlu0.b32.cont [7/16] 0.0, 128
    %2246 = vxpose.xlu0.b32.cont [8/16] 0.0, 128
    %2247 = vxpose.xlu0.b32.cont [9/16] 0.0, 128
    %2248 = vxpose.xlu0.b32.cont [10/16] 0.0, 128
    %2249 = vxpose.xlu0.b32.cont [11/16] 0.0, 128
    %2250 = vxpose.xlu0.b32.cont [12/16] 0.0, 128
    %2251 = vxpose.xlu0.b32.cont [13/16] 0.0, 128
    %2252 = vxpose.xlu0.b32.cont [14/16] 0.0, 128
    %2253 = vxpose.xlu0.b32.cont [15/16] 0.0, 128
    %2254 = vxpose.xlu0.b32.end [16/16] 0.0, 128
    %v2255 = vpop.trf.xlu0
    %v2256 = vpop.trf.xlu0
    %v2257 = vpop.trf.xlu0
    %v2258 = vpop.trf.xlu0
    %v2259 = vpop.trf.xlu0
    %v2260 = vpop.trf.xlu0
    %v2261 = vpop.trf.xlu0
    %v2262 = vpop.trf.xlu0
    %v2263 = vpop.trf.xlu0
    %v2264 = vpop.trf.xlu0
    %v2265 = vpop.trf.xlu0
    %v2266 = vpop.trf.xlu0
    %v2267 = vpop.trf.xlu0
    %v2268 = vpop.trf.xlu0
    %v2269 = vpop.trf.xlu0
    %v2270 = vpop.trf.xlu0
    %v2271 = vpack.c.bf16 %v2256, %v2255
    %v2272 = vpack.c.bf16 %v2258, %v2257
    %v2273 = vpack.c.bf16 %v2260, %v2259
    %v2274 = vpack.c.bf16 %v2262, %v2261
    %v2275 = vpack.c.bf16 %v2264, %v2263
    %v2276 = vpack.c.bf16 %v2266, %v2265
    %v2277 = vpack.c.bf16 %v2268, %v2267
    %v2278 = vpack.c.bf16 %v2270, %v2269
    %v2280 = vsel %vm417, %v2271, 0
    %v2283 = vsel %vm417, %v2272, 0
    %v2286 = vsel %vm417, %v2273, 0
    %v2289 = vsel %vm417, %v2274, 0
    %v2292 = vsel %vm417, %v2275, 0
    %v2295 = vsel %vm417, %v2276, 0
    %v2298 = vsel %vm417, %v2277, 0
    %v2301 = vsel %vm417, %v2278, 0
    %v2304 = vsel %vm442, %v2238, 0
    %2306 = vmatprep.subr.bf16.mxu0 0
    %2307 = vmatpush1.bf16.msra.mxu0 %v2304
    %2308 = vmatprep.subr.bf16.mxu0 0
    %2309 = vmatpush1.bf16.msra.mxu0 0
    %2310 = vmatprep.subr.bf16.mxu0 0
    %2311 = vmatpush1.bf16.msra.mxu0 0
    %2312 = vmatprep.subr.bf16.mxu0 0
    %2313 = vmatpush1.bf16.msra.mxu0 0
    %2314 = vmatprep.subr.bf16.mxu0 0
    %2315 = vmatpush1.bf16.msra.mxu0 0
    %2316 = vmatprep.subr.bf16.mxu0 0
    %2317 = vmatpush1.bf16.msra.mxu0 0
    %2318 = vmatprep.subr.bf16.mxu0 0
    %2319 = vmatpush1.bf16.msra.mxu0 0
    %2320 = vmatprep.subr.bf16.mxu0 0
    %2321 = vmatpush1.bf16.msra.mxu0 0
    %2322 = vmatprep.subr.bf16.mxu0 0
    %2323 = vmatpush1.bf16.msra.mxu0 0
    %2324 = vmatprep.subr.bf16.mxu0 0
    %2325 = vmatpush1.bf16.msra.mxu0 0
    %2326 = vmatprep.subr.bf16.mxu0 0
    %2327 = vmatpush1.bf16.msra.mxu0 0
    %2328 = vmatprep.subr.bf16.mxu0 0
    %2329 = vmatpush1.bf16.msra.mxu0 0
    %2330 = vmatprep.subr.bf16.mxu0 0
    %2331 = vmatpush1.bf16.msra.mxu0 0
    %2332 = vmatprep.subr.bf16.mxu0 0
    %2333 = vmatpush1.bf16.msra.mxu0 0
    %2334 = vmatprep.subr.bf16.mxu0 0
    %2335 = vmatpush1.bf16.msra.mxu0 0
    %2336 = vmatprep.subr.bf16.mxu0 0
    %2337 = vmatpush1.bf16.msra.mxu0 0
    %2338 = vmatprep.mubr.bf16.mxu0 0
    %2339 = vmatmul.mubr.bf16.gmra.mrb[0].mxu0 %v2280
    %v2340 = vpop.f32.mrb[0].mxu0
    %v2341 = vadd.f32 0.0, %v2340
    %v2342 = vpop.f32.mrb[0].mxu0
    %v2343 = vpop.f32.mrb[0].mxu0
    %v2344 = vadd.f32 0.0, %v2343
    %v2345 = vpop.f32.mrb[0].mxu0
    %2346 = vmatprep.mubr.bf16.mxu0 0
    %2347 = vmatmul.mubr.bf16.gmra.mrb[0].mxu0 %v2283
    %v2348 = vpop.f32.mrb[0].mxu0
    %v2349 = vadd.f32 0.0, %v2348
    %v2350 = vpop.f32.mrb[0].mxu0
    %v2351 = vpop.f32.mrb[0].mxu0
    %v2352 = vadd.f32 0.0, %v2351
    %v2353 = vpop.f32.mrb[0].mxu0
    %2354 = vmatprep.mubr.bf16.mxu0 0
    %2355 = vmatmul.mubr.bf16.gmra.mrb[0].mxu0 %v2286
    %v2356 = vpop.f32.mrb[0].mxu0
    %v2357 = vadd.f32 0.0, %v2356
    %v2358 = vpop.f32.mrb[0].mxu0
    %v2359 = vpop.f32.mrb[0].mxu0
    %v2360 = vadd.f32 0.0, %v2359
    %v2361 = vpop.f32.mrb[0].mxu0
    %2362 = vmatprep.mubr.bf16.mxu0 0
    %2363 = vmatmul.mubr.bf16.gmra.mrb[0].mxu0 %v2289
    %v2364 = vpop.f32.mrb[0].mxu0
    %v2365 = vadd.f32 0.0, %v2364
    %v2366 = vpop.f32.mrb[0].mxu0
    %v2367 = vpop.f32.mrb[0].mxu0
    %v2368 = vadd.f32 0.0, %v2367
    %v2369 = vpop.f32.mrb[0].mxu0
    %2370 = vmatprep.mubr.bf16.mxu0 0
    %2371 = vmatmul.mubr.bf16.gmra.mrb[0].mxu0 %v2292
    %v2372 = vpop.f32.mrb[0].mxu0
    %v2373 = vadd.f32 0.0, %v2372
    %v2374 = vpop.f32.mrb[0].mxu0
    %v2375 = vpop.f32.mrb[0].mxu0
    %v2376 = vadd.f32 0.0, %v2375
    %v2377 = vpop.f32.mrb[0].mxu0
    %2378 = vmatprep.mubr.bf16.mxu0 0
    %2379 = vmatmul.mubr.bf16.gmra.mrb[0].mxu0 %v2295
    %v2380 = vpop.f32.mrb[0].mxu0
    %v2381 = vadd.f32 0.0, %v2380
    %v2382 = vpop.f32.mrb[0].mxu0
    %v2383 = vpop.f32.mrb[0].mxu0
    %v2384 = vadd.f32 0.0, %v2383
    %v2385 = vpop.f32.mrb[0].mxu0
    %2386 = vmatprep.mubr.bf16.mxu0 0
    %2387 = vmatmul.mubr.bf16.gmra.mrb[0].mxu0 %v2298
    %v2388 = vpop.f32.mrb[0].mxu0
    %v2389 = vadd.f32 0.0, %v2388
    %v2390 = vpop.f32.mrb[0].mxu0
    %v2391 = vpop.f32.mrb[0].mxu0
    %v2392 = vadd.f32 0.0, %v2391
    %v2393 = vpop.f32.mrb[0].mxu0
    %2394 = vmatprep.mubr.bf16.mxu0 0
    %2395 = vmatmul.mubr.bf16.gmra.mrb[0].mxu0 %v2301
    %v2396 = vpop.f32.mrb[0].mxu0
    %v2397 = vadd.f32 0.0, %v2396
    %v2398 = vpop.f32.mrb[0].mxu0
    %v2399 = vpop.f32.mrb[0].mxu0
    %v2400 = vadd.f32 0.0, %v2399
    %v2401 = vpop.f32.mrb[0].mxu0
    %2402 = vdwg.mxu0
    %v2403 = vrot.slane %v2237, 4
    %v2404 = vadd.f32 %v2237, %v2403
    %v2405 = vrot.slane %v2404, 2
    %v2406 = vadd.f32 %v2404, %v2405
    %v2407 = vrot.slane %v2406, 1
    %v2408 = vadd.f32 %v2406, %v2407
    %2409 = vmatprep.subr.bf16.mxu0 0
    %2410 = vmatpush1.bf16.xpose.msra.mxu0 %v2134
    %2411 = vmatprep.subr.bf16.mxu0 0
    %2412 = vmatpush1.bf16.xpose.msra.mxu0 %v2135
    %2413 = vmatprep.subr.bf16.mxu0 0
    %2414 = vmatpush1.bf16.xpose.msra.mxu0 %v2136
    %2415 = vmatprep.subr.bf16.mxu0 0
    %2416 = vmatpush1.bf16.xpose.msra.mxu0 %v2137
    %2417 = vmatprep.subr.bf16.mxu0 0
    %2418 = vmatpush1.bf16.xpose.msra.mxu0 %v2138
    %2419 = vmatprep.subr.bf16.mxu0 0
    %2420 = vmatpush1.bf16.xpose.msra.mxu0 %v2139
    %2421 = vmatprep.subr.bf16.mxu0 0
    %2422 = vmatpush1.bf16.xpose.msra.mxu0 %v2140
    %2423 = vmatprep.subr.bf16.mxu0 0
    %2424 = vmatpush1.bf16.xpose.msra.mxu0 %v2141
    %2425 = vmatprep.subr.bf16.mxu0 0
    %2426 = vmatpush1.bf16.xpose.msra.mxu0 0
    %2427 = vmatprep.subr.bf16.mxu0 0
    %2428 = vmatpush1.bf16.xpose.msra.mxu0 0
    %2429 = vmatprep.subr.bf16.mxu0 0
    %2430 = vmatpush1.bf16.xpose.msra.mxu0 0
    %2431 = vmatprep.subr.bf16.mxu0 0
    %2432 = vmatpush1.bf16.xpose.msra.mxu0 0
    %2433 = vmatprep.subr.bf16.mxu0 0
    %2434 = vmatpush1.bf16.xpose.msra.mxu0 0
    %2435 = vmatprep.subr.bf16.mxu0 0
    %2436 = vmatpush1.bf16.xpose.msra.mxu0 0
    %2437 = vmatprep.subr.bf16.mxu0 0
    %2438 = vmatpush1.bf16.xpose.msra.mxu0 0
    %2439 = vmatprep.subr.bf16.mxu0 0
    %2440 = vmatpush1.bf16.xpose.msra.mxu0 0
    %2441 = vmatprep.mubr.bf16.mxu0 0
    %2442 = vmatmul.mubr.bf16.gmra.mrb[0].mxu0 %v2238
    %v2443 = vpop.f32.mrb[0].mxu0
    %v2444 = vadd.f32 0.0, %v2443
    %v2445 = vpop.f32.mrb[0].mxu0
    %v2446 = vpop.f32.mrb[0].mxu0
    %v2447 = vpop.f32.mrb[0].mxu0
    %2448 = vdwg.mxu0
    %vm2449 = vcmp.gt.f32.partialorder %v2183, 0.0
    %v2450 = vsel %vm2449, %v2444, 0.0
    %v2451 = vpack.c.bf16 %v2450, %v2450
    %v2453 = vsel %vm417, %v240, 0
    %v2456 = vsel %vm417, %v241, 0
    %v2459 = vsel %vm417, %v242, 0
    %v2462 = vsel %vm417, %v243, 0
    %v2465 = vsel %vm417, %v244, 0
    %v2468 = vsel %vm417, %v245, 0
    %v2471 = vsel %vm417, %v246, 0
    %v2474 = vsel %vm417, %v247, 0
    %v2477 = vsel %vm417, %v248, 0
    %v2480 = vsel %vm417, %v249, 0
    %v2483 = vsel %vm417, %v250, 0
    %v2486 = vsel %vm417, %v251, 0
    %v2489 = vsel %vm417, %v252, 0
    %v2492 = vsel %vm417, %v253, 0
    %v2495 = vsel %vm417, %v254, 0
    %v2498 = vsel %vm417, %v255, 0
    %v2501 = vsel %vm442, %v2451, 0
    %2503 = vmatprep.subr.bf16.mxu0 0
    %2504 = vmatpush1.bf16.msra.mxu0 %v2501
    %2505 = vmatprep.subr.bf16.mxu0 0
    %2506 = vmatpush1.bf16.msra.mxu0 0
    %2507 = vmatprep.subr.bf16.mxu0 0
    %2508 = vmatpush1.bf16.msra.mxu0 0
    %2509 = vmatprep.subr.bf16.mxu0 0
    %2510 = vmatpush1.bf16.msra.mxu0 0
    %2511 = vmatprep.subr.bf16.mxu0 0
    %2512 = vmatpush1.bf16.msra.mxu0 0
    %2513 = vmatprep.subr.bf16.mxu0 0
    %2514 = vmatpush1.bf16.msra.mxu0 0
    %2515 = vmatprep.subr.bf16.mxu0 0
    %2516 = vmatpush1.bf16.msra.mxu0 0
    %2517 = vmatprep.subr.bf16.mxu0 0
    %2518 = vmatpush1.bf16.msra.mxu0 0
    %2519 = vmatprep.subr.bf16.mxu0 0
    %2520 = vmatpush1.bf16.msra.mxu0 0
    %2521 = vmatprep.subr.bf16.mxu0 0
    %2522 = vmatpush1.bf16.msra.mxu0 0
    %2523 = vmatprep.subr.bf16.mxu0 0
    %2524 = vmatpush1.bf16.msra.mxu0 0
    %2525 = vmatprep.subr.bf16.mxu0 0
    %2526 = vmatpush1.bf16.msra.mxu0 0
    %2527 = vmatprep.subr.bf16.mxu0 0
    %2528 = vmatpush1.bf16.msra.mxu0 0
    %2529 = vmatprep.subr.bf16.mxu0 0
    %2530 = vmatpush1.bf16.msra.mxu0 0
    %2531 = vmatprep.subr.bf16.mxu0 0
    %2532 = vmatpush1.bf16.msra.mxu0 0
    %2533 = vmatprep.subr.bf16.mxu0 0
    %2534 = vmatpush1.bf16.msra.mxu0 0
    %2535 = vmatprep.mubr.bf16.mxu0 0
    %2536 = vmatmul.mubr.bf16.gmra.mrb[0].mxu0 %v2453
    %v2537 = vpop.f32.mrb[0].mxu0
    %v2538 = vadd.f32 0.0, %v2537
    %v2539 = vpop.f32.mrb[0].mxu0
    %v2540 = vpop.f32.mrb[0].mxu0
    %v2541 = vadd.f32 0.0, %v2540
    %v2542 = vpop.f32.mrb[0].mxu0
    %2543 = vmatprep.mubr.bf16.mxu0 0
    %2544 = vmatmul.mubr.bf16.gmra.mrb[0].mxu0 %v2456
    %v2545 = vpop.f32.mrb[0].mxu0
    %v2546 = vadd.f32 0.0, %v2545
    %v2547 = vpop.f32.mrb[0].mxu0
    %v2548 = vpop.f32.mrb[0].mxu0
    %v2549 = vadd.f32 0.0, %v2548
    %v2550 = vpop.f32.mrb[0].mxu0
    %2551 = vmatprep.mubr.bf16.mxu0 0
    %2552 = vmatmul.mubr.bf16.gmra.mrb[0].mxu0 %v2459
    %v2553 = vpop.f32.mrb[0].mxu0
    %v2554 = vadd.f32 0.0, %v2553
    %v2555 = vpop.f32.mrb[0].mxu0
    %v2556 = vpop.f32.mrb[0].mxu0
    %v2557 = vadd.f32 0.0, %v2556
    %v2558 = vpop.f32.mrb[0].mxu0
    %2559 = vmatprep.mubr.bf16.mxu0 0
    %2560 = vmatmul.mubr.bf16.gmra.mrb[0].mxu0 %v2462
    %v2561 = vpop.f32.mrb[0].mxu0
    %v2562 = vadd.f32 0.0, %v2561
    %v2563 = vpop.f32.mrb[0].mxu0
    %v2564 = vpop.f32.mrb[0].mxu0
    %v2565 = vadd.f32 0.0, %v2564
    %v2566 = vpop.f32.mrb[0].mxu0
    %2567 = vmatprep.mubr.bf16.mxu0 0
    %2568 = vmatmul.mubr.bf16.gmra.mrb[0].mxu0 %v2465
    %v2569 = vpop.f32.mrb[0].mxu0
    %v2570 = vadd.f32 0.0, %v2569
    %v2571 = vpop.f32.mrb[0].mxu0
    %v2572 = vpop.f32.mrb[0].mxu0
    %v2573 = vadd.f32 0.0, %v2572
    %v2574 = vpop.f32.mrb[0].mxu0
    %2575 = vmatprep.mubr.bf16.mxu0 0
    %2576 = vmatmul.mubr.bf16.gmra.mrb[0].mxu0 %v2468
    %v2577 = vpop.f32.mrb[0].mxu0
    %v2578 = vadd.f32 0.0, %v2577
    %v2579 = vpop.f32.mrb[0].mxu0
    %v2580 = vpop.f32.mrb[0].mxu0
    %v2581 = vadd.f32 0.0, %v2580
    %v2582 = vpop.f32.mrb[0].mxu0
    %2583 = vmatprep.mubr.bf16.mxu0 0
    %2584 = vmatmul.mubr.bf16.gmra.mrb[0].mxu0 %v2471
    %v2585 = vpop.f32.mrb[0].mxu0
    %v2586 = vadd.f32 0.0, %v2585
    %v2587 = vpop.f32.mrb[0].mxu0
    %v2588 = vpop.f32.mrb[0].mxu0
    %v2589 = vadd.f32 0.0, %v2588
    %v2590 = vpop.f32.mrb[0].mxu0
    %2591 = vmatprep.mubr.bf16.mxu0 0
    %2592 = vmatmul.mubr.bf16.gmra.mrb[0].mxu0 %v2474
    %v2593 = vpop.f32.mrb[0].mxu0
    %v2594 = vadd.f32 0.0, %v2593
    %v2595 = vpop.f32.mrb[0].mxu0
    %v2596 = vpop.f32.mrb[0].mxu0
    %v2597 = vadd.f32 0.0, %v2596
    %v2598 = vpop.f32.mrb[0].mxu0
    %2599 = vmatprep.mubr.bf16.mxu0 0
    %2600 = vmatmul.mubr.bf16.gmra.mrb[0].mxu0 %v2477
    %v2601 = vpop.f32.mrb[0].mxu0
    %v2602 = vadd.f32 0.0, %v2601
    %v2603 = vpop.f32.mrb[0].mxu0
    %v2604 = vpop.f32.mrb[0].mxu0
    %v2605 = vadd.f32 0.0, %v2604
    %v2606 = vpop.f32.mrb[0].mxu0
    %2607 = vmatprep.mubr.bf16.mxu0 0
    %2608 = vmatmul.mubr.bf16.gmra.mrb[0].mxu0 %v2480
    %v2609 = vpop.f32.mrb[0].mxu0
    %v2610 = vadd.f32 0.0, %v2609
    %v2611 = vpop.f32.mrb[0].mxu0
    %v2612 = vpop.f32.mrb[0].mxu0
    %v2613 = vadd.f32 0.0, %v2612
    %v2614 = vpop.f32.mrb[0].mxu0
    %2615 = vmatprep.mubr.bf16.mxu0 0
    %2616 = vmatmul.mubr.bf16.gmra.mrb[0].mxu0 %v2483
    %v2617 = vpop.f32.mrb[0].mxu0
    %v2618 = vadd.f32 0.0, %v2617
    %v2619 = vpop.f32.mrb[0].mxu0
    %v2620 = vpop.f32.mrb[0].mxu0
    %v2621 = vadd.f32 0.0, %v2620
    %v2622 = vpop.f32.mrb[0].mxu0
    %2623 = vmatprep.mubr.bf16.mxu0 0
    %2624 = vmatmul.mubr.bf16.gmra.mrb[0].mxu0 %v2486
    %v2625 = vpop.f32.mrb[0].mxu0
    %v2626 = vadd.f32 0.0, %v2625
    %v2627 = vpop.f32.mrb[0].mxu0
    %v2628 = vpop.f32.mrb[0].mxu0
    %v2629 = vadd.f32 0.0, %v2628
    %v2630 = vpop.f32.mrb[0].mxu0
    %2631 = vmatprep.mubr.bf16.mxu0 0
    %2632 = vmatmul.mubr.bf16.gmra.mrb[0].mxu0 %v2489
    %v2633 = vpop.f32.mrb[0].mxu0
    %v2634 = vadd.f32 0.0, %v2633
    %v2635 = vpop.f32.mrb[0].mxu0
    %v2636 = vpop.f32.mrb[0].mxu0
    %v2637 = vadd.f32 0.0, %v2636
    %v2638 = vpop.f32.mrb[0].mxu0
    %2639 = vmatprep.mubr.bf16.mxu0 0
    %2640 = vmatmul.mubr.bf16.gmra.mrb[0].mxu0 %v2492
    %v2641 = vpop.f32.mrb[0].mxu0
    %v2642 = vadd.f32 0.0, %v2641
    %v2643 = vpop.f32.mrb[0].mxu0
    %v2644 = vpop.f32.mrb[0].mxu0
    %v2645 = vadd.f32 0.0, %v2644
    %v2646 = vpop.f32.mrb[0].mxu0
    %2647 = vmatprep.mubr.bf16.mxu0 0
    %2648 = vmatmul.mubr.bf16.gmra.mrb[0].mxu0 %v2495
    %v2649 = vpop.f32.mrb[0].mxu0
    %v2650 = vadd.f32 0.0, %v2649
    %v2651 = vpop.f32.mrb[0].mxu0
    %v2652 = vpop.f32.mrb[0].mxu0
    %v2653 = vadd.f32 0.0, %v2652
    %v2654 = vpop.f32.mrb[0].mxu0
    %2655 = vmatprep.mubr.bf16.mxu0 0
    %2656 = vmatmul.mubr.bf16.gmra.mrb[0].mxu0 %v2498
    %v2657 = vpop.f32.mrb[0].mxu0
    %v2658 = vadd.f32 0.0, %v2657
    %v2659 = vpop.f32.mrb[0].mxu0
    %v2660 = vpop.f32.mrb[0].mxu0
    %v2661 = vadd.f32 0.0, %v2660
    %v2662 = vpop.f32.mrb[0].mxu0
    %2663 = vdwg.mxu0
    %v2664 = vrot.slane %v2450, 4
    %v2665 = vadd.f32 %v2450, %v2664
    %v2666 = vrot.slane %v2665, 2
    %v2667 = vadd.f32 %v2665, %v2666
    %v2668 = vrot.slane %v2667, 1
    %v2669 = vadd.f32 %v2667, %v2668
    %v2670 = vmul.f32 %v2538, 0.25
    %v2671 = vmul.f32 %v2541, 0.25
    %v2672 = vmul.f32 %v2546, 0.25
    %v2673 = vmul.f32 %v2549, 0.25
    %v2674 = vmul.f32 %v2554, 0.25
    %v2675 = vmul.f32 %v2557, 0.25
    %v2676 = vmul.f32 %v2562, 0.25
    %v2677 = vmul.f32 %v2565, 0.25
    %v2678 = vmul.f32 %v2570, 0.25
    %v2679 = vmul.f32 %v2573, 0.25
    %v2680 = vmul.f32 %v2578, 0.25
    %v2681 = vmul.f32 %v2581, 0.25
    %v2682 = vmul.f32 %v2586, 0.25
    %v2683 = vmul.f32 %v2589, 0.25
    %v2684 = vmul.f32 %v2594, 0.25
    %v2685 = vmul.f32 %v2597, 0.25
    %v2686 = vmul.f32 %v2602, 0.25
    %v2687 = vmul.f32 %v2605, 0.25
    %v2688 = vmul.f32 %v2610, 0.25
    %v2689 = vmul.f32 %v2613, 0.25
    %v2690 = vmul.f32 %v2618, 0.25
    %v2691 = vmul.f32 %v2621, 0.25
    %v2692 = vmul.f32 %v2626, 0.25
    %v2693 = vmul.f32 %v2629, 0.25
    %v2694 = vmul.f32 %v2634, 0.25
    %v2695 = vmul.f32 %v2637, 0.25
    %v2696 = vmul.f32 %v2642, 0.25
    %v2697 = vmul.f32 %v2645, 0.25
    %v2698 = vmul.f32 %v2650, 0.25
    %v2699 = vmul.f32 %v2653, 0.25
    %v2700 = vmul.f32 %v2658, 0.25
    %v2701 = vmul.f32 %v2661, 0.25
    %v2702 = vmul.f32 %v2669, 0.25
    %v2703 = vmul.f32 %v2341, 0.25
    %v2704 = vmul.f32 %v2344, 0.25
    %v2705 = vmul.f32 %v2349, 0.25
    %v2706 = vmul.f32 %v2352, 0.25
    %v2707 = vmul.f32 %v2357, 0.25
    %v2708 = vmul.f32 %v2360, 0.25
    %v2709 = vmul.f32 %v2365, 0.25
    %v2710 = vmul.f32 %v2368, 0.25
    %v2711 = vmul.f32 %v2373, 0.25
    %v2712 = vmul.f32 %v2376, 0.25
    %v2713 = vmul.f32 %v2381, 0.25
    %v2714 = vmul.f32 %v2384, 0.25
    %v2715 = vmul.f32 %v2389, 0.25
    %v2716 = vmul.f32 %v2392, 0.25
    %v2717 = vmul.f32 %v2397, 0.25
    %v2718 = vmul.f32 %v2400, 0.25
    %v2719 = vmul.f32 %v2408, 0.25
    %2720 = vst [vmem:[#allocation2] sm:$0xff] %v2670
    %2721 = vst [vmem:[#allocation2 + $0x8] sm:$0xff] %v2671
    %2722 = vst [vmem:[#allocation2 + $0x10] sm:$0xff] %v2672
    %2723 = vst [vmem:[#allocation2 + $0x18] sm:$0xff] %v2673
    %2724 = vst [vmem:[#allocation2 + $0x20] sm:$0xff] %v2674
    %2725 = vst [vmem:[#allocation2 + $0x28] sm:$0xff] %v2675
    %2726 = vst [vmem:[#allocation2 + $0x30] sm:$0xff] %v2676
    %2727 = vst [vmem:[#allocation2 + $0x38] sm:$0xff] %v2677
    %2728 = vst [vmem:[#allocation2 + $0x40] sm:$0xff] %v2678
    %2729 = vst [vmem:[#allocation2 + $0x48] sm:$0xff] %v2679
    %2730 = vst [vmem:[#allocation2 + $0x50] sm:$0xff] %v2680
    %2731 = vst [vmem:[#allocation2 + $0x58] sm:$0xff] %v2681
    %2732 = vst [vmem:[#allocation2 + $0x60] sm:$0xff] %v2682
    %2733 = vst [vmem:[#allocation2 + $0x68] sm:$0xff] %v2683
    %2734 = vst [vmem:[#allocation2 + $0x70] sm:$0xff] %v2684
    %2735 = vst [vmem:[#allocation2 + $0x78] sm:$0xff] %v2685
    %2736 = vst [vmem:[#allocation2 + $0x80] sm:$0xff] %v2686
    %2737 = vst [vmem:[#allocation2 + $0x88] sm:$0xff] %v2687
    %2738 = vst [vmem:[#allocation2 + $0x90] sm:$0xff] %v2688
    %2739 = vst [vmem:[#allocation2 + $0x98] sm:$0xff] %v2689
    %2740 = vst [vmem:[#allocation2 + $0xa0] sm:$0xff] %v2690
    %2741 = vst [vmem:[#allocation2 + $0xa8] sm:$0xff] %v2691
    %2742 = vst [vmem:[#allocation2 + $0xb0] sm:$0xff] %v2692
    %2743 = vst [vmem:[#allocation2 + $0xb8] sm:$0xff] %v2693
    %2744 = vst [vmem:[#allocation2 + $0xc0] sm:$0xff] %v2694
    %2745 = vst [vmem:[#allocation2 + $0xc8] sm:$0xff] %v2695
    %2746 = vst [vmem:[#allocation2 + $0xd0] sm:$0xff] %v2696
    %2747 = vst [vmem:[#allocation2 + $0xd8] sm:$0xff] %v2697
    %2748 = vst [vmem:[#allocation2 + $0xe0] sm:$0xff] %v2698
    %2749 = vst [vmem:[#allocation2 + $0xe8] sm:$0xff] %v2699
    %2750 = vst [vmem:[#allocation2 + $0xf0] sm:$0xff] %v2700
    %2751 = vst [vmem:[#allocation2 + $0xf8] sm:$0xff] %v2701
    %2752 = vst [vmem:[#allocation4] sm:$0x1] %v2702
    %2753 = vst [vmem:[%s10] sm:$0xff] %v2703
    %2754 = vst [vmem:[%s10 + $0x8] sm:$0xff] %v2704
    %2755 = vst [vmem:[%s10 + $0x10] sm:$0xff] %v2705
    %2756 = vst [vmem:[%s10 + $0x18] sm:$0xff] %v2706
    %2757 = vst [vmem:[%s10 + $0x20] sm:$0xff] %v2707
    %2758 = vst [vmem:[%s10 + $0x28] sm:$0xff] %v2708
    %2759 = vst [vmem:[%s10 + $0x30] sm:$0xff] %v2709
    %2760 = vst [vmem:[%s10 + $0x38] sm:$0xff] %v2710
    %2761 = vst [vmem:[%s10 + $0x40] sm:$0xff] %v2711
    %2762 = vst [vmem:[%s10 + $0x48] sm:$0xff] %v2712
    %2763 = vst [vmem:[%s10 + $0x50] sm:$0xff] %v2713
    %2764 = vst [vmem:[%s10 + $0x58] sm:$0xff] %v2714
    %2765 = vst [vmem:[%s10 + $0x60] sm:$0xff] %v2715
    %2766 = vst [vmem:[%s10 + $0x68] sm:$0xff] %v2716
    %2767 = vst [vmem:[%s10 + $0x70] sm:$0xff] %v2717
    %2768 = vst [vmem:[%s10 + $0x78] sm:$0xff] %v2718
    %2769 = vst [vmem:[%s11] sm:$0x1] %v2719
    // Predicated region
    $region34: #{inner_loop_meta_grads.1} parent=1 // pred_check
      _
    $region35: #{inner_loop_meta_grads.1} parent=1 // pred_check_branch
      %2771 = sbr.rel (0) target = $region37
    $region36: #{inner_loop_meta_grads.1} parent=1 // pred_region
      %s2773 = ssub.s32 4096, 4096
      %2774 = vsyncadd [#allocation3], %s2773
      %s2775 = sshll.u32 [#allocation2], 4
      %s2776 = int_to_ptr.vmem [resolvable:$true] %s2775
      %2781 = dma.vmem_to_hbm [thread:$0]  %s2776, 4096, %s8, [#allocation3], 128, 128, 8
    $region37: #{inner_loop_meta_grads.1} parent=1 // pred_fallthru
      _
    // Predicated region
    $region38: #{inner_loop_meta_grads.1} parent=1 // pred_check
      _
    $region39: #{inner_loop_meta_grads.1} parent=1 // pred_check_branch
      %2783 = sbr.rel (0) target = $region41
    $region40: #{inner_loop_meta_grads.1} parent=1 // pred_region
      %s2785 = ssub.s32 16, 16
      %2786 = vsyncadd [#allocation5], %s2785
      %s2788 = sshll.u32 [#allocation4], 4
      %s2789 = int_to_ptr.vmem [resolvable:$true] %s2788
      %2791 = dma.vmem_to_hbm [thread:$0]  %s2789, 16, %s9, [#allocation5]
    $region41: #{inner_loop_meta_grads.1} parent=1 // pred_fallthru
      _
    // Predicated region
    $region42: #{inner_loop_meta_grads.1} parent=1 // pred_check
      _
    $region43: #{inner_loop_meta_grads.1} parent=1 // pred_check_branch
      %2793 = sbr.rel (0) target = $region45
    $region44: #{inner_loop_meta_grads.1} parent=1 // pred_region
      _
    $region45: #{inner_loop_meta_grads.1} parent=1 // pred_fallthru
      _
    // Predicated region
    $region46: #{inner_loop_meta_grads.1} parent=1 // pred_check
      _
    $region47: #{inner_loop_meta_grads.1} parent=1 // pred_check_branch
      %2795 = sbr.rel (0) target = $region49
    $region48: #{inner_loop_meta_grads.1} parent=1 // pred_region
      _
    $region49: #{inner_loop_meta_grads.1} parent=1 // pred_fallthru
      _
    // Predicated region
    $region50: #{inner_loop_meta_grads.1} parent=1 // pred_check
      _
    $region51: #{inner_loop_meta_grads.1} parent=1 // pred_check_branch
      %2797 = sbr.rel (0) target = $region53
    $region52: #{inner_loop_meta_grads.1} parent=1 // pred_region
      %2798 = dma.done [#allocation3], 4096
    $region53: #{inner_loop_meta_grads.1} parent=1 // pred_fallthru
      _
    // Predicated region
    $region54: #{inner_loop_meta_grads.1} parent=1 // pred_check
      _
    $region55: #{inner_loop_meta_grads.1} parent=1 // pred_check_branch
      %2800 = sbr.rel (0) target = $region57
    $region56: #{inner_loop_meta_grads.1} parent=1 // pred_region
      %2801 = dma.done [#allocation5], 16
    $region57: #{inner_loop_meta_grads.1} parent=1 // pred_fallthru
      _
    // Predicated region
    $region58: #{inner_loop_meta_grads.1} parent=1 // pred_check
      _
    $region59: #{inner_loop_meta_grads.1} parent=1 // pred_check_branch
      %2803 = sbr.rel (0) target = $region61
    $region60: #{inner_loop_meta_grads.1} parent=1 // pred_region
      _
    $region61: #{inner_loop_meta_grads.1} parent=1 // pred_fallthru
      _
    // Predicated region
    $region62: #{inner_loop_meta_grads.1} parent=1 // pred_check
      _
    $region63: #{inner_loop_meta_grads.1} parent=1 // pred_check_branch
      %2805 = sbr.rel (0) target = $region65
    $region64: #{inner_loop_meta_grads.1} parent=1 // pred_region
      _
    $region65: #{inner_loop_meta_grads.1} parent=1 // pred_fallthru
      _
    %2806 = vsyncpa [#allocation3], 1
    %2807 = vsyncpa [#allocation5], 1

</llo_original>
